<compile_context>
chip_gen: v7x
topology: tpu7x:2x2x1
jax: 0.10.0
libtpu: 0.0.40
codegen_flags: <defaults>
</compile_context>

<pallas_src>
import functools
import math

import jax
import jax.numpy as jnp
from jax.experimental import pallas as pl
from jax.experimental.pallas import tpu as pltpu


# ------------------------------ hardware hints ------------------------------

def _vmem_limit_bytes():
    # ~half of per-core VMEM: 64 MiB on v5e/v6e (128 MiB), 32 MiB on v7x (64 MiB).
    try:
        cap = int(pltpu.get_tpu_info().vmem_capacity_bytes)
        if cap <= 0:
            raise ValueError
    except Exception:
        cap = 64 * 1024 * 1024      # conservative fallback
    return int(min(cap // 2, 64 * 1024 * 1024))


_VMEM_LIMIT = _vmem_limit_bytes()


def _pick_tile(dim, pref, align):
    """Largest hardware-aligned tile <= pref that divides dim, else full dim."""
    if dim <= pref:
        return dim
    t = (pref // align) * align
    while t >= align:
        if dim % t == 0:
            return t
        t -= align
    return dim  # fall back to the full extent rather than an unaligned tile


# ----------------------------- Pallas kernels ------------------------------

def _linear_kernel(x_ref, w_ref, b_ref, o_ref, acc_ref, *, activation):
    @pl.when(pl.program_id(2) == 0)
    def _():
        acc_ref[...] = jnp.zeros_like(acc_ref)

    acc_ref[...] += jnp.dot(x_ref[...], w_ref[...],
                            preferred_element_type=jnp.float32)

    @pl.when(pl.program_id(2) == pl.num_programs(2) - 1)
    def _():
        y = acc_ref[...] + b_ref[...]
        if activation == "relu":
            y = jnp.maximum(y, 0.0)
        o_ref[...] = y.astype(o_ref.dtype)


def linear(x2d, w, b, activation="none", out_dtype=jnp.bfloat16):
    """y = act(x2d @ w + b). x2d: [M,K] bf16, w: [K,N] bf16, b: [1,N] f32."""
    M, K = x2d.shape
    N = w.shape[1]
    tm = _pick_tile(M, 512, 16)    # bf16 operand: sublane multiple of 16
    tn = _pick_tile(N, 512, 128)   # lanes: multiple of 128 (or full)
    tk = _pick_tile(K, 512, 128)
    kernel = functools.partial(_linear_kernel, activation=activation)
    out_bytes = jnp.dtype(out_dtype).itemsize
    return pl.pallas_call(
        kernel,
        grid=(M // tm, N // tn, K // tk),
        in_specs=[
            pl.BlockSpec((tm, tk), lambda i, j, k: (i, k)),
            pl.BlockSpec((tk, tn), lambda i, j, k: (k, j)),
            pl.BlockSpec((1, tn), lambda i, j, k: (0, j)),
        ],
        out_specs=pl.BlockSpec((tm, tn), lambda i, j, k: (i, j)),
        out_shape=jax.ShapeDtypeStruct((M, N), out_dtype),
        scratch_shapes=[pltpu.VMEM((tm, tn), jnp.float32)],
        compiler_params=pltpu.CompilerParams(
            dimension_semantics=("parallel", "parallel", "arbitrary"),
            vmem_limit_bytes=_VMEM_LIMIT),
        cost_estimate=pl.CostEstimate(
            flops=2 * M * N * K,
            transcendentals=0,
            bytes_accessed=(M * K + K * N) * 2 + M * N * out_bytes),
    )(x2d, w, b)


def _linear_res_ln_kernel(x_ref, w_ref, b_ref, r_ref, g_ref, bb_ref,
                          o_ref, acc_ref):
    @pl.when(pl.program_id(1) == 0)
    def _():
        acc_ref[...] = jnp.zeros_like(acc_ref)

    acc_ref[...] += jnp.dot(x_ref[...], w_ref[...],
                            preferred_element_type=jnp.float32)

    @pl.when(pl.program_id(1) == pl.num_programs(1) - 1)
    def _():
        # epilogue: bias + residual + LayerNorm, all in f32
        y = acc_ref[...] + b_ref[...] + r_ref[...].astype(jnp.float32)
        mean = jnp.mean(y, axis=-1, keepdims=True)
        var = jnp.mean((y - mean) ** 2, axis=-1, keepdims=True)
        yn = (y - mean) * jax.lax.rsqrt(var + 1e-5)
        o_ref[...] = (yn * g_ref[...] + bb_ref[...]).astype(o_ref.dtype)


def linear_res_ln(x2d, w, b, res2d, gamma, beta):
    """LayerNorm(res + x @ w + b); x2d: [M,K] bf16, res2d: [M,N] bf16 -> bf16."""
    M, K = x2d.shape
    N = w.shape[1]
    tm = _pick_tile(M, 256, 16)
    tk = _pick_tile(K, 512, 128)
    return pl.pallas_call(
        _linear_res_ln_kernel,
        grid=(M // tm, K // tk),
        in_specs=[
            pl.BlockSpec((tm, tk), lambda i, k: (i, k)),
            pl.BlockSpec((tk, N), lambda i, k: (k, 0)),
            pl.BlockSpec((1, N), lambda i, k: (0, 0)),
            pl.BlockSpec((tm, N), lambda i, k: (i, 0)),
            pl.BlockSpec((1, N), lambda i, k: (0, 0)),
            pl.BlockSpec((1, N), lambda i, k: (0, 0)),
        ],
        out_specs=pl.BlockSpec((tm, N), lambda i, k: (i, 0)),
        out_shape=jax.ShapeDtypeStruct((M, N), jnp.bfloat16),
        scratch_shapes=[pltpu.VMEM((tm, N), jnp.float32)],
        compiler_params=pltpu.CompilerParams(
            dimension_semantics=("parallel", "arbitrary"),
            vmem_limit_bytes=_VMEM_LIMIT),
        cost_estimate=pl.CostEstimate(
            flops=2 * M * N * K + 8 * M * N,
            transcendentals=M,
            bytes_accessed=(M * K + K * N + M * N) * 2 + M * N * 2),
    )(x2d, w, b, res2d, gamma, beta)


def _mha_kernel(q_ref, kt_ref, v_ref, pad_ref, *out_refs,
                heads_per_group, head_dim, causal, inv_scale, return_attn):
    o_ref = out_refs[0]
    Lq = q_ref.shape[1]
    Lk = kt_ref.shape[2]
    Dh = head_dim

    # Mask built in-kernel from a tiny [1, Lk] pad row (+ causal tril).
    keep = jnp.broadcast_to(pad_ref[0] > 0.5, (Lq, Lk))
    if causal:
        row = jax.lax.broadcasted_iota(jnp.int32, (Lq, Lk), 0)
        col = jax.lax.broadcasted_iota(jnp.int32, (Lq, Lk), 1)
        keep = jnp.logical_and(keep, col <= row)

    q = q_ref[0]     # [Lq, GW] bf16 (lane-dense, GW = heads_per_group * Dh)
    kt = kt_ref[0]   # [GW, Lk] bf16 (K already transposed: plain MXU matmul)
    v = v_ref[0]     # [Lk, GW] bf16

    for i in range(heads_per_group):           # static unroll within a group
        sl = slice(i * Dh, (i + 1) * Dh)        # static lane slice per head
        energy = jnp.dot(q[:, sl], kt[sl, :],
                         preferred_element_type=jnp.float32) * inv_scale
        energy = jnp.where(keep, energy, -1e10)
        mx = jnp.max(energy, axis=-1, keepdims=True)
        p = jnp.exp(energy - mx)                                  # unnormalized
        inv_l = pl.reciprocal(jnp.sum(p, axis=-1, keepdims=True), approx=True)
        ctx = jnp.dot(p.astype(jnp.bfloat16), v[:, sl],
                      preferred_element_type=jnp.float32)         # [Lq, Dh]
        # deferred normalization: divide O(Lq*Dh) context, not O(Lq*Lk) probs
        o_ref[0, :, sl] = (ctx * inv_l).astype(o_ref.dtype)
        if return_attn:
            out_refs[1][0, i, :, :] = (p * inv_l).astype(out_refs[1].dtype)


def _heads_per_group(n_heads, head_dim, model_dim):
    """Heads per grid step; group lane-width is a multiple of 128 (or full D)."""
    if model_dim <= 128 or model_dim % 128 != 0:
        return n_heads
    hg = max(1, 128 // head_dim)
    while hg <= n_heads:
        if n_heads % hg == 0 and (hg * head_dim) % 128 == 0:
            return hg
        hg += 1
    return n_heads


def mha_core(q, kt, v, key_pad, *, n_heads, causal, return_attn):
    """q: [B,Lq,D] bf16, kt: [B,D,Lk] bf16, v: [B,Lk,D] bf16, key_pad: [B,1,Lk]."""
    B, Lq, D = q.shape
    Lk = kt.shape[2]
    Dh = D // n_heads
    hg = _heads_per_group(n_heads, Dh, D)
    GW = hg * Dh
    n_groups = n_heads // hg
    inv_scale = 1.0 / math.sqrt(Dh)
    kernel = functools.partial(_mha_kernel, heads_per_group=hg, head_dim=Dh,
                               causal=causal, inv_scale=inv_scale,
                               return_attn=return_attn)
    out_shape = [jax.ShapeDtypeStruct((B, Lq, D), jnp.bfloat16)]
    out_specs = [pl.BlockSpec((1, Lq, GW), lambda b, g: (b, 0, g))]
    if return_attn:
        out_shape.append(jax.ShapeDtypeStruct((B, n_heads, Lq, Lk), jnp.bfloat16))
        out_specs.append(pl.BlockSpec((1, hg, Lq, Lk), lambda b, g: (b, g, 0, 0)))
    res = pl.pallas_call(
        kernel,
        grid=(B, n_groups),
        in_specs=[
            pl.BlockSpec((1, Lq, GW), lambda b, g: (b, 0, g)),
            pl.BlockSpec((1, GW, Lk), lambda b, g: (b, g, 0)),
            pl.BlockSpec((1, Lk, GW), lambda b, g: (b, 0, g)),
            pl.BlockSpec((1, 1, Lk), lambda b, g: (b, 0, 0)),
        ],
        out_specs=out_specs,
        out_shape=out_shape,
        compiler_params=pltpu.CompilerParams(
            dimension_semantics=("parallel", "parallel"),
            vmem_limit_bytes=_VMEM_LIMIT),
    )(q, kt, v, key_pad)
    if return_attn:
        return res[0], res[1]
    return res[0], None


# ------------------------------- model glue --------------------------------

def self_attention_sublayer(p, x, key_pad, causal, n_heads, ln_g, ln_b):
    """LayerNorm(x + MHA(x, x, x) @ Wo + bo), fused QKV projection."""
    B, L, D = x.shape
    x2d = x.reshape(B * L, D)
    qkv = linear(x2d, p["wqkv"], p["bqkv"]).reshape(B, L, 3 * D)
    Q = qkv[:, :, :D]
    KT = jnp.swapaxes(qkv[:, :, D:2 * D], 1, 2)      # [B, D, L]: MXU-ready K^T
    V = qkv[:, :, 2 * D:]
    ctx, _ = mha_core(Q, KT, V, key_pad, n_heads=n_heads, causal=causal,
                      return_attn=False)
    out = linear_res_ln(ctx.reshape(B * L, D), p["wo"], p["bo"],
                        x2d, ln_g, ln_b)
    return out.reshape(B, L, D)


def cross_attention_sublayer(p, query, key, key_pad, n_heads, ln_g, ln_b,
                             return_attn):
    """LayerNorm(query + MHA(query, key, key) @ Wo + bo), fused KV projection."""
    B, Lq, D = query.shape
    Lk = key.shape[1]
    q2d = query.reshape(B * Lq, D)
    Q = linear(q2d, p["wq"], p["bq"]).reshape(B, Lq, D)
    kv = linear(key.reshape(B * Lk, D), p["wkv"], p["bkv"]).reshape(B, Lk, 2 * D)
    KT = jnp.swapaxes(kv[:, :, :D], 1, 2)             # [B, D, Lk]
    V = kv[:, :, D:]
    ctx, attn = mha_core(Q, KT, V, key_pad, n_heads=n_heads, causal=False,
                         return_attn=return_attn)
    out = linear_res_ln(ctx.reshape(B * Lq, D), p["wo"], p["bo"],
                        q2d, ln_g, ln_b)
    return out.reshape(B, Lq, D), attn


def ffn_sublayer(p, x, ln_g, ln_b):
    """LayerNorm(x + W2 @ relu(W1 @ x)); hidden stays bf16."""
    B, L, D = x.shape
    h = linear(x.reshape(B * L, D), p["w1"], p["b1"], activation="relu")
    out = linear_res_ln(h, p["w2"], p["b2"], x.reshape(B * L, D), ln_g, ln_b)
    return out.reshape(B, L, D)


def encoder_layer(p, src, src_pad, n_heads):
    src = self_attention_sublayer(p["self_attn"], src, src_pad, False, n_heads,
                                  p["ln1_g"], p["ln1_b"])
    return ffn_sublayer(p["ff"], src, p["ln2_g"], p["ln2_b"])


def decoder_layer(p, trg, enc_src, trg_pad, src_pad, n_heads, need_attn):
    trg = self_attention_sublayer(p["self_attn"], trg, trg_pad, True, n_heads,
                                  p["ln1_g"], p["ln1_b"])
    trg, attention = cross_attention_sublayer(p["enc_attn"], trg, enc_src,
                                              src_pad, n_heads,
                                              p["ln2_g"], p["ln2_b"], need_attn)
    trg = ffn_sublayer(p["ff"], trg, p["ln3_g"], p["ln3_b"])
    return trg, attention


def _embed(tok_emb, pos_emb, tokens):
    B, L = tokens.shape
    D = tok_emb.shape[1]
    tok = jnp.take(tok_emb, tokens, axis=0)
    x = tok * math.sqrt(D) + pos_emb[:L][None, :, :]
    return x.astype(jnp.bfloat16)                      # dropout = identity


def encoder_forward(p, src_tokens, src_pad, n_heads):
    x = _embed(p["tok_emb"], p["pos_emb"], src_tokens)
    for lp in p["layers"]:
        x = encoder_layer(lp, x, src_pad, n_heads)
    return x


def decoder_forward(p, trg_tokens, enc_src, trg_pad, src_pad, n_heads):
    B, L = trg_tokens.shape
    x = _embed(p["tok_emb"], p["pos_emb"], trg_tokens)
    attention = None
    n_layers = len(p["layers"])
    for idx, lp in enumerate(p["layers"]):
        # attention weights only materialized for the last layer (the one the
        # PyTorch reference actually returns)
        x, attention = decoder_layer(lp, x, enc_src, trg_pad, src_pad, n_heads,
                                     need_attn=(idx == n_layers - 1))
    D = x.shape[-1]
    logits = linear(x.reshape(B * L, D), p["w_out"], p["b_out"],
                    out_dtype=jnp.float32)
    return logits.reshape(B, L, -1), attention


def seq2seq_forward(params, src, trg, src_pad_idx, trg_pad_idx, n_heads):
    # make_src_mask / make_trg_mask: only key-side pad vectors travel to the
    # kernel; the [B,1,Lq,Lk] combined (pad & causal) mask is rebuilt in-kernel.
    src_pad = (src != src_pad_idx).astype(jnp.float32)[:, None, :]   # [B,1,Ls]
    trg_pad = (trg != trg_pad_idx).astype(jnp.float32)[:, None, :]   # [B,1,Lt]
    enc_src = encoder_forward(params["encoder"], src, src_pad, n_heads)
    output, attention = decoder_forward(params["decoder"], trg, enc_src,
                                        trg_pad, src_pad, n_heads)
    return output, attention


# ------------------------------- param init --------------------------------
# Weight fusion + bf16 pre-casting happen here, once, not per forward pass.

def _init_linear(key, fan_in, fan_out):
    k1, k2 = jax.random.split(key)
    w = jax.random.normal(k1, (fan_in, fan_out), jnp.float32) * 0.02
    b = jax.random.normal(k2, (fan_out,), jnp.float32) * 0.02
    return w.astype(jnp.bfloat16), b.reshape(1, fan_out)   # bf16 weights, f32 bias


def _init_self_mha(key, D):
    ks = jax.random.split(key, 4)
    wq, bq = _init_linear(ks[0], D, D)
    wk, bk = _init_linear(ks[1], D, D)
    wv, bv = _init_linear(ks[2], D, D)
    wo, bo = _init_linear(ks[3], D, D)
    return dict(wqkv=jnp.concatenate([wq, wk, wv], axis=1),
                bqkv=jnp.concatenate([bq, bk, bv], axis=1),
                wo=wo, bo=bo)


def _init_cross_mha(key, D):
    ks = jax.random.split(key, 4)
    wq, bq = _init_linear(ks[0], D, D)
    wk, bk = _init_linear(ks[1], D, D)
    wv, bv = _init_linear(ks[2], D, D)
    wo, bo = _init_linear(ks[3], D, D)
    return dict(wq=wq, bq=bq,
                wkv=jnp.concatenate([wk, wv], axis=1),
                bkv=jnp.concatenate([bk, bv], axis=1),
                wo=wo, bo=bo)


def _init_ff(key, D, PF):
    k1, k2 = jax.random.split(key)
    w1, b1 = _init_linear(k1, D, PF)
    w2, b2 = _init_linear(k2, PF, D)
    return dict(w1=w1, b1=b1, w2=w2, b2=b2)


def _ln(D):
    return jnp.ones((1, D), jnp.float32), jnp.zeros((1, D), jnp.float32)


def _init_enc_layer(key, D, PF):
    k1, k2 = jax.random.split(key)
    g1, b1 = _ln(D)
    g2, b2 = _ln(D)
    return dict(self_attn=_init_self_mha(k1, D), ff=_init_ff(k2, D, PF),
                ln1_g=g1, ln1_b=b1, ln2_g=g2, ln2_b=b2)


def _init_dec_layer(key, D, PF):
    k1, k2, k3 = jax.random.split(key, 3)
    g1, b1 = _ln(D)
    g2, b2 = _ln(D)
    g3, b3 = _ln(D)
    return dict(self_attn=_init_self_mha(k1, D), enc_attn=_init_cross_mha(k2, D),
                ff=_init_ff(k3, D, PF),
                ln1_g=g1, ln1_b=b1, ln2_g=g2, ln2_b=b2, ln3_g=g3, ln3_b=b3)


def init_params(key, src_vocab, trg_vocab, D, PF, n_layers, max_len):
    keys = jax.random.split(key, 8)
    enc_layers = [_init_enc_layer(k, D, PF)
                  for k in jax.random.split(keys[0], n_layers)]
    dec_layers = [_init_dec_layer(k, D, PF)
                  for k in jax.random.split(keys[1], n_layers)]
    w_out, b_out = _init_linear(keys[2], D, trg_vocab)
    encoder = dict(
        tok_emb=jax.random.normal(keys[3], (src_vocab, D), jnp.float32) * 0.02,
        pos_emb=jax.random.normal(keys[4], (max_len, D), jnp.float32) * 0.02,
        layers=enc_layers)
    decoder = dict(
        tok_emb=jax.random.normal(keys[5], (trg_vocab, D), jnp.float32) * 0.02,
        pos_emb=jax.random.normal(keys[6], (max_len, D), jnp.float32) * 0.02,
        layers=dec_layers, w_out=w_out, b_out=b_out)
    return dict(encoder=encoder, decoder=decoder)


# ----------------------------------- main -----------------------------------

if __name__ == "__main__":
    B, Ls, Lt = 2, 8, 8
    D, H, PF, N_LAYERS = 32, 4, 64, 2
    SRC_VOCAB, TRG_VOCAB, MAX_LEN = 16, 16, 32
    SRC_PAD_IDX, TRG_PAD_IDX = 0, 0

    root = jax.random.PRNGKey(0)
    k_par, k_src, k_trg = jax.random.split(root, 3)
    params = init_params(k_par, SRC_VOCAB, TRG_VOCAB, D, PF, N_LAYERS, MAX_LEN)

    src = jax.random.randint(k_src, (B, Ls), 1, SRC_VOCAB, dtype=jnp.int32)
    trg = jax.random.randint(k_trg, (B, Lt), 1, TRG_VOCAB, dtype=jnp.int32)
    # introduce some padding tokens so the masks are exercised
    src = src.at[:, -2:].set(SRC_PAD_IDX)
    trg = trg.at[:, -1:].set(TRG_PAD_IDX)

    fwd = jax.jit(seq2seq_forward, static_argnums=(3, 4, 5))
    output, attention = fwd(params, src, trg, SRC_PAD_IDX, TRG_PAD_IDX, H)
    jax.block_until_ready((output, attention))

    assert output.shape == (B, Lt, TRG_VOCAB)
    assert attention.shape == (B, H, Lt, Ls)
    assert bool(jnp.all(jnp.isfinite(output)))
    print("KERNEL_OK")
</pallas_src>

<mosaic_0001>
module attributes {stable_mosaic.version = 11 : i64} {
  func.func @_linear_kernel(%arg0: i32, %arg1: i32, %arg2: i32, %arg3: memref<16x32xbf16, #tpu.memory_space<vmem>>, %arg4: memref<32x96xbf16, #tpu.memory_space<vmem>>, %arg5: memref<1x96xf32, #tpu.memory_space<vmem>>, %arg6: memref<16x96xbf16, #tpu.memory_space<vmem>>, %arg7: memref<16x96xf32, #tpu.memory_space<vmem>>) attributes {dimension_semantics = [#tpu.dimension_semantics<parallel>, #tpu.dimension_semantics<parallel>, #tpu.dimension_semantics<arbitrary>], iteration_bounds = array<i64: 1, 1, 1>, scalar_prefetch = 0 : i64, scratch_operands = 1 : i64, tpu.core_type = #tpu.core_type<tc>, window_params = [{transform_indices = @transform_0, window_bounds = array<i64: 16, 32>}, {transform_indices = @transform_1, window_bounds = array<i64: 32, 96>}, {transform_indices = @transform_2, window_bounds = array<i64: 1, 96>}, {transform_indices = @transform_3, window_bounds = array<i64: 16, 96>}]} {
    %c0_i32 = arith.constant 0 : i32
    %0 = arith.cmpi eq, %arg2, %c0_i32 : i32
    %1 = arith.extui %0 : i1 to i32
    %c0_i32_0 = arith.constant 0 : i32
    %2 = arith.cmpi ne, %1, %c0_i32_0 : i32
    scf.if %2 {
      %cst_10 = arith.constant 0.000000e+00 : f32
      %12 = vector.broadcast %cst_10 : f32 to vector<16x96xf32>
      %c0_11 = arith.constant 0 : index
      %c0_12 = arith.constant 0 : index
      %13 = vector.load %arg7[%c0_11, %c0_12] : memref<16x96xf32, #tpu.memory_space<vmem>>, vector<16x96xf32>
      tpu.vector_store %arg7[%c0_11, %c0_12], %12 {strides = array<i32>} : memref<16x96xf32, #tpu.memory_space<vmem>>, vector<16x96xf32>,
    } else {
    }
    %c0 = arith.constant 0 : index
    %c0_1 = arith.constant 0 : index
    %3 = vector.load %arg7[%c0, %c0_1] : memref<16x96xf32, #tpu.memory_space<vmem>>, vector<16x96xf32>
    %c0_2 = arith.constant 0 : index
    %c0_3 = arith.constant 0 : index
    %4 = vector.load %arg3[%c0_2, %c0_3] : memref<16x32xbf16, #tpu.memory_space<vmem>>, vector<16x32xbf16>
    %c0_4 = arith.constant 0 : index
    %c0_5 = arith.constant 0 : index
    %5 = vector.load %arg4[%c0_4, %c0_5] : memref<32x96xbf16, #tpu.memory_space<vmem>>, vector<32x96xbf16>
    %cst = arith.constant dense<0.000000e+00> : vector<16x96xf32>
    %6 = tpu.matmul %4, %5, %cst {dimension_numbers = #tpu.dot_dimension_numbers<[1], [0], [0], [1], [0, 0, 1, 1], [], []>} : vector<16x32xbf16>, vector<32x96xbf16>, vector<16x96xf32> -> vector<16x96xf32>
    %7 = arith.addf %3, %6 : vector<16x96xf32>
    %c0_6 = arith.constant 0 : index
    %c0_7 = arith.constant 0 : index
    %8 = vector.load %arg7[%c0_6, %c0_7] : memref<16x96xf32, #tpu.memory_space<vmem>>, vector<16x96xf32>
    tpu.vector_store %arg7[%c0_6, %c0_7], %7 {strides = array<i32>} : memref<16x96xf32, #tpu.memory_space<vmem>>, vector<16x96xf32>,
    %c0_i32_8 = arith.constant 0 : i32
    %9 = arith.cmpi eq, %arg2, %c0_i32_8 : i32
    %10 = arith.extui %9 : i1 to i32
    %c0_i32_9 = arith.constant 0 : i32
    %11 = arith.cmpi ne, %10, %c0_i32_9 : i32
    scf.if %11 {
      %c0_10 = arith.constant 0 : index
      %c0_11 = arith.constant 0 : index
      %12 = vector.load %arg7[%c0_10, %c0_11] : memref<16x96xf32, #tpu.memory_space<vmem>>, vector<16x96xf32>
      %c0_12 = arith.constant 0 : index
      %c0_13 = arith.constant 0 : index
      %13 = vector.load %arg5[%c0_12, %c0_13] : memref<1x96xf32, #tpu.memory_space<vmem>>, vector<1x96xf32>
      %14 = vector.broadcast %13 : vector<1x96xf32> to vector<16x96xf32>
      %15 = arith.addf %12, %14 : vector<16x96xf32>
      %16 = arith.truncf %15 : vector<16x96xf32> to vector<16x96xbf16>
      %c0_14 = arith.constant 0 : index
      %c0_15 = arith.constant 0 : index
      %17 = vector.load %arg6[%c0_14, %c0_15] : memref<16x96xbf16, #tpu.memory_space<vmem>>, vector<16x96xbf16>
      tpu.vector_store %arg6[%c0_14, %c0_15], %16 {strides = array<i32>} : memref<16x96xbf16, #tpu.memory_space<vmem>>, vector<16x96xbf16>,
    } else {
    }
    return
  }
  func.func @transform_0(%arg0: i32, %arg1: i32, %arg2: i32) -> (i32, i32) {
    %c0_i32 = arith.constant 0 : i32
    return %arg0, %arg2 : i32, i32
  }
  func.func @transform_1(%arg0: i32, %arg1: i32, %arg2: i32) -> (i32, i32) {
    %c0_i32 = arith.constant 0 : i32
    return %arg2, %arg1 : i32, i32
  }
  func.func @transform_2(%arg0: i32, %arg1: i32, %arg2: i32) -> (i32, i32) {
    %c0_i32 = arith.constant 0 : i32
    %c0_i32_0 = arith.constant 0 : i32
    return %c0_i32, %arg1 : i32, i32
  }
  func.func @transform_3(%arg0: i32, %arg1: i32, %arg2: i32) -> (i32, i32) {
    %c0_i32 = arith.constant 0 : i32
    return %arg0, %arg1 : i32, i32
  }
}

module attributes {stable_mosaic.version = 11 : i64} {
  func.func @_linear_kernel(%arg0: i32, %arg1: i32, %arg2: i32, %arg3: memref<16x32xbf16, #tpu.memory_space<vmem>>, %arg4: memref<32x32xbf16, #tpu.memory_space<vmem>>, %arg5: memref<1x32xf32, #tpu.memory_space<vmem>>, %arg6: memref<16x32xbf16, #tpu.memory_space<vmem>>, %arg7: memref<16x32xf32, #tpu.memory_space<vmem>>) attributes {dimension_semantics = [#tpu.dimension_semantics<parallel>, #tpu.dimension_semantics<parallel>, #tpu.dimension_semantics<arbitrary>], iteration_bounds = array<i64: 1, 1, 1>, scalar_prefetch = 0 : i64, scratch_operands = 1 : i64, tpu.core_type = #tpu.core_type<tc>, window_params = [{transform_indices = @transform_0, window_bounds = array<i64: 16, 32>}, {transform_indices = @transform_1, window_bounds = array<i64: 32, 32>}, {transform_indices = @transform_2, window_bounds = array<i64: 1, 32>}, {transform_indices = @transform_3, window_bounds = array<i64: 16, 32>}]} {
    %c0_i32 = arith.constant 0 : i32
    %0 = arith.cmpi eq, %arg2, %c0_i32 : i32
    %1 = arith.extui %0 : i1 to i32
    %c0_i32_0 = arith.constant 0 : i32
    %2 = arith.cmpi ne, %1, %c0_i32_0 : i32
    scf.if %2 {
      %cst_10 = arith.constant 0.000000e+00 : f32
      %12 = vector.broadcast %cst_10 : f32 to vector<16x32xf32>
      %c0_11 = arith.constant 0 : index
      %c0_12 = arith.constant 0 : index
      %13 = vector.load %arg7[%c0_11, %c0_12] : memref<16x32xf32, #tpu.memory_space<vmem>>, vector<16x32xf32>
      tpu.vector_store %arg7[%c0_11, %c0_12], %12 {strides = array<i32>} : memref<16x32xf32, #tpu.memory_space<vmem>>, vector<16x32xf32>,
    } else {
    }
    %c0 = arith.constant 0 : index
    %c0_1 = arith.constant 0 : index
    %3 = vector.load %arg7[%c0, %c0_1] : memref<16x32xf32, #tpu.memory_space<vmem>>, vector<16x32xf32>
    %c0_2 = arith.constant 0 : index
    %c0_3 = arith.constant 0 : index
    %4 = vector.load %arg3[%c0_2, %c0_3] : memref<16x32xbf16, #tpu.memory_space<vmem>>, vector<16x32xbf16>
    %c0_4 = arith.constant 0 : index
    %c0_5 = arith.constant 0 : index
    %5 = vector.load %arg4[%c0_4, %c0_5] : memref<32x32xbf16, #tpu.memory_space<vmem>>, vector<32x32xbf16>
    %cst = arith.constant dense<0.000000e+00> : vector<16x32xf32>
    %6 = tpu.matmul %4, %5, %cst {dimension_numbers = #tpu.dot_dimension_numbers<[1], [0], [0], [1], [0, 0, 1, 1], [], []>} : vector<16x32xbf16>, vector<32x32xbf16>, vector<16x32xf32> -> vector<16x32xf32>
    %7 = arith.addf %3, %6 : vector<16x32xf32>
    %c0_6 = arith.constant 0 : index
    %c0_7 = arith.constant 0 : index
    %8 = vector.load %arg7[%c0_6, %c0_7] : memref<16x32xf32, #tpu.memory_space<vmem>>, vector<16x32xf32>
    tpu.vector_store %arg7[%c0_6, %c0_7], %7 {strides = array<i32>} : memref<16x32xf32, #tpu.memory_space<vmem>>, vector<16x32xf32>,
    %c0_i32_8 = arith.constant 0 : i32
    %9 = arith.cmpi eq, %arg2, %c0_i32_8 : i32
    %10 = arith.extui %9 : i1 to i32
    %c0_i32_9 = arith.constant 0 : i32
    %11 = arith.cmpi ne, %10, %c0_i32_9 : i32
    scf.if %11 {
      %c0_10 = arith.constant 0 : index
      %c0_11 = arith.constant 0 : index
      %12 = vector.load %arg7[%c0_10, %c0_11] : memref<16x32xf32, #tpu.memory_space<vmem>>, vector<16x32xf32>
      %c0_12 = arith.constant 0 : index
      %c0_13 = arith.constant 0 : index
      %13 = vector.load %arg5[%c0_12, %c0_13] : memref<1x32xf32, #tpu.memory_space<vmem>>, vector<1x32xf32>
      %14 = vector.broadcast %13 : vector<1x32xf32> to vector<16x32xf32>
      %15 = arith.addf %12, %14 : vector<16x32xf32>
      %16 = arith.truncf %15 : vector<16x32xf32> to vector<16x32xbf16>
      %c0_14 = arith.constant 0 : index
      %c0_15 = arith.constant 0 : index
      %17 = vector.load %arg6[%c0_14, %c0_15] : memref<16x32xbf16, #tpu.memory_space<vmem>>, vector<16x32xbf16>
      tpu.vector_store %arg6[%c0_14, %c0_15], %16 {strides = array<i32>} : memref<16x32xbf16, #tpu.memory_space<vmem>>, vector<16x32xbf16>,
    } else {
    }
    return
  }
  func.func @transform_0(%arg0: i32, %arg1: i32, %arg2: i32) -> (i32, i32) {
    %c0_i32 = arith.constant 0 : i32
    return %arg0, %arg2 : i32, i32
  }
  func.func @transform_1(%arg0: i32, %arg1: i32, %arg2: i32) -> (i32, i32) {
    %c0_i32 = arith.constant 0 : i32
    return %arg2, %arg1 : i32, i32
  }
  func.func @transform_2(%arg0: i32, %arg1: i32, %arg2: i32) -> (i32, i32) {
    %c0_i32 = arith.constant 0 : i32
    %c0_i32_0 = arith.constant 0 : i32
    return %c0_i32, %arg1 : i32, i32
  }
  func.func @transform_3(%arg0: i32, %arg1: i32, %arg2: i32) -> (i32, i32) {
    %c0_i32 = arith.constant 0 : i32
    return %arg0, %arg1 : i32, i32
  }
}

module attributes {stable_mosaic.version = 11 : i64} {
  func.func @_linear_res_ln_kernel(%arg0: i32, %arg1: i32, %arg2: memref<16x32xbf16, #tpu.memory_space<vmem>>, %arg3: memref<32x32xbf16, #tpu.memory_space<vmem>>, %arg4: memref<1x32xf32, #tpu.memory_space<vmem>>, %arg5: memref<16x32xbf16, #tpu.memory_space<vmem>>, %arg6: memref<1x32xf32, #tpu.memory_space<vmem>>, %arg7: memref<1x32xf32, #tpu.memory_space<vmem>>, %arg8: memref<16x32xbf16, #tpu.memory_space<vmem>>, %arg9: memref<16x32xf32, #tpu.memory_space<vmem>>) attributes {dimension_semantics = [#tpu.dimension_semantics<parallel>, #tpu.dimension_semantics<arbitrary>], iteration_bounds = array<i64: 1, 1>, scalar_prefetch = 0 : i64, scratch_operands = 1 : i64, tpu.core_type = #tpu.core_type<tc>, window_params = [{transform_indices = @transform_0, window_bounds = array<i64: 16, 32>}, {transform_indices = @transform_1, window_bounds = array<i64: 32, 32>}, {pipeline_mode = #tpu.pipeline_mode<synchronous>, transform_indices = @transform_2, window_bounds = array<i64: 1, 32>}, {transform_indices = @transform_3, window_bounds = array<i64: 16, 32>}, {pipeline_mode = #tpu.pipeline_mode<synchronous>, transform_indices = @transform_4, window_bounds = array<i64: 1, 32>}, {pipeline_mode = #tpu.pipeline_mode<synchronous>, transform_indices = @transform_5, window_bounds = array<i64: 1, 32>}, {transform_indices = @transform_6, window_bounds = array<i64: 16, 32>}]} {
    %c0_i32 = arith.constant 0 : i32
    %0 = arith.cmpi eq, %arg1, %c0_i32 : i32
    %1 = arith.extui %0 : i1 to i32
    %c0_i32_0 = arith.constant 0 : i32
    %2 = arith.cmpi ne, %1, %c0_i32_0 : i32
    scf.if %2 {
      %cst_10 = arith.constant 0.000000e+00 : f32
      %12 = vector.broadcast %cst_10 : f32 to vector<16x32xf32>
      %c0_11 = arith.constant 0 : index
      %c0_12 = arith.constant 0 : index
      %13 = vector.load %arg9[%c0_11, %c0_12] : memref<16x32xf32, #tpu.memory_space<vmem>>, vector<16x32xf32>
      tpu.vector_store %arg9[%c0_11, %c0_12], %12 {strides = array<i32>} : memref<16x32xf32, #tpu.memory_space<vmem>>, vector<16x32xf32>,
    } else {
    }
    %c0 = arith.constant 0 : index
    %c0_1 = arith.constant 0 : index
    %3 = vector.load %arg9[%c0, %c0_1] : memref<16x32xf32, #tpu.memory_space<vmem>>, vector<16x32xf32>
    %c0_2 = arith.constant 0 : index
    %c0_3 = arith.constant 0 : index
    %4 = vector.load %arg2[%c0_2, %c0_3] : memref<16x32xbf16, #tpu.memory_space<vmem>>, vector<16x32xbf16>
    %c0_4 = arith.constant 0 : index
    %c0_5 = arith.constant 0 : index
    %5 = vector.load %arg3[%c0_4, %c0_5] : memref<32x32xbf16, #tpu.memory_space<vmem>>, vector<32x32xbf16>
    %cst = arith.constant dense<0.000000e+00> : vector<16x32xf32>
    %6 = tpu.matmul %4, %5, %cst {dimension_numbers = #tpu.dot_dimension_numbers<[1], [0], [0], [1], [0, 0, 1, 1], [], []>} : vector<16x32xbf16>, vector<32x32xbf16>, vector<16x32xf32> -> vector<16x32xf32>
    %7 = arith.addf %3, %6 : vector<16x32xf32>
    %c0_6 = arith.constant 0 : index
    %c0_7 = arith.constant 0 : index
    %8 = vector.load %arg9[%c0_6, %c0_7] : memref<16x32xf32, #tpu.memory_space<vmem>>, vector<16x32xf32>
    tpu.vector_store %arg9[%c0_6, %c0_7], %7 {strides = array<i32>} : memref<16x32xf32, #tpu.memory_space<vmem>>, vector<16x32xf32>,
    %c0_i32_8 = arith.constant 0 : i32
    %9 = arith.cmpi eq, %arg1, %c0_i32_8 : i32
    %10 = arith.extui %9 : i1 to i32
    %c0_i32_9 = arith.constant 0 : i32
    %11 = arith.cmpi ne, %10, %c0_i32_9 : i32
    scf.if %11 {
      %c0_10 = arith.constant 0 : index
      %c0_11 = arith.constant 0 : index
      %12 = vector.load %arg9[%c0_10, %c0_11] : memref<16x32xf32, #tpu.memory_space<vmem>>, vector<16x32xf32>
      %c0_12 = arith.constant 0 : index
      %c0_13 = arith.constant 0 : index
      %13 = vector.load %arg4[%c0_12, %c0_13] : memref<1x32xf32, #tpu.memory_space<vmem>>, vector<1x32xf32>
      %14 = vector.broadcast %13 : vector<1x32xf32> to vector<16x32xf32>
      %15 = arith.addf %12, %14 : vector<16x32xf32>
      %c0_14 = arith.constant 0 : index
      %c0_15 = arith.constant 0 : index
      %16 = vector.load %arg5[%c0_14, %c0_15] : memref<16x32xbf16, #tpu.memory_space<vmem>>, vector<16x32xbf16>
      %17 = arith.extf %16 : vector<16x32xbf16> to vector<16x32xf32>
      %18 = arith.addf %15, %17 : vector<16x32xf32>
      %cst_16 = arith.constant dense<0.000000e+00> : vector<16xf32>
      %19 = vector.multi_reduction <add>, %18, %cst_16 [1] : vector<16x32xf32> to vector<16xf32>
      %20 = vector.shape_cast %19 : vector<16xf32> to vector<16x1xf32>
      %cst_17 = arith.constant 3.200000e+01 : f32
      %21 = vector.broadcast %cst_17 : f32 to vector<16x1xf32>
      %22 = arith.divf %20, %21 : vector<16x1xf32>
      %23 = vector.broadcast %22 : vector<16x1xf32> to vector<16x32xf32>
      %24 = arith.subf %18, %23 : vector<16x32xf32>
      %25 = arith.mulf %24, %24 : vector<16x32xf32>
      %cst_18 = arith.constant dense<0.000000e+00> : vector<16xf32>
      %26 = vector.multi_reduction <add>, %25, %cst_18 [1] : vector<16x32xf32> to vector<16xf32>
      %27 = vector.shape_cast %26 : vector<16xf32> to vector<16x1xf32>
      %cst_19 = arith.constant 3.200000e+01 : f32
      %28 = vector.broadcast %cst_19 : f32 to vector<16x1xf32>
      %29 = arith.divf %27, %28 : vector<16x1xf32>
      %30 = vector.broadcast %22 : vector<16x1xf32> to vector<16x32xf32>
      %31 = arith.subf %18, %30 : vector<16x32xf32>
      %cst_20 = arith.constant 9.99999974E-6 : f32
      %32 = vector.broadcast %cst_20 : f32 to vector<16x1xf32>
      %33 = arith.addf %29, %32 : vector<16x1xf32>
      %34 = math.rsqrt %33 : vector<16x1xf32>
      %35 = vector.broadcast %34 : vector<16x1xf32> to vector<16x32xf32>
      %36 = arith.mulf %31, %35 : vector<16x32xf32>
      %c0_21 = arith.constant 0 : index
      %c0_22 = arith.constant 0 : index
      %37 = vector.load %arg6[%c0_21, %c0_22] : memref<1x32xf32, #tpu.memory_space<vmem>>, vector<1x32xf32>
      %38 = vector.broadcast %37 : vector<1x32xf32> to vector<16x32xf32>
      %39 = arith.mulf %36, %38 : vector<16x32xf32>
      %c0_23 = arith.constant 0 : index
      %c0_24 = arith.constant 0 : index
      %40 = vector.load %arg7[%c0_23, %c0_24] : memref<1x32xf32, #tpu.memory_space<vmem>>, vector<1x32xf32>
      %41 = vector.broadcast %40 : vector<1x32xf32> to vector<16x32xf32>
      %42 = arith.addf %39, %41 : vector<16x32xf32>
      %43 = arith.truncf %42 : vector<16x32xf32> to vector<16x32xbf16>
      %c0_25 = arith.constant 0 : index
      %c0_26 = arith.constant 0 : index
      %44 = vector.load %arg8[%c0_25, %c0_26] : memref<16x32xbf16, #tpu.memory_space<vmem>>, vector<16x32xbf16>
      tpu.vector_store %arg8[%c0_25, %c0_26], %43 {strides = array<i32>} : memref<16x32xbf16, #tpu.memory_space<vmem>>, vector<16x32xbf16>,
    } else {
    }
    return
  }
  func.func @transform_0(%arg0: i32, %arg1: i32) -> (i32, i32) {
    %c0_i32 = arith.constant 0 : i32
    return %arg0, %arg1 : i32, i32
  }
  func.func @transform_1(%arg0: i32, %arg1: i32) -> (i32, i32) {
    %c0_i32 = arith.constant 0 : i32
    %c0_i32_0 = arith.constant 0 : i32
    return %arg1, %c0_i32 : i32, i32
  }
  func.func @transform_2(%arg0: i32, %arg1: i32) -> (i32, i32) {
    %c0_i32 = arith.constant 0 : i32
    %c0_i32_0 = arith.constant 0 : i32
    %c0_i32_1 = arith.constant 0 : i32
    return %c0_i32, %c0_i32_0 : i32, i32
  }
  func.func @transform_3(%arg0: i32, %arg1: i32) -> (i32, i32) {
    %c0_i32 = arith.constant 0 : i32
    %c0_i32_0 = arith.constant 0 : i32
    return %arg0, %c0_i32 : i32, i32
  }
  func.func @transform_4(%arg0: i32, %arg1: i32) -> (i32, i32) {
    %c0_i32 = arith.constant 0 : i32
    %c0_i32_0 = arith.constant 0 : i32
    %c0_i32_1 = arith.constant 0 : i32
    return %c0_i32, %c0_i32_0 : i32, i32
  }
  func.func @transform_5(%arg0: i32, %arg1: i32) -> (i32, i32) {
    %c0_i32 = arith.constant 0 : i32
    %c0_i32_0 = arith.constant 0 : i32
    %c0_i32_1 = arith.constant 0 : i32
    return %c0_i32, %c0_i32_0 : i32, i32
  }
  func.func @transform_6(%arg0: i32, %arg1: i32) -> (i32, i32) {
    %c0_i32 = arith.constant 0 : i32
    %c0_i32_0 = arith.constant 0 : i32
    return %arg0, %c0_i32 : i32, i32
  }
}

module attributes {stable_mosaic.version = 11 : i64} {
  func.func @_mha_kernel(%arg0: i32, %arg1: i32, %arg2: memref<1x8x32xbf16, #tpu.memory_space<vmem>>, %arg3: memref<1x32x8xbf16, #tpu.memory_space<vmem>>, %arg4: memref<1x8x32xbf16, #tpu.memory_space<vmem>>, %arg5: memref<1x1x8xf32, #tpu.memory_space<vmem>>, %arg6: memref<1x8x32xbf16, #tpu.memory_space<vmem>>) attributes {dimension_semantics = [#tpu.dimension_semantics<parallel>, #tpu.dimension_semantics<parallel>], iteration_bounds = array<i64: 2, 1>, scalar_prefetch = 0 : i64, scratch_operands = 0 : i64, tpu.core_type = #tpu.core_type<tc>, window_params = [{transform_indices = @transform_0, window_bounds = array<i64: 1, 8, 32>}, {transform_indices = @transform_1, window_bounds = array<i64: 1, 32, 8>}, {transform_indices = @transform_2, window_bounds = array<i64: 1, 8, 32>}, {transform_indices = @transform_3, window_bounds = array<i64: 1, 1, 8>}, {transform_indices = @transform_4, window_bounds = array<i64: 1, 8, 32>}]} {
    %c0 = arith.constant 0 : index
    %c0_0 = arith.constant 0 : index
    %c0_1 = arith.constant 0 : index
    %0 = vector.load %arg5[%c0, %c0_0, %c0_1] : memref<1x1x8xf32, #tpu.memory_space<vmem>>, vector<1x1x8xf32>
    %1 = vector.shape_cast %0 : vector<1x1x8xf32> to vector<1x8xf32>
    %cst = arith.constant 5.000000e-01 : f32
    %2 = vector.broadcast %cst : f32 to vector<1x8xf32>
    %3 = arith.cmpf ogt, %1, %2 : vector<1x8xf32>
    %4 = vector.shape_cast %3 : vector<1x8xi1> to vector<1x8xi1>
    %5 = vector.broadcast %4 : vector<1x8xi1> to vector<8x8xi1>
    %6 = tpu.iota {dimensions = array<i32: 0>} : vector<8x8xi32>
    %7 = tpu.iota {dimensions = array<i32: 1>} : vector<8x8xi32>
    %8 = arith.cmpi sle, %7, %6 : vector<8x8xi32>
    %9 = arith.andi %5, %8 : vector<8x8xi1>
    %c0_2 = arith.constant 0 : index
    %c0_3 = arith.constant 0 : index
    %c0_4 = arith.constant 0 : index
    %10 = vector.load %arg2[%c0_2, %c0_3, %c0_4] : memref<1x8x32xbf16, #tpu.memory_space<vmem>>, vector<1x8x32xbf16>
    %11 = vector.shape_cast %10 : vector<1x8x32xbf16> to vector<8x32xbf16>
    %c0_5 = arith.constant 0 : index
    %c0_6 = arith.constant 0 : index
    %c0_7 = arith.constant 0 : index
    %12 = vector.load %arg3[%c0_5, %c0_6, %c0_7] : memref<1x32x8xbf16, #tpu.memory_space<vmem>>, vector<1x32x8xbf16>
    %13 = vector.shape_cast %12 : vector<1x32x8xbf16> to vector<32x8xbf16>
    %c0_8 = arith.constant 0 : index
    %c0_9 = arith.constant 0 : index
    %c0_10 = arith.constant 0 : index
    %14 = vector.load %arg4[%c0_8, %c0_9, %c0_10] : memref<1x8x32xbf16, #tpu.memory_space<vmem>>, vector<1x8x32xbf16>
    %15 = vector.shape_cast %14 : vector<1x8x32xbf16> to vector<8x32xbf16>
    %16 = vector.extract_strided_slice %11 {offsets = [0, 0], sizes = [8, 8], strides = [1, 1]} : vector<8x32xbf16> to vector<8x8xbf16>
    %17 = vector.extract_strided_slice %13 {offsets = [0, 0], sizes = [8, 8], strides = [1, 1]} : vector<32x8xbf16> to vector<8x8xbf16>
    %cst_11 = arith.constant dense<0.000000e+00> : vector<8x8xf32>
    %18 = tpu.matmul %16, %17, %cst_11 {dimension_numbers = #tpu.dot_dimension_numbers<[1], [0], [0], [1], [0, 0, 1, 1], [], []>} : vector<8x8xbf16>, vector<8x8xbf16>, vector<8x8xf32> -> vector<8x8xf32>
    %cst_12 = arith.constant 0.353553385 : f32
    %19 = vector.broadcast %cst_12 : f32 to vector<8x8xf32>
    %20 = arith.mulf %18, %19 : vector<8x8xf32>
    %cst_13 = arith.constant -1.000000e+10 : f32
    %21 = vector.broadcast %cst_13 : f32 to vector<8x8xf32>
    %22 = arith.select %9, %20, %21 : vector<8x8xi1>, vector<8x8xf32>
    %cst_14 = arith.constant dense<0xFF800000> : vector<8xf32>
    %23 = vector.multi_reduction <maximumf>, %22, %cst_14 [1] : vector<8x8xf32> to vector<8xf32>
    %24 = vector.shape_cast %23 : vector<8xf32> to vector<8x1xf32>
    %25 = vector.broadcast %24 : vector<8x1xf32> to vector<8x8xf32>
    %26 = arith.subf %22, %25 : vector<8x8xf32>
    %27 = math.exp %26 : vector<8x8xf32>
    %cst_15 = arith.constant dense<0.000000e+00> : vector<8xf32>
    %28 = vector.multi_reduction <add>, %27, %cst_15 [1] : vector<8x8xf32> to vector<8xf32>
    %29 = vector.shape_cast %28 : vector<8xf32> to vector<8x1xf32>
    %30 = tpu.reciprocal %29 {approx = true} : vector<8x1xf32> -> vector<8x1xf32>
    %31 = arith.truncf %27 : vector<8x8xf32> to vector<8x8xbf16>
    %32 = vector.extract_strided_slice %15 {offsets = [0, 0], sizes = [8, 8], strides = [1, 1]} : vector<8x32xbf16> to vector<8x8xbf16>
    %cst_16 = arith.constant dense<0.000000e+00> : vector<8x8xf32>
    %33 = tpu.matmul %31, %32, %cst_16 {dimension_numbers = #tpu.dot_dimension_numbers<[1], [0], [0], [1], [0, 0, 1, 1], [], []>} : vector<8x8xbf16>, vector<8x8xbf16>, vector<8x8xf32> -> vector<8x8xf32>
    %34 = vector.broadcast %30 : vector<8x1xf32> to vector<8x8xf32>
    %35 = arith.mulf %33, %34 : vector<8x8xf32>
    %36 = arith.truncf %35 : vector<8x8xf32> to vector<8x8xbf16>
    %c0_17 = arith.constant 0 : index
    %c0_18 = arith.constant 0 : index
    %c0_19 = arith.constant 0 : index
    %37 = vector.load %arg6[%c0_17, %c0_18, %c0_19] : memref<1x8x32xbf16, #tpu.memory_space<vmem>>, vector<1x8x8xbf16>
    %38 = vector.shape_cast %37 : vector<1x8x8xbf16> to vector<8x8xbf16>
    %39 = vector.shape_cast %36 : vector<8x8xbf16> to vector<1x8x8xbf16>
    tpu.vector_store %arg6[%c0_17, %c0_18, %c0_19], %39 {strides = array<i32>} : memref<1x8x32xbf16, #tpu.memory_space<vmem>>, vector<1x8x8xbf16>,
    %40 = vector.extract_strided_slice %11 {offsets = [0, 8], sizes = [8, 8], strides = [1, 1]} : vector<8x32xbf16> to vector<8x8xbf16>
    %41 = vector.extract_strided_slice %13 {offsets = [8, 0], sizes = [8, 8], strides = [1, 1]} : vector<32x8xbf16> to vector<8x8xbf16>
    %cst_20 = arith.constant dense<0.000000e+00> : vector<8x8xf32>
    %42 = tpu.matmul %40, %41, %cst_20 {dimension_numbers = #tpu.dot_dimension_numbers<[1], [0], [0], [1], [0, 0, 1, 1], [], []>} : vector<8x8xbf16>, vector<8x8xbf16>, vector<8x8xf32> -> vector<8x8xf32>
    %cst_21 = arith.constant 0.353553385 : f32
    %43 = vector.broadcast %cst_21 : f32 to vector<8x8xf32>
    %44 = arith.mulf %42, %43 : vector<8x8xf32>
    %cst_22 = arith.constant -1.000000e+10 : f32
    %45 = vector.broadcast %cst_22 : f32 to vector<8x8xf32>
    %46 = arith.select %9, %44, %45 : vector<8x8xi1>, vector<8x8xf32>
    %cst_23 = arith.constant dense<0xFF800000> : vector<8xf32>
    %47 = vector.multi_reduction <maximumf>, %46, %cst_23 [1] : vector<8x8xf32> to vector<8xf32>
    %48 = vector.shape_cast %47 : vector<8xf32> to vector<8x1xf32>
    %49 = vector.broadcast %48 : vector<8x1xf32> to vector<8x8xf32>
    %50 = arith.subf %46, %49 : vector<8x8xf32>
    %51 = math.exp %50 : vector<8x8xf32>
    %cst_24 = arith.constant dense<0.000000e+00> : vector<8xf32>
    %52 = vector.multi_reduction <add>, %51, %cst_24 [1] : vector<8x8xf32> to vector<8xf32>
    %53 = vector.shape_cast %52 : vector<8xf32> to vector<8x1xf32>
    %54 = tpu.reciprocal %53 {approx = true} : vector<8x1xf32> -> vector<8x1xf32>
    %55 = arith.truncf %51 : vector<8x8xf32> to vector<8x8xbf16>
    %56 = vector.extract_strided_slice %15 {offsets = [0, 8], sizes = [8, 8], strides = [1, 1]} : vector<8x32xbf16> to vector<8x8xbf16>
    %cst_25 = arith.constant dense<0.000000e+00> : vector<8x8xf32>
    %57 = tpu.matmul %55, %56, %cst_25 {dimension_numbers = #tpu.dot_dimension_numbers<[1], [0], [0], [1], [0, 0, 1, 1], [], []>} : vector<8x8xbf16>, vector<8x8xbf16>, vector<8x8xf32> -> vector<8x8xf32>
    %58 = vector.broadcast %54 : vector<8x1xf32> to vector<8x8xf32>
    %59 = arith.mulf %57, %58 : vector<8x8xf32>
    %60 = arith.truncf %59 : vector<8x8xf32> to vector<8x8xbf16>
    %c0_26 = arith.constant 0 : index
    %c0_27 = arith.constant 0 : index
    %c8 = arith.constant 8 : index
    %61 = vector.load %arg6[%c0_26, %c0_27, %c8] : memref<1x8x32xbf16, #tpu.memory_space<vmem>>, vector<1x8x8xbf16>
    %62 = vector.shape_cast %61 : vector<1x8x8xbf16> to vector<8x8xbf16>
    %63 = vector.shape_cast %60 : vector<8x8xbf16> to vector<1x8x8xbf16>
    tpu.vector_store %arg6[%c0_26, %c0_27, %c8], %63 {strides = array<i32>} : memref<1x8x32xbf16, #tpu.memory_space<vmem>>, vector<1x8x8xbf16>,
    %64 = vector.extract_strided_slice %11 {offsets = [0, 16], sizes = [8, 8], strides = [1, 1]} : vector<8x32xbf16> to vector<8x8xbf16>
    %65 = vector.extract_strided_slice %13 {offsets = [16, 0], sizes = [8, 8], strides = [1, 1]} : vector<32x8xbf16> to vector<8x8xbf16>
    %cst_28 = arith.constant dense<0.000000e+00> : vector<8x8xf32>
    %66 = tpu.matmul %64, %65, %cst_28 {dimension_numbers = #tpu.dot_dimension_numbers<[1], [0], [0], [1], [0, 0, 1, 1], [], []>} : vector<8x8xbf16>, vector<8x8xbf16>, vector<8x8xf32> -> vector<8x8xf32>
    %cst_29 = arith.constant 0.353553385 : f32
    %67 = vector.broadcast %cst_29 : f32 to vector<8x8xf32>
    %68 = arith.mulf %66, %67 : vector<8x8xf32>
    %cst_30 = arith.constant -1.000000e+10 : f32
    %69 = vector.broadcast %cst_30 : f32 to vector<8x8xf32>
    %70 = arith.select %9, %68, %69 : vector<8x8xi1>, vector<8x8xf32>
    %cst_31 = arith.constant dense<0xFF800000> : vector<8xf32>
    %71 = vector.multi_reduction <maximumf>, %70, %cst_31 [1] : vector<8x8xf32> to vector<8xf32>
    %72 = vector.shape_cast %71 : vector<8xf32> to vector<8x1xf32>
    %73 = vector.broadcast %72 : vector<8x1xf32> to vector<8x8xf32>
    %74 = arith.subf %70, %73 : vector<8x8xf32>
    %75 = math.exp %74 : vector<8x8xf32>
    %cst_32 = arith.constant dense<0.000000e+00> : vector<8xf32>
    %76 = vector.multi_reduction <add>, %75, %cst_32 [1] : vector<8x8xf32> to vector<8xf32>
    %77 = vector.shape_cast %76 : vector<8xf32> to vector<8x1xf32>
    %78 = tpu.reciprocal %77 {approx = true} : vector<8x1xf32> -> vector<8x1xf32>
    %79 = arith.truncf %75 : vector<8x8xf32> to vector<8x8xbf16>
    %80 = vector.extract_strided_slice %15 {offsets = [0, 16], sizes = [8, 8], strides = [1, 1]} : vector<8x32xbf16> to vector<8x8xbf16>
    %cst_33 = arith.constant dense<0.000000e+00> : vector<8x8xf32>
    %81 = tpu.matmul %79, %80, %cst_33 {dimension_numbers = #tpu.dot_dimension_numbers<[1], [0], [0], [1], [0, 0, 1, 1], [], []>} : vector<8x8xbf16>, vector<8x8xbf16>, vector<8x8xf32> -> vector<8x8xf32>
    %82 = vector.broadcast %78 : vector<8x1xf32> to vector<8x8xf32>
    %83 = arith.mulf %81, %82 : vector<8x8xf32>
    %84 = arith.truncf %83 : vector<8x8xf32> to vector<8x8xbf16>
    %c0_34 = arith.constant 0 : index
    %c0_35 = arith.constant 0 : index
    %c16 = arith.constant 16 : index
    %85 = vector.load %arg6[%c0_34, %c0_35, %c16] : memref<1x8x32xbf16, #tpu.memory_space<vmem>>, vector<1x8x8xbf16>
    %86 = vector.shape_cast %85 : vector<1x8x8xbf16> to vector<8x8xbf16>
    %87 = vector.shape_cast %84 : vector<8x8xbf16> to vector<1x8x8xbf16>
    tpu.vector_store %arg6[%c0_34, %c0_35, %c16], %87 {strides = array<i32>} : memref<1x8x32xbf16, #tpu.memory_space<vmem>>, vector<1x8x8xbf16>,
    %88 = vector.extract_strided_slice %11 {offsets = [0, 24], sizes = [8, 8], strides = [1, 1]} : vector<8x32xbf16> to vector<8x8xbf16>
    %89 = vector.extract_strided_slice %13 {offsets = [24, 0], sizes = [8, 8], strides = [1, 1]} : vector<32x8xbf16> to vector<8x8xbf16>
    %cst_36 = arith.constant dense<0.000000e+00> : vector<8x8xf32>
    %90 = tpu.matmul %88, %89, %cst_36 {dimension_numbers = #tpu.dot_dimension_numbers<[1], [0], [0], [1], [0, 0, 1, 1], [], []>} : vector<8x8xbf16>, vector<8x8xbf16>, vector<8x8xf32> -> vector<8x8xf32>
    %cst_37 = arith.constant 0.353553385 : f32
    %91 = vector.broadcast %cst_37 : f32 to vector<8x8xf32>
    %92 = arith.mulf %90, %91 : vector<8x8xf32>
    %cst_38 = arith.constant -1.000000e+10 : f32
    %93 = vector.broadcast %cst_38 : f32 to vector<8x8xf32>
    %94 = arith.select %9, %92, %93 : vector<8x8xi1>, vector<8x8xf32>
    %cst_39 = arith.constant dense<0xFF800000> : vector<8xf32>
    %95 = vector.multi_reduction <maximumf>, %94, %cst_39 [1] : vector<8x8xf32> to vector<8xf32>
    %96 = vector.shape_cast %95 : vector<8xf32> to vector<8x1xf32>
    %97 = vector.broadcast %96 : vector<8x1xf32> to vector<8x8xf32>
    %98 = arith.subf %94, %97 : vector<8x8xf32>
    %99 = math.exp %98 : vector<8x8xf32>
    %cst_40 = arith.constant dense<0.000000e+00> : vector<8xf32>
    %100 = vector.multi_reduction <add>, %99, %cst_40 [1] : vector<8x8xf32> to vector<8xf32>
    %101 = vector.shape_cast %100 : vector<8xf32> to vector<8x1xf32>
    %102 = tpu.reciprocal %101 {approx = true} : vector<8x1xf32> -> vector<8x1xf32>
    %103 = arith.truncf %99 : vector<8x8xf32> to vector<8x8xbf16>
    %104 = vector.extract_strided_slice %15 {offsets = [0, 24], sizes = [8, 8], strides = [1, 1]} : vector<8x32xbf16> to vector<8x8xbf16>
    %cst_41 = arith.constant dense<0.000000e+00> : vector<8x8xf32>
    %105 = tpu.matmul %103, %104, %cst_41 {dimension_numbers = #tpu.dot_dimension_numbers<[1], [0], [0], [1], [0, 0, 1, 1], [], []>} : vector<8x8xbf16>, vector<8x8xbf16>, vector<8x8xf32> -> vector<8x8xf32>
    %106 = vector.broadcast %102 : vector<8x1xf32> to vector<8x8xf32>
    %107 = arith.mulf %105, %106 : vector<8x8xf32>
    %108 = arith.truncf %107 : vector<8x8xf32> to vector<8x8xbf16>
    %c0_42 = arith.constant 0 : index
    %c0_43 = arith.constant 0 : index
    %c24 = arith.constant 24 : index
    %109 = vector.load %arg6[%c0_42, %c0_43, %c24] : memref<1x8x32xbf16, #tpu.memory_space<vmem>>, vector<1x8x8xbf16>
    %110 = vector.shape_cast %109 : vector<1x8x8xbf16> to vector<8x8xbf16>
    %111 = vector.shape_cast %108 : vector<8x8xbf16> to vector<1x8x8xbf16>
    tpu.vector_store %arg6[%c0_42, %c0_43, %c24], %111 {strides = array<i32>} : memref<1x8x32xbf16, #tpu.memory_space<vmem>>, vector<1x8x8xbf16>,
    return
  }
  func.func @transform_0(%arg0: i32, %arg1: i32) -> (i32, i32, i32) {
    %c0_i32 = arith.constant 0 : i32
    %c0_i32_0 = arith.constant 0 : i32
    return %arg0, %c0_i32, %arg1 : i32, i32, i32
  }
  func.func @transform_1(%arg0: i32, %arg1: i32) -> (i32, i32, i32) {
    %c0_i32 = arith.constant 0 : i32
    %c0_i32_0 = arith.constant 0 : i32
    return %arg0, %arg1, %c0_i32 : i32, i32, i32
  }
  func.func @transform_2(%arg0: i32, %arg1: i32) -> (i32, i32, i32) {
    %c0_i32 = arith.constant 0 : i32
    %c0_i32_0 = arith.constant 0 : i32
    return %arg0, %c0_i32, %arg1 : i32, i32, i32
  }
  func.func @transform_3(%arg0: i32, %arg1: i32) -> (i32, i32, i32) {
    %c0_i32 = arith.constant 0 : i32
    %c0_i32_0 = arith.constant 0 : i32
    %c0_i32_1 = arith.constant 0 : i32
    return %arg0, %c0_i32, %c0_i32_0 : i32, i32, i32
  }
  func.func @transform_4(%arg0: i32, %arg1: i32) -> (i32, i32, i32) {
    %c0_i32 = arith.constant 0 : i32
    %c0_i32_0 = arith.constant 0 : i32
    return %arg0, %c0_i32, %arg1 : i32, i32, i32
  }
}

module attributes {stable_mosaic.version = 11 : i64} {
  func.func @_linear_kernel(%arg0: i32, %arg1: i32, %arg2: i32, %arg3: memref<16x32xbf16, #tpu.memory_space<vmem>>, %arg4: memref<32x64xbf16, #tpu.memory_space<vmem>>, %arg5: memref<1x64xf32, #tpu.memory_space<vmem>>, %arg6: memref<16x64xbf16, #tpu.memory_space<vmem>>, %arg7: memref<16x64xf32, #tpu.memory_space<vmem>>) attributes {dimension_semantics = [#tpu.dimension_semantics<parallel>, #tpu.dimension_semantics<parallel>, #tpu.dimension_semantics<arbitrary>], iteration_bounds = array<i64: 1, 1, 1>, scalar_prefetch = 0 : i64, scratch_operands = 1 : i64, tpu.core_type = #tpu.core_type<tc>, window_params = [{transform_indices = @transform_0, window_bounds = array<i64: 16, 32>}, {transform_indices = @transform_1, window_bounds = array<i64: 32, 64>}, {transform_indices = @transform_2, window_bounds = array<i64: 1, 64>}, {transform_indices = @transform_3, window_bounds = array<i64: 16, 64>}]} {
    %c0_i32 = arith.constant 0 : i32
    %0 = arith.cmpi eq, %arg2, %c0_i32 : i32
    %1 = arith.extui %0 : i1 to i32
    %c0_i32_0 = arith.constant 0 : i32
    %2 = arith.cmpi ne, %1, %c0_i32_0 : i32
    scf.if %2 {
      %cst_10 = arith.constant 0.000000e+00 : f32
      %12 = vector.broadcast %cst_10 : f32 to vector<16x64xf32>
      %c0_11 = arith.constant 0 : index
      %c0_12 = arith.constant 0 : index
      %13 = vector.load %arg7[%c0_11, %c0_12] : memref<16x64xf32, #tpu.memory_space<vmem>>, vector<16x64xf32>
      tpu.vector_store %arg7[%c0_11, %c0_12], %12 {strides = array<i32>} : memref<16x64xf32, #tpu.memory_space<vmem>>, vector<16x64xf32>,
    } else {
    }
    %c0 = arith.constant 0 : index
    %c0_1 = arith.constant 0 : index
    %3 = vector.load %arg7[%c0, %c0_1] : memref<16x64xf32, #tpu.memory_space<vmem>>, vector<16x64xf32>
    %c0_2 = arith.constant 0 : index
    %c0_3 = arith.constant 0 : index
    %4 = vector.load %arg3[%c0_2, %c0_3] : memref<16x32xbf16, #tpu.memory_space<vmem>>, vector<16x32xbf16>
    %c0_4 = arith.constant 0 : index
    %c0_5 = arith.constant 0 : index
    %5 = vector.load %arg4[%c0_4, %c0_5] : memref<32x64xbf16, #tpu.memory_space<vmem>>, vector<32x64xbf16>
    %cst = arith.constant dense<0.000000e+00> : vector<16x64xf32>
    %6 = tpu.matmul %4, %5, %cst {dimension_numbers = #tpu.dot_dimension_numbers<[1], [0], [0], [1], [0, 0, 1, 1], [], []>} : vector<16x32xbf16>, vector<32x64xbf16>, vector<16x64xf32> -> vector<16x64xf32>
    %7 = arith.addf %3, %6 : vector<16x64xf32>
    %c0_6 = arith.constant 0 : index
    %c0_7 = arith.constant 0 : index
    %8 = vector.load %arg7[%c0_6, %c0_7] : memref<16x64xf32, #tpu.memory_space<vmem>>, vector<16x64xf32>
    tpu.vector_store %arg7[%c0_6, %c0_7], %7 {strides = array<i32>} : memref<16x64xf32, #tpu.memory_space<vmem>>, vector<16x64xf32>,
    %c0_i32_8 = arith.constant 0 : i32
    %9 = arith.cmpi eq, %arg2, %c0_i32_8 : i32
    %10 = arith.extui %9 : i1 to i32
    %c0_i32_9 = arith.constant 0 : i32
    %11 = arith.cmpi ne, %10, %c0_i32_9 : i32
    scf.if %11 {
      %c0_10 = arith.constant 0 : index
      %c0_11 = arith.constant 0 : index
      %12 = vector.load %arg7[%c0_10, %c0_11] : memref<16x64xf32, #tpu.memory_space<vmem>>, vector<16x64xf32>
      %c0_12 = arith.constant 0 : index
      %c0_13 = arith.constant 0 : index
      %13 = vector.load %arg5[%c0_12, %c0_13] : memref<1x64xf32, #tpu.memory_space<vmem>>, vector<1x64xf32>
      %14 = vector.broadcast %13 : vector<1x64xf32> to vector<16x64xf32>
      %15 = arith.addf %12, %14 : vector<16x64xf32>
      %cst_14 = arith.constant 0.000000e+00 : f32
      %16 = vector.broadcast %cst_14 : f32 to vector<16x64xf32>
      %17 = arith.maximumf %15, %16 : vector<16x64xf32>
      %18 = arith.truncf %17 : vector<16x64xf32> to vector<16x64xbf16>
      %c0_15 = arith.constant 0 : index
      %c0_16 = arith.constant 0 : index
      %19 = vector.load %arg6[%c0_15, %c0_16] : memref<16x64xbf16, #tpu.memory_space<vmem>>, vector<16x64xbf16>
      tpu.vector_store %arg6[%c0_15, %c0_16], %18 {strides = array<i32>} : memref<16x64xbf16, #tpu.memory_space<vmem>>, vector<16x64xbf16>,
    } else {
    }
    return
  }
  func.func @transform_0(%arg0: i32, %arg1: i32, %arg2: i32) -> (i32, i32) {
    %c0_i32 = arith.constant 0 : i32
    return %arg0, %arg2 : i32, i32
  }
  func.func @transform_1(%arg0: i32, %arg1: i32, %arg2: i32) -> (i32, i32) {
    %c0_i32 = arith.constant 0 : i32
    return %arg2, %arg1 : i32, i32
  }
  func.func @transform_2(%arg0: i32, %arg1: i32, %arg2: i32) -> (i32, i32) {
    %c0_i32 = arith.constant 0 : i32
    %c0_i32_0 = arith.constant 0 : i32
    return %c0_i32, %arg1 : i32, i32
  }
  func.func @transform_3(%arg0: i32, %arg1: i32, %arg2: i32) -> (i32, i32) {
    %c0_i32 = arith.constant 0 : i32
    return %arg0, %arg1 : i32, i32
  }
}

module attributes {stable_mosaic.version = 11 : i64} {
  func.func @_linear_res_ln_kernel(%arg0: i32, %arg1: i32, %arg2: memref<16x64xbf16, #tpu.memory_space<vmem>>, %arg3: memref<64x32xbf16, #tpu.memory_space<vmem>>, %arg4: memref<1x32xf32, #tpu.memory_space<vmem>>, %arg5: memref<16x32xbf16, #tpu.memory_space<vmem>>, %arg6: memref<1x32xf32, #tpu.memory_space<vmem>>, %arg7: memref<1x32xf32, #tpu.memory_space<vmem>>, %arg8: memref<16x32xbf16, #tpu.memory_space<vmem>>, %arg9: memref<16x32xf32, #tpu.memory_space<vmem>>) attributes {dimension_semantics = [#tpu.dimension_semantics<parallel>, #tpu.dimension_semantics<arbitrary>], iteration_bounds = array<i64: 1, 1>, scalar_prefetch = 0 : i64, scratch_operands = 1 : i64, tpu.core_type = #tpu.core_type<tc>, window_params = [{transform_indices = @transform_0, window_bounds = array<i64: 16, 64>}, {transform_indices = @transform_1, window_bounds = array<i64: 64, 32>}, {pipeline_mode = #tpu.pipeline_mode<synchronous>, transform_indices = @transform_2, window_bounds = array<i64: 1, 32>}, {transform_indices = @transform_3, window_bounds = array<i64: 16, 32>}, {pipeline_mode = #tpu.pipeline_mode<synchronous>, transform_indices = @transform_4, window_bounds = array<i64: 1, 32>}, {pipeline_mode = #tpu.pipeline_mode<synchronous>, transform_indices = @transform_5, window_bounds = array<i64: 1, 32>}, {transform_indices = @transform_6, window_bounds = array<i64: 16, 32>}]} {
    %c0_i32 = arith.constant 0 : i32
    %0 = arith.cmpi eq, %arg1, %c0_i32 : i32
    %1 = arith.extui %0 : i1 to i32
    %c0_i32_0 = arith.constant 0 : i32
    %2 = arith.cmpi ne, %1, %c0_i32_0 : i32
    scf.if %2 {
      %cst_10 = arith.constant 0.000000e+00 : f32
      %12 = vector.broadcast %cst_10 : f32 to vector<16x32xf32>
      %c0_11 = arith.constant 0 : index
      %c0_12 = arith.constant 0 : index
      %13 = vector.load %arg9[%c0_11, %c0_12] : memref<16x32xf32, #tpu.memory_space<vmem>>, vector<16x32xf32>
      tpu.vector_store %arg9[%c0_11, %c0_12], %12 {strides = array<i32>} : memref<16x32xf32, #tpu.memory_space<vmem>>, vector<16x32xf32>,
    } else {
    }
    %c0 = arith.constant 0 : index
    %c0_1 = arith.constant 0 : index
    %3 = vector.load %arg9[%c0, %c0_1] : memref<16x32xf32, #tpu.memory_space<vmem>>, vector<16x32xf32>
    %c0_2 = arith.constant 0 : index
    %c0_3 = arith.constant 0 : index
    %4 = vector.load %arg2[%c0_2, %c0_3] : memref<16x64xbf16, #tpu.memory_space<vmem>>, vector<16x64xbf16>
    %c0_4 = arith.constant 0 : index
    %c0_5 = arith.constant 0 : index
    %5 = vector.load %arg3[%c0_4, %c0_5] : memref<64x32xbf16, #tpu.memory_space<vmem>>, vector<64x32xbf16>
    %cst = arith.constant dense<0.000000e+00> : vector<16x32xf32>
    %6 = tpu.matmul %4, %5, %cst {dimension_numbers = #tpu.dot_dimension_numbers<[1], [0], [0], [1], [0, 0, 1, 1], [], []>} : vector<16x64xbf16>, vector<64x32xbf16>, vector<16x32xf32> -> vector<16x32xf32>
    %7 = arith.addf %3, %6 : vector<16x32xf32>
    %c0_6 = arith.constant 0 : index
    %c0_7 = arith.constant 0 : index
    %8 = vector.load %arg9[%c0_6, %c0_7] : memref<16x32xf32, #tpu.memory_space<vmem>>, vector<16x32xf32>
    tpu.vector_store %arg9[%c0_6, %c0_7], %7 {strides = array<i32>} : memref<16x32xf32, #tpu.memory_space<vmem>>, vector<16x32xf32>,
    %c0_i32_8 = arith.constant 0 : i32
    %9 = arith.cmpi eq, %arg1, %c0_i32_8 : i32
    %10 = arith.extui %9 : i1 to i32
    %c0_i32_9 = arith.constant 0 : i32
    %11 = arith.cmpi ne, %10, %c0_i32_9 : i32
    scf.if %11 {
      %c0_10 = arith.constant 0 : index
      %c0_11 = arith.constant 0 : index
      %12 = vector.load %arg9[%c0_10, %c0_11] : memref<16x32xf32, #tpu.memory_space<vmem>>, vector<16x32xf32>
      %c0_12 = arith.constant 0 : index
      %c0_13 = arith.constant 0 : index
      %13 = vector.load %arg4[%c0_12, %c0_13] : memref<1x32xf32, #tpu.memory_space<vmem>>, vector<1x32xf32>
      %14 = vector.broadcast %13 : vector<1x32xf32> to vector<16x32xf32>
      %15 = arith.addf %12, %14 : vector<16x32xf32>
      %c0_14 = arith.constant 0 : index
      %c0_15 = arith.constant 0 : index
      %16 = vector.load %arg5[%c0_14, %c0_15] : memref<16x32xbf16, #tpu.memory_space<vmem>>, vector<16x32xbf16>
      %17 = arith.extf %16 : vector<16x32xbf16> to vector<16x32xf32>
      %18 = arith.addf %15, %17 : vector<16x32xf32>
      %cst_16 = arith.constant dense<0.000000e+00> : vector<16xf32>
      %19 = vector.multi_reduction <add>, %18, %cst_16 [1] : vector<16x32xf32> to vector<16xf32>
      %20 = vector.shape_cast %19 : vector<16xf32> to vector<16x1xf32>
      %cst_17 = arith.constant 3.200000e+01 : f32
      %21 = vector.broadcast %cst_17 : f32 to vector<16x1xf32>
      %22 = arith.divf %20, %21 : vector<16x1xf32>
      %23 = vector.broadcast %22 : vector<16x1xf32> to vector<16x32xf32>
      %24 = arith.subf %18, %23 : vector<16x32xf32>
      %25 = arith.mulf %24, %24 : vector<16x32xf32>
      %cst_18 = arith.constant dense<0.000000e+00> : vector<16xf32>
      %26 = vector.multi_reduction <add>, %25, %cst_18 [1] : vector<16x32xf32> to vector<16xf32>
      %27 = vector.shape_cast %26 : vector<16xf32> to vector<16x1xf32>
      %cst_19 = arith.constant 3.200000e+01 : f32
      %28 = vector.broadcast %cst_19 : f32 to vector<16x1xf32>
      %29 = arith.divf %27, %28 : vector<16x1xf32>
      %30 = vector.broadcast %22 : vector<16x1xf32> to vector<16x32xf32>
      %31 = arith.subf %18, %30 : vector<16x32xf32>
      %cst_20 = arith.constant 9.99999974E-6 : f32
      %32 = vector.broadcast %cst_20 : f32 to vector<16x1xf32>
      %33 = arith.addf %29, %32 : vector<16x1xf32>
      %34 = math.rsqrt %33 : vector<16x1xf32>
      %35 = vector.broadcast %34 : vector<16x1xf32> to vector<16x32xf32>
      %36 = arith.mulf %31, %35 : vector<16x32xf32>
      %c0_21 = arith.constant 0 : index
      %c0_22 = arith.constant 0 : index
      %37 = vector.load %arg6[%c0_21, %c0_22] : memref<1x32xf32, #tpu.memory_space<vmem>>, vector<1x32xf32>
      %38 = vector.broadcast %37 : vector<1x32xf32> to vector<16x32xf32>
      %39 = arith.mulf %36, %38 : vector<16x32xf32>
      %c0_23 = arith.constant 0 : index
      %c0_24 = arith.constant 0 : index
      %40 = vector.load %arg7[%c0_23, %c0_24] : memref<1x32xf32, #tpu.memory_space<vmem>>, vector<1x32xf32>
      %41 = vector.broadcast %40 : vector<1x32xf32> to vector<16x32xf32>
      %42 = arith.addf %39, %41 : vector<16x32xf32>
      %43 = arith.truncf %42 : vector<16x32xf32> to vector<16x32xbf16>
      %c0_25 = arith.constant 0 : index
      %c0_26 = arith.constant 0 : index
      %44 = vector.load %arg8[%c0_25, %c0_26] : memref<16x32xbf16, #tpu.memory_space<vmem>>, vector<16x32xbf16>
      tpu.vector_store %arg8[%c0_25, %c0_26], %43 {strides = array<i32>} : memref<16x32xbf16, #tpu.memory_space<vmem>>, vector<16x32xbf16>,
    } else {
    }
    return
  }
  func.func @transform_0(%arg0: i32, %arg1: i32) -> (i32, i32) {
    %c0_i32 = arith.constant 0 : i32
    return %arg0, %arg1 : i32, i32
  }
  func.func @transform_1(%arg0: i32, %arg1: i32) -> (i32, i32) {
    %c0_i32 = arith.constant 0 : i32
    %c0_i32_0 = arith.constant 0 : i32
    return %arg1, %c0_i32 : i32, i32
  }
  func.func @transform_2(%arg0: i32, %arg1: i32) -> (i32, i32) {
    %c0_i32 = arith.constant 0 : i32
    %c0_i32_0 = arith.constant 0 : i32
    %c0_i32_1 = arith.constant 0 : i32
    return %c0_i32, %c0_i32_0 : i32, i32
  }
  func.func @transform_3(%arg0: i32, %arg1: i32) -> (i32, i32) {
    %c0_i32 = arith.constant 0 : i32
    %c0_i32_0 = arith.constant 0 : i32
    return %arg0, %c0_i32 : i32, i32
  }
  func.func @transform_4(%arg0: i32, %arg1: i32) -> (i32, i32) {
    %c0_i32 = arith.constant 0 : i32
    %c0_i32_0 = arith.constant 0 : i32
    %c0_i32_1 = arith.constant 0 : i32
    return %c0_i32, %c0_i32_0 : i32, i32
  }
  func.func @transform_5(%arg0: i32, %arg1: i32) -> (i32, i32) {
    %c0_i32 = arith.constant 0 : i32
    %c0_i32_0 = arith.constant 0 : i32
    %c0_i32_1 = arith.constant 0 : i32
    return %c0_i32, %c0_i32_0 : i32, i32
  }
  func.func @transform_6(%arg0: i32, %arg1: i32) -> (i32, i32) {
    %c0_i32 = arith.constant 0 : i32
    %c0_i32_0 = arith.constant 0 : i32
    return %arg0, %c0_i32 : i32, i32
  }
}

module attributes {stable_mosaic.version = 11 : i64} {
  func.func @_mha_kernel(%arg0: i32, %arg1: i32, %arg2: memref<1x8x32xbf16, #tpu.memory_space<vmem>>, %arg3: memref<1x32x8xbf16, #tpu.memory_space<vmem>>, %arg4: memref<1x8x32xbf16, #tpu.memory_space<vmem>>, %arg5: memref<1x1x8xf32, #tpu.memory_space<vmem>>, %arg6: memref<1x8x32xbf16, #tpu.memory_space<vmem>>) attributes {dimension_semantics = [#tpu.dimension_semantics<parallel>, #tpu.dimension_semantics<parallel>], iteration_bounds = array<i64: 2, 1>, scalar_prefetch = 0 : i64, scratch_operands = 0 : i64, tpu.core_type = #tpu.core_type<tc>, window_params = [{transform_indices = @transform_0, window_bounds = array<i64: 1, 8, 32>}, {transform_indices = @transform_1, window_bounds = array<i64: 1, 32, 8>}, {transform_indices = @transform_2, window_bounds = array<i64: 1, 8, 32>}, {transform_indices = @transform_3, window_bounds = array<i64: 1, 1, 8>}, {transform_indices = @transform_4, window_bounds = array<i64: 1, 8, 32>}]} {
    %c0 = arith.constant 0 : index
    %c0_0 = arith.constant 0 : index
    %c0_1 = arith.constant 0 : index
    %0 = vector.load %arg5[%c0, %c0_0, %c0_1] : memref<1x1x8xf32, #tpu.memory_space<vmem>>, vector<1x1x8xf32>
    %1 = vector.shape_cast %0 : vector<1x1x8xf32> to vector<1x8xf32>
    %cst = arith.constant 5.000000e-01 : f32
    %2 = vector.broadcast %cst : f32 to vector<1x8xf32>
    %3 = arith.cmpf ogt, %1, %2 : vector<1x8xf32>
    %4 = vector.shape_cast %3 : vector<1x8xi1> to vector<1x8xi1>
    %5 = vector.broadcast %4 : vector<1x8xi1> to vector<8x8xi1>
    %c0_2 = arith.constant 0 : index
    %c0_3 = arith.constant 0 : index
    %c0_4 = arith.constant 0 : index
    %6 = vector.load %arg2[%c0_2, %c0_3, %c0_4] : memref<1x8x32xbf16, #tpu.memory_space<vmem>>, vector<1x8x32xbf16>
    %7 = vector.shape_cast %6 : vector<1x8x32xbf16> to vector<8x32xbf16>
    %c0_5 = arith.constant 0 : index
    %c0_6 = arith.constant 0 : index
    %c0_7 = arith.constant 0 : index
    %8 = vector.load %arg3[%c0_5, %c0_6, %c0_7] : memref<1x32x8xbf16, #tpu.memory_space<vmem>>, vector<1x32x8xbf16>
    %9 = vector.shape_cast %8 : vector<1x32x8xbf16> to vector<32x8xbf16>
    %c0_8 = arith.constant 0 : index
    %c0_9 = arith.constant 0 : index
    %c0_10 = arith.constant 0 : index
    %10 = vector.load %arg4[%c0_8, %c0_9, %c0_10] : memref<1x8x32xbf16, #tpu.memory_space<vmem>>, vector<1x8x32xbf16>
    %11 = vector.shape_cast %10 : vector<1x8x32xbf16> to vector<8x32xbf16>
    %12 = vector.extract_strided_slice %7 {offsets = [0, 0], sizes = [8, 8], strides = [1, 1]} : vector<8x32xbf16> to vector<8x8xbf16>
    %13 = vector.extract_strided_slice %9 {offsets = [0, 0], sizes = [8, 8], strides = [1, 1]} : vector<32x8xbf16> to vector<8x8xbf16>
    %cst_11 = arith.constant dense<0.000000e+00> : vector<8x8xf32>
    %14 = tpu.matmul %12, %13, %cst_11 {dimension_numbers = #tpu.dot_dimension_numbers<[1], [0], [0], [1], [0, 0, 1, 1], [], []>} : vector<8x8xbf16>, vector<8x8xbf16>, vector<8x8xf32> -> vector<8x8xf32>
    %cst_12 = arith.constant 0.353553385 : f32
    %15 = vector.broadcast %cst_12 : f32 to vector<8x8xf32>
    %16 = arith.mulf %14, %15 : vector<8x8xf32>
    %cst_13 = arith.constant -1.000000e+10 : f32
    %17 = vector.broadcast %cst_13 : f32 to vector<8x8xf32>
    %18 = arith.select %5, %16, %17 : vector<8x8xi1>, vector<8x8xf32>
    %cst_14 = arith.constant dense<0xFF800000> : vector<8xf32>
    %19 = vector.multi_reduction <maximumf>, %18, %cst_14 [1] : vector<8x8xf32> to vector<8xf32>
    %20 = vector.shape_cast %19 : vector<8xf32> to vector<8x1xf32>
    %21 = vector.broadcast %20 : vector<8x1xf32> to vector<8x8xf32>
    %22 = arith.subf %18, %21 : vector<8x8xf32>
    %23 = math.exp %22 : vector<8x8xf32>
    %cst_15 = arith.constant dense<0.000000e+00> : vector<8xf32>
    %24 = vector.multi_reduction <add>, %23, %cst_15 [1] : vector<8x8xf32> to vector<8xf32>
    %25 = vector.shape_cast %24 : vector<8xf32> to vector<8x1xf32>
    %26 = tpu.reciprocal %25 {approx = true} : vector<8x1xf32> -> vector<8x1xf32>
    %27 = arith.truncf %23 : vector<8x8xf32> to vector<8x8xbf16>
    %28 = vector.extract_strided_slice %11 {offsets = [0, 0], sizes = [8, 8], strides = [1, 1]} : vector<8x32xbf16> to vector<8x8xbf16>
    %cst_16 = arith.constant dense<0.000000e+00> : vector<8x8xf32>
    %29 = tpu.matmul %27, %28, %cst_16 {dimension_numbers = #tpu.dot_dimension_numbers<[1], [0], [0], [1], [0, 0, 1, 1], [], []>} : vector<8x8xbf16>, vector<8x8xbf16>, vector<8x8xf32> -> vector<8x8xf32>
    %30 = vector.broadcast %26 : vector<8x1xf32> to vector<8x8xf32>
    %31 = arith.mulf %29, %30 : vector<8x8xf32>
    %32 = arith.truncf %31 : vector<8x8xf32> to vector<8x8xbf16>
    %c0_17 = arith.constant 0 : index
    %c0_18 = arith.constant 0 : index
    %c0_19 = arith.constant 0 : index
    %33 = vector.load %arg6[%c0_17, %c0_18, %c0_19] : memref<1x8x32xbf16, #tpu.memory_space<vmem>>, vector<1x8x8xbf16>
    %34 = vector.shape_cast %33 : vector<1x8x8xbf16> to vector<8x8xbf16>
    %35 = vector.shape_cast %32 : vector<8x8xbf16> to vector<1x8x8xbf16>
    tpu.vector_store %arg6[%c0_17, %c0_18, %c0_19], %35 {strides = array<i32>} : memref<1x8x32xbf16, #tpu.memory_space<vmem>>, vector<1x8x8xbf16>,
    %36 = vector.extract_strided_slice %7 {offsets = [0, 8], sizes = [8, 8], strides = [1, 1]} : vector<8x32xbf16> to vector<8x8xbf16>
    %37 = vector.extract_strided_slice %9 {offsets = [8, 0], sizes = [8, 8], strides = [1, 1]} : vector<32x8xbf16> to vector<8x8xbf16>
    %cst_20 = arith.constant dense<0.000000e+00> : vector<8x8xf32>
    %38 = tpu.matmul %36, %37, %cst_20 {dimension_numbers = #tpu.dot_dimension_numbers<[1], [0], [0], [1], [0, 0, 1, 1], [], []>} : vector<8x8xbf16>, vector<8x8xbf16>, vector<8x8xf32> -> vector<8x8xf32>
    %cst_21 = arith.constant 0.353553385 : f32
    %39 = vector.broadcast %cst_21 : f32 to vector<8x8xf32>
    %40 = arith.mulf %38, %39 : vector<8x8xf32>
    %cst_22 = arith.constant -1.000000e+10 : f32
    %41 = vector.broadcast %cst_22 : f32 to vector<8x8xf32>
    %42 = arith.select %5, %40, %41 : vector<8x8xi1>, vector<8x8xf32>
    %cst_23 = arith.constant dense<0xFF800000> : vector<8xf32>
    %43 = vector.multi_reduction <maximumf>, %42, %cst_23 [1] : vector<8x8xf32> to vector<8xf32>
    %44 = vector.shape_cast %43 : vector<8xf32> to vector<8x1xf32>
    %45 = vector.broadcast %44 : vector<8x1xf32> to vector<8x8xf32>
    %46 = arith.subf %42, %45 : vector<8x8xf32>
    %47 = math.exp %46 : vector<8x8xf32>
    %cst_24 = arith.constant dense<0.000000e+00> : vector<8xf32>
    %48 = vector.multi_reduction <add>, %47, %cst_24 [1] : vector<8x8xf32> to vector<8xf32>
    %49 = vector.shape_cast %48 : vector<8xf32> to vector<8x1xf32>
    %50 = tpu.reciprocal %49 {approx = true} : vector<8x1xf32> -> vector<8x1xf32>
    %51 = arith.truncf %47 : vector<8x8xf32> to vector<8x8xbf16>
    %52 = vector.extract_strided_slice %11 {offsets = [0, 8], sizes = [8, 8], strides = [1, 1]} : vector<8x32xbf16> to vector<8x8xbf16>
    %cst_25 = arith.constant dense<0.000000e+00> : vector<8x8xf32>
    %53 = tpu.matmul %51, %52, %cst_25 {dimension_numbers = #tpu.dot_dimension_numbers<[1], [0], [0], [1], [0, 0, 1, 1], [], []>} : vector<8x8xbf16>, vector<8x8xbf16>, vector<8x8xf32> -> vector<8x8xf32>
    %54 = vector.broadcast %50 : vector<8x1xf32> to vector<8x8xf32>
    %55 = arith.mulf %53, %54 : vector<8x8xf32>
    %56 = arith.truncf %55 : vector<8x8xf32> to vector<8x8xbf16>
    %c0_26 = arith.constant 0 : index
    %c0_27 = arith.constant 0 : index
    %c8 = arith.constant 8 : index
    %57 = vector.load %arg6[%c0_26, %c0_27, %c8] : memref<1x8x32xbf16, #tpu.memory_space<vmem>>, vector<1x8x8xbf16>
    %58 = vector.shape_cast %57 : vector<1x8x8xbf16> to vector<8x8xbf16>
    %59 = vector.shape_cast %56 : vector<8x8xbf16> to vector<1x8x8xbf16>
    tpu.vector_store %arg6[%c0_26, %c0_27, %c8], %59 {strides = array<i32>} : memref<1x8x32xbf16, #tpu.memory_space<vmem>>, vector<1x8x8xbf16>,
    %60 = vector.extract_strided_slice %7 {offsets = [0, 16], sizes = [8, 8], strides = [1, 1]} : vector<8x32xbf16> to vector<8x8xbf16>
    %61 = vector.extract_strided_slice %9 {offsets = [16, 0], sizes = [8, 8], strides = [1, 1]} : vector<32x8xbf16> to vector<8x8xbf16>
    %cst_28 = arith.constant dense<0.000000e+00> : vector<8x8xf32>
    %62 = tpu.matmul %60, %61, %cst_28 {dimension_numbers = #tpu.dot_dimension_numbers<[1], [0], [0], [1], [0, 0, 1, 1], [], []>} : vector<8x8xbf16>, vector<8x8xbf16>, vector<8x8xf32> -> vector<8x8xf32>
    %cst_29 = arith.constant 0.353553385 : f32
    %63 = vector.broadcast %cst_29 : f32 to vector<8x8xf32>
    %64 = arith.mulf %62, %63 : vector<8x8xf32>
    %cst_30 = arith.constant -1.000000e+10 : f32
    %65 = vector.broadcast %cst_30 : f32 to vector<8x8xf32>
    %66 = arith.select %5, %64, %65 : vector<8x8xi1>, vector<8x8xf32>
    %cst_31 = arith.constant dense<0xFF800000> : vector<8xf32>
    %67 = vector.multi_reduction <maximumf>, %66, %cst_31 [1] : vector<8x8xf32> to vector<8xf32>
    %68 = vector.shape_cast %67 : vector<8xf32> to vector<8x1xf32>
    %69 = vector.broadcast %68 : vector<8x1xf32> to vector<8x8xf32>
    %70 = arith.subf %66, %69 : vector<8x8xf32>
    %71 = math.exp %70 : vector<8x8xf32>
    %cst_32 = arith.constant dense<0.000000e+00> : vector<8xf32>
    %72 = vector.multi_reduction <add>, %71, %cst_32 [1] : vector<8x8xf32> to vector<8xf32>
    %73 = vector.shape_cast %72 : vector<8xf32> to vector<8x1xf32>
    %74 = tpu.reciprocal %73 {approx = true} : vector<8x1xf32> -> vector<8x1xf32>
    %75 = arith.truncf %71 : vector<8x8xf32> to vector<8x8xbf16>
    %76 = vector.extract_strided_slice %11 {offsets = [0, 16], sizes = [8, 8], strides = [1, 1]} : vector<8x32xbf16> to vector<8x8xbf16>
    %cst_33 = arith.constant dense<0.000000e+00> : vector<8x8xf32>
    %77 = tpu.matmul %75, %76, %cst_33 {dimension_numbers = #tpu.dot_dimension_numbers<[1], [0], [0], [1], [0, 0, 1, 1], [], []>} : vector<8x8xbf16>, vector<8x8xbf16>, vector<8x8xf32> -> vector<8x8xf32>
    %78 = vector.broadcast %74 : vector<8x1xf32> to vector<8x8xf32>
    %79 = arith.mulf %77, %78 : vector<8x8xf32>
    %80 = arith.truncf %79 : vector<8x8xf32> to vector<8x8xbf16>
    %c0_34 = arith.constant 0 : index
    %c0_35 = arith.constant 0 : index
    %c16 = arith.constant 16 : index
    %81 = vector.load %arg6[%c0_34, %c0_35, %c16] : memref<1x8x32xbf16, #tpu.memory_space<vmem>>, vector<1x8x8xbf16>
    %82 = vector.shape_cast %81 : vector<1x8x8xbf16> to vector<8x8xbf16>
    %83 = vector.shape_cast %80 : vector<8x8xbf16> to vector<1x8x8xbf16>
    tpu.vector_store %arg6[%c0_34, %c0_35, %c16], %83 {strides = array<i32>} : memref<1x8x32xbf16, #tpu.memory_space<vmem>>, vector<1x8x8xbf16>,
    %84 = vector.extract_strided_slice %7 {offsets = [0, 24], sizes = [8, 8], strides = [1, 1]} : vector<8x32xbf16> to vector<8x8xbf16>
    %85 = vector.extract_strided_slice %9 {offsets = [24, 0], sizes = [8, 8], strides = [1, 1]} : vector<32x8xbf16> to vector<8x8xbf16>
    %cst_36 = arith.constant dense<0.000000e+00> : vector<8x8xf32>
    %86 = tpu.matmul %84, %85, %cst_36 {dimension_numbers = #tpu.dot_dimension_numbers<[1], [0], [0], [1], [0, 0, 1, 1], [], []>} : vector<8x8xbf16>, vector<8x8xbf16>, vector<8x8xf32> -> vector<8x8xf32>
    %cst_37 = arith.constant 0.353553385 : f32
    %87 = vector.broadcast %cst_37 : f32 to vector<8x8xf32>
    %88 = arith.mulf %86, %87 : vector<8x8xf32>
    %cst_38 = arith.constant -1.000000e+10 : f32
    %89 = vector.broadcast %cst_38 : f32 to vector<8x8xf32>
    %90 = arith.select %5, %88, %89 : vector<8x8xi1>, vector<8x8xf32>
    %cst_39 = arith.constant dense<0xFF800000> : vector<8xf32>
    %91 = vector.multi_reduction <maximumf>, %90, %cst_39 [1] : vector<8x8xf32> to vector<8xf32>
    %92 = vector.shape_cast %91 : vector<8xf32> to vector<8x1xf32>
    %93 = vector.broadcast %92 : vector<8x1xf32> to vector<8x8xf32>
    %94 = arith.subf %90, %93 : vector<8x8xf32>
    %95 = math.exp %94 : vector<8x8xf32>
    %cst_40 = arith.constant dense<0.000000e+00> : vector<8xf32>
    %96 = vector.multi_reduction <add>, %95, %cst_40 [1] : vector<8x8xf32> to vector<8xf32>
    %97 = vector.shape_cast %96 : vector<8xf32> to vector<8x1xf32>
    %98 = tpu.reciprocal %97 {approx = true} : vector<8x1xf32> -> vector<8x1xf32>
    %99 = arith.truncf %95 : vector<8x8xf32> to vector<8x8xbf16>
    %100 = vector.extract_strided_slice %11 {offsets = [0, 24], sizes = [8, 8], strides = [1, 1]} : vector<8x32xbf16> to vector<8x8xbf16>
    %cst_41 = arith.constant dense<0.000000e+00> : vector<8x8xf32>
    %101 = tpu.matmul %99, %100, %cst_41 {dimension_numbers = #tpu.dot_dimension_numbers<[1], [0], [0], [1], [0, 0, 1, 1], [], []>} : vector<8x8xbf16>, vector<8x8xbf16>, vector<8x8xf32> -> vector<8x8xf32>
    %102 = vector.broadcast %98 : vector<8x1xf32> to vector<8x8xf32>
    %103 = arith.mulf %101, %102 : vector<8x8xf32>
    %104 = arith.truncf %103 : vector<8x8xf32> to vector<8x8xbf16>
    %c0_42 = arith.constant 0 : index
    %c0_43 = arith.constant 0 : index
    %c24 = arith.constant 24 : index
    %105 = vector.load %arg6[%c0_42, %c0_43, %c24] : memref<1x8x32xbf16, #tpu.memory_space<vmem>>, vector<1x8x8xbf16>
    %106 = vector.shape_cast %105 : vector<1x8x8xbf16> to vector<8x8xbf16>
    %107 = vector.shape_cast %104 : vector<8x8xbf16> to vector<1x8x8xbf16>
    tpu.vector_store %arg6[%c0_42, %c0_43, %c24], %107 {strides = array<i32>} : memref<1x8x32xbf16, #tpu.memory_space<vmem>>, vector<1x8x8xbf16>,
    return
  }
  func.func @transform_0(%arg0: i32, %arg1: i32) -> (i32, i32, i32) {
    %c0_i32 = arith.constant 0 : i32
    %c0_i32_0 = arith.constant 0 : i32
    return %arg0, %c0_i32, %arg1 : i32, i32, i32
  }
  func.func @transform_1(%arg0: i32, %arg1: i32) -> (i32, i32, i32) {
    %c0_i32 = arith.constant 0 : i32
    %c0_i32_0 = arith.constant 0 : i32
    return %arg0, %arg1, %c0_i32 : i32, i32, i32
  }
  func.func @transform_2(%arg0: i32, %arg1: i32) -> (i32, i32, i32) {
    %c0_i32 = arith.constant 0 : i32
    %c0_i32_0 = arith.constant 0 : i32
    return %arg0, %c0_i32, %arg1 : i32, i32, i32
  }
  func.func @transform_3(%arg0: i32, %arg1: i32) -> (i32, i32, i32) {
    %c0_i32 = arith.constant 0 : i32
    %c0_i32_0 = arith.constant 0 : i32
    %c0_i32_1 = arith.constant 0 : i32
    return %arg0, %c0_i32, %c0_i32_0 : i32, i32, i32
  }
  func.func @transform_4(%arg0: i32, %arg1: i32) -> (i32, i32, i32) {
    %c0_i32 = arith.constant 0 : i32
    %c0_i32_0 = arith.constant 0 : i32
    return %arg0, %c0_i32, %arg1 : i32, i32, i32
  }
}

module attributes {stable_mosaic.version = 11 : i64} {
  func.func @_linear_kernel(%arg0: i32, %arg1: i32, %arg2: i32, %arg3: memref<16x32xbf16, #tpu.memory_space<vmem>>, %arg4: memref<32x64xbf16, #tpu.memory_space<vmem>>, %arg5: memref<1x64xf32, #tpu.memory_space<vmem>>, %arg6: memref<16x64xbf16, #tpu.memory_space<vmem>>, %arg7: memref<16x64xf32, #tpu.memory_space<vmem>>) attributes {dimension_semantics = [#tpu.dimension_semantics<parallel>, #tpu.dimension_semantics<parallel>, #tpu.dimension_semantics<arbitrary>], iteration_bounds = array<i64: 1, 1, 1>, scalar_prefetch = 0 : i64, scratch_operands = 1 : i64, tpu.core_type = #tpu.core_type<tc>, window_params = [{transform_indices = @transform_0, window_bounds = array<i64: 16, 32>}, {transform_indices = @transform_1, window_bounds = array<i64: 32, 64>}, {transform_indices = @transform_2, window_bounds = array<i64: 1, 64>}, {transform_indices = @transform_3, window_bounds = array<i64: 16, 64>}]} {
    %c0_i32 = arith.constant 0 : i32
    %0 = arith.cmpi eq, %arg2, %c0_i32 : i32
    %1 = arith.extui %0 : i1 to i32
    %c0_i32_0 = arith.constant 0 : i32
    %2 = arith.cmpi ne, %1, %c0_i32_0 : i32
    scf.if %2 {
      %cst_10 = arith.constant 0.000000e+00 : f32
      %12 = vector.broadcast %cst_10 : f32 to vector<16x64xf32>
      %c0_11 = arith.constant 0 : index
      %c0_12 = arith.constant 0 : index
      %13 = vector.load %arg7[%c0_11, %c0_12] : memref<16x64xf32, #tpu.memory_space<vmem>>, vector<16x64xf32>
      tpu.vector_store %arg7[%c0_11, %c0_12], %12 {strides = array<i32>} : memref<16x64xf32, #tpu.memory_space<vmem>>, vector<16x64xf32>,
    } else {
    }
    %c0 = arith.constant 0 : index
    %c0_1 = arith.constant 0 : index
    %3 = vector.load %arg7[%c0, %c0_1] : memref<16x64xf32, #tpu.memory_space<vmem>>, vector<16x64xf32>
    %c0_2 = arith.constant 0 : index
    %c0_3 = arith.constant 0 : index
    %4 = vector.load %arg3[%c0_2, %c0_3] : memref<16x32xbf16, #tpu.memory_space<vmem>>, vector<16x32xbf16>
    %c0_4 = arith.constant 0 : index
    %c0_5 = arith.constant 0 : index
    %5 = vector.load %arg4[%c0_4, %c0_5] : memref<32x64xbf16, #tpu.memory_space<vmem>>, vector<32x64xbf16>
    %cst = arith.constant dense<0.000000e+00> : vector<16x64xf32>
    %6 = tpu.matmul %4, %5, %cst {dimension_numbers = #tpu.dot_dimension_numbers<[1], [0], [0], [1], [0, 0, 1, 1], [], []>} : vector<16x32xbf16>, vector<32x64xbf16>, vector<16x64xf32> -> vector<16x64xf32>
    %7 = arith.addf %3, %6 : vector<16x64xf32>
    %c0_6 = arith.constant 0 : index
    %c0_7 = arith.constant 0 : index
    %8 = vector.load %arg7[%c0_6, %c0_7] : memref<16x64xf32, #tpu.memory_space<vmem>>, vector<16x64xf32>
    tpu.vector_store %arg7[%c0_6, %c0_7], %7 {strides = array<i32>} : memref<16x64xf32, #tpu.memory_space<vmem>>, vector<16x64xf32>,
    %c0_i32_8 = arith.constant 0 : i32
    %9 = arith.cmpi eq, %arg2, %c0_i32_8 : i32
    %10 = arith.extui %9 : i1 to i32
    %c0_i32_9 = arith.constant 0 : i32
    %11 = arith.cmpi ne, %10, %c0_i32_9 : i32
    scf.if %11 {
      %c0_10 = arith.constant 0 : index
      %c0_11 = arith.constant 0 : index
      %12 = vector.load %arg7[%c0_10, %c0_11] : memref<16x64xf32, #tpu.memory_space<vmem>>, vector<16x64xf32>
      %c0_12 = arith.constant 0 : index
      %c0_13 = arith.constant 0 : index
      %13 = vector.load %arg5[%c0_12, %c0_13] : memref<1x64xf32, #tpu.memory_space<vmem>>, vector<1x64xf32>
      %14 = vector.broadcast %13 : vector<1x64xf32> to vector<16x64xf32>
      %15 = arith.addf %12, %14 : vector<16x64xf32>
      %16 = arith.truncf %15 : vector<16x64xf32> to vector<16x64xbf16>
      %c0_14 = arith.constant 0 : index
      %c0_15 = arith.constant 0 : index
      %17 = vector.load %arg6[%c0_14, %c0_15] : memref<16x64xbf16, #tpu.memory_space<vmem>>, vector<16x64xbf16>
      tpu.vector_store %arg6[%c0_14, %c0_15], %16 {strides = array<i32>} : memref<16x64xbf16, #tpu.memory_space<vmem>>, vector<16x64xbf16>,
    } else {
    }
    return
  }
  func.func @transform_0(%arg0: i32, %arg1: i32, %arg2: i32) -> (i32, i32) {
    %c0_i32 = arith.constant 0 : i32
    return %arg0, %arg2 : i32, i32
  }
  func.func @transform_1(%arg0: i32, %arg1: i32, %arg2: i32) -> (i32, i32) {
    %c0_i32 = arith.constant 0 : i32
    return %arg2, %arg1 : i32, i32
  }
  func.func @transform_2(%arg0: i32, %arg1: i32, %arg2: i32) -> (i32, i32) {
    %c0_i32 = arith.constant 0 : i32
    %c0_i32_0 = arith.constant 0 : i32
    return %c0_i32, %arg1 : i32, i32
  }
  func.func @transform_3(%arg0: i32, %arg1: i32, %arg2: i32) -> (i32, i32) {
    %c0_i32 = arith.constant 0 : i32
    return %arg0, %arg1 : i32, i32
  }
}

module attributes {stable_mosaic.version = 11 : i64} {
  func.func @_mha_kernel(%arg0: i32, %arg1: i32, %arg2: memref<1x8x32xbf16, #tpu.memory_space<vmem>>, %arg3: memref<1x32x8xbf16, #tpu.memory_space<vmem>>, %arg4: memref<1x8x32xbf16, #tpu.memory_space<vmem>>, %arg5: memref<1x1x8xf32, #tpu.memory_space<vmem>>, %arg6: memref<1x8x32xbf16, #tpu.memory_space<vmem>>, %arg7: memref<1x4x8x8xbf16, #tpu.memory_space<vmem>>) attributes {dimension_semantics = [#tpu.dimension_semantics<parallel>, #tpu.dimension_semantics<parallel>], iteration_bounds = array<i64: 2, 1>, scalar_prefetch = 0 : i64, scratch_operands = 0 : i64, tpu.core_type = #tpu.core_type<tc>, window_params = [{transform_indices = @transform_0, window_bounds = array<i64: 1, 8, 32>}, {transform_indices = @transform_1, window_bounds = array<i64: 1, 32, 8>}, {transform_indices = @transform_2, window_bounds = array<i64: 1, 8, 32>}, {transform_indices = @transform_3, window_bounds = array<i64: 1, 1, 8>}, {transform_indices = @transform_4, window_bounds = array<i64: 1, 8, 32>}, {transform_indices = @transform_5, window_bounds = array<i64: 1, 4, 8, 8>}]} {
    %c0 = arith.constant 0 : index
    %c0_0 = arith.constant 0 : index
    %c0_1 = arith.constant 0 : index
    %0 = vector.load %arg5[%c0, %c0_0, %c0_1] : memref<1x1x8xf32, #tpu.memory_space<vmem>>, vector<1x1x8xf32>
    %1 = vector.shape_cast %0 : vector<1x1x8xf32> to vector<1x8xf32>
    %cst = arith.constant 5.000000e-01 : f32
    %2 = vector.broadcast %cst : f32 to vector<1x8xf32>
    %3 = arith.cmpf ogt, %1, %2 : vector<1x8xf32>
    %4 = vector.shape_cast %3 : vector<1x8xi1> to vector<1x8xi1>
    %5 = vector.broadcast %4 : vector<1x8xi1> to vector<8x8xi1>
    %c0_2 = arith.constant 0 : index
    %c0_3 = arith.constant 0 : index
    %c0_4 = arith.constant 0 : index
    %6 = vector.load %arg2[%c0_2, %c0_3, %c0_4] : memref<1x8x32xbf16, #tpu.memory_space<vmem>>, vector<1x8x32xbf16>
    %7 = vector.shape_cast %6 : vector<1x8x32xbf16> to vector<8x32xbf16>
    %c0_5 = arith.constant 0 : index
    %c0_6 = arith.constant 0 : index
    %c0_7 = arith.constant 0 : index
    %8 = vector.load %arg3[%c0_5, %c0_6, %c0_7] : memref<1x32x8xbf16, #tpu.memory_space<vmem>>, vector<1x32x8xbf16>
    %9 = vector.shape_cast %8 : vector<1x32x8xbf16> to vector<32x8xbf16>
    %c0_8 = arith.constant 0 : index
    %c0_9 = arith.constant 0 : index
    %c0_10 = arith.constant 0 : index
    %10 = vector.load %arg4[%c0_8, %c0_9, %c0_10] : memref<1x8x32xbf16, #tpu.memory_space<vmem>>, vector<1x8x32xbf16>
    %11 = vector.shape_cast %10 : vector<1x8x32xbf16> to vector<8x32xbf16>
    %12 = vector.extract_strided_slice %7 {offsets = [0, 0], sizes = [8, 8], strides = [1, 1]} : vector<8x32xbf16> to vector<8x8xbf16>
    %13 = vector.extract_strided_slice %9 {offsets = [0, 0], sizes = [8, 8], strides = [1, 1]} : vector<32x8xbf16> to vector<8x8xbf16>
    %cst_11 = arith.constant dense<0.000000e+00> : vector<8x8xf32>
    %14 = tpu.matmul %12, %13, %cst_11 {dimension_numbers = #tpu.dot_dimension_numbers<[1], [0], [0], [1], [0, 0, 1, 1], [], []>} : vector<8x8xbf16>, vector<8x8xbf16>, vector<8x8xf32> -> vector<8x8xf32>
    %cst_12 = arith.constant 0.353553385 : f32
    %15 = vector.broadcast %cst_12 : f32 to vector<8x8xf32>
    %16 = arith.mulf %14, %15 : vector<8x8xf32>
    %cst_13 = arith.constant -1.000000e+10 : f32
    %17 = vector.broadcast %cst_13 : f32 to vector<8x8xf32>
    %18 = arith.select %5, %16, %17 : vector<8x8xi1>, vector<8x8xf32>
    %cst_14 = arith.constant dense<0xFF800000> : vector<8xf32>
    %19 = vector.multi_reduction <maximumf>, %18, %cst_14 [1] : vector<8x8xf32> to vector<8xf32>
    %20 = vector.shape_cast %19 : vector<8xf32> to vector<8x1xf32>
    %21 = vector.broadcast %20 : vector<8x1xf32> to vector<8x8xf32>
    %22 = arith.subf %18, %21 : vector<8x8xf32>
    %23 = math.exp %22 : vector<8x8xf32>
    %cst_15 = arith.constant dense<0.000000e+00> : vector<8xf32>
    %24 = vector.multi_reduction <add>, %23, %cst_15 [1] : vector<8x8xf32> to vector<8xf32>
    %25 = vector.shape_cast %24 : vector<8xf32> to vector<8x1xf32>
    %26 = tpu.reciprocal %25 {approx = true} : vector<8x1xf32> -> vector<8x1xf32>
    %27 = arith.truncf %23 : vector<8x8xf32> to vector<8x8xbf16>
    %28 = vector.extract_strided_slice %11 {offsets = [0, 0], sizes = [8, 8], strides = [1, 1]} : vector<8x32xbf16> to vector<8x8xbf16>
    %cst_16 = arith.constant dense<0.000000e+00> : vector<8x8xf32>
    %29 = tpu.matmul %27, %28, %cst_16 {dimension_numbers = #tpu.dot_dimension_numbers<[1], [0], [0], [1], [0, 0, 1, 1], [], []>} : vector<8x8xbf16>, vector<8x8xbf16>, vector<8x8xf32> -> vector<8x8xf32>
    %30 = vector.broadcast %26 : vector<8x1xf32> to vector<8x8xf32>
    %31 = arith.mulf %29, %30 : vector<8x8xf32>
    %32 = arith.truncf %31 : vector<8x8xf32> to vector<8x8xbf16>
    %c0_17 = arith.constant 0 : index
    %c0_18 = arith.constant 0 : index
    %c0_19 = arith.constant 0 : index
    %33 = vector.load %arg6[%c0_17, %c0_18, %c0_19] : memref<1x8x32xbf16, #tpu.memory_space<vmem>>, vector<1x8x8xbf16>
    %34 = vector.shape_cast %33 : vector<1x8x8xbf16> to vector<8x8xbf16>
    %35 = vector.shape_cast %32 : vector<8x8xbf16> to vector<1x8x8xbf16>
    tpu.vector_store %arg6[%c0_17, %c0_18, %c0_19], %35 {strides = array<i32>} : memref<1x8x32xbf16, #tpu.memory_space<vmem>>, vector<1x8x8xbf16>,
    %36 = vector.broadcast %26 : vector<8x1xf32> to vector<8x8xf32>
    %37 = arith.mulf %23, %36 : vector<8x8xf32>
    %38 = arith.truncf %37 : vector<8x8xf32> to vector<8x8xbf16>
    %c0_20 = arith.constant 0 : index
    %c0_21 = arith.constant 0 : index
    %c0_22 = arith.constant 0 : index
    %c0_23 = arith.constant 0 : index
    %39 = vector.load %arg7[%c0_20, %c0_21, %c0_22, %c0_23] : memref<1x4x8x8xbf16, #tpu.memory_space<vmem>>, vector<1x1x8x8xbf16>
    %40 = vector.shape_cast %39 : vector<1x1x8x8xbf16> to vector<8x8xbf16>
    %41 = vector.shape_cast %38 : vector<8x8xbf16> to vector<1x1x8x8xbf16>
    tpu.vector_store %arg7[%c0_20, %c0_21, %c0_22, %c0_23], %41 {strides = array<i32>} : memref<1x4x8x8xbf16, #tpu.memory_space<vmem>>, vector<1x1x8x8xbf16>,
    %42 = vector.extract_strided_slice %7 {offsets = [0, 8], sizes = [8, 8], strides = [1, 1]} : vector<8x32xbf16> to vector<8x8xbf16>
    %43 = vector.extract_strided_slice %9 {offsets = [8, 0], sizes = [8, 8], strides = [1, 1]} : vector<32x8xbf16> to vector<8x8xbf16>
    %cst_24 = arith.constant dense<0.000000e+00> : vector<8x8xf32>
    %44 = tpu.matmul %42, %43, %cst_24 {dimension_numbers = #tpu.dot_dimension_numbers<[1], [0], [0], [1], [0, 0, 1, 1], [], []>} : vector<8x8xbf16>, vector<8x8xbf16>, vector<8x8xf32> -> vector<8x8xf32>
    %cst_25 = arith.constant 0.353553385 : f32
    %45 = vector.broadcast %cst_25 : f32 to vector<8x8xf32>
    %46 = arith.mulf %44, %45 : vector<8x8xf32>
    %cst_26 = arith.constant -1.000000e+10 : f32
    %47 = vector.broadcast %cst_26 : f32 to vector<8x8xf32>
    %48 = arith.select %5, %46, %47 : vector<8x8xi1>, vector<8x8xf32>
    %cst_27 = arith.constant dense<0xFF800000> : vector<8xf32>
    %49 = vector.multi_reduction <maximumf>, %48, %cst_27 [1] : vector<8x8xf32> to vector<8xf32>
    %50 = vector.shape_cast %49 : vector<8xf32> to vector<8x1xf32>
    %51 = vector.broadcast %50 : vector<8x1xf32> to vector<8x8xf32>
    %52 = arith.subf %48, %51 : vector<8x8xf32>
    %53 = math.exp %52 : vector<8x8xf32>
    %cst_28 = arith.constant dense<0.000000e+00> : vector<8xf32>
    %54 = vector.multi_reduction <add>, %53, %cst_28 [1] : vector<8x8xf32> to vector<8xf32>
    %55 = vector.shape_cast %54 : vector<8xf32> to vector<8x1xf32>
    %56 = tpu.reciprocal %55 {approx = true} : vector<8x1xf32> -> vector<8x1xf32>
    %57 = arith.truncf %53 : vector<8x8xf32> to vector<8x8xbf16>
    %58 = vector.extract_strided_slice %11 {offsets = [0, 8], sizes = [8, 8], strides = [1, 1]} : vector<8x32xbf16> to vector<8x8xbf16>
    %cst_29 = arith.constant dense<0.000000e+00> : vector<8x8xf32>
    %59 = tpu.matmul %57, %58, %cst_29 {dimension_numbers = #tpu.dot_dimension_numbers<[1], [0], [0], [1], [0, 0, 1, 1], [], []>} : vector<8x8xbf16>, vector<8x8xbf16>, vector<8x8xf32> -> vector<8x8xf32>
    %60 = vector.broadcast %56 : vector<8x1xf32> to vector<8x8xf32>
    %61 = arith.mulf %59, %60 : vector<8x8xf32>
    %62 = arith.truncf %61 : vector<8x8xf32> to vector<8x8xbf16>
    %c0_30 = arith.constant 0 : index
    %c0_31 = arith.constant 0 : index
    %c8 = arith.constant 8 : index
    %63 = vector.load %arg6[%c0_30, %c0_31, %c8] : memref<1x8x32xbf16, #tpu.memory_space<vmem>>, vector<1x8x8xbf16>
    %64 = vector.shape_cast %63 : vector<1x8x8xbf16> to vector<8x8xbf16>
    %65 = vector.shape_cast %62 : vector<8x8xbf16> to vector<1x8x8xbf16>
    tpu.vector_store %arg6[%c0_30, %c0_31, %c8], %65 {strides = array<i32>} : memref<1x8x32xbf16, #tpu.memory_space<vmem>>, vector<1x8x8xbf16>,
    %66 = vector.broadcast %56 : vector<8x1xf32> to vector<8x8xf32>
    %67 = arith.mulf %53, %66 : vector<8x8xf32>
    %68 = arith.truncf %67 : vector<8x8xf32> to vector<8x8xbf16>
    %c0_32 = arith.constant 0 : index
    %c1 = arith.constant 1 : index
    %c0_33 = arith.constant 0 : index
    %c0_34 = arith.constant 0 : index
    %69 = vector.load %arg7[%c0_32, %c1, %c0_33, %c0_34] : memref<1x4x8x8xbf16, #tpu.memory_space<vmem>>, vector<1x1x8x8xbf16>
    %70 = vector.shape_cast %69 : vector<1x1x8x8xbf16> to vector<8x8xbf16>
    %71 = vector.shape_cast %68 : vector<8x8xbf16> to vector<1x1x8x8xbf16>
    tpu.vector_store %arg7[%c0_32, %c1, %c0_33, %c0_34], %71 {strides = array<i32>} : memref<1x4x8x8xbf16, #tpu.memory_space<vmem>>, vector<1x1x8x8xbf16>,
    %72 = vector.extract_strided_slice %7 {offsets = [0, 16], sizes = [8, 8], strides = [1, 1]} : vector<8x32xbf16> to vector<8x8xbf16>
    %73 = vector.extract_strided_slice %9 {offsets = [16, 0], sizes = [8, 8], strides = [1, 1]} : vector<32x8xbf16> to vector<8x8xbf16>
    %cst_35 = arith.constant dense<0.000000e+00> : vector<8x8xf32>
    %74 = tpu.matmul %72, %73, %cst_35 {dimension_numbers = #tpu.dot_dimension_numbers<[1], [0], [0], [1], [0, 0, 1, 1], [], []>} : vector<8x8xbf16>, vector<8x8xbf16>, vector<8x8xf32> -> vector<8x8xf32>
    %cst_36 = arith.constant 0.353553385 : f32
    %75 = vector.broadcast %cst_36 : f32 to vector<8x8xf32>
    %76 = arith.mulf %74, %75 : vector<8x8xf32>
    %cst_37 = arith.constant -1.000000e+10 : f32
    %77 = vector.broadcast %cst_37 : f32 to vector<8x8xf32>
    %78 = arith.select %5, %76, %77 : vector<8x8xi1>, vector<8x8xf32>
    %cst_38 = arith.constant dense<0xFF800000> : vector<8xf32>
    %79 = vector.multi_reduction <maximumf>, %78, %cst_38 [1] : vector<8x8xf32> to vector<8xf32>
    %80 = vector.shape_cast %79 : vector<8xf32> to vector<8x1xf32>
    %81 = vector.broadcast %80 : vector<8x1xf32> to vector<8x8xf32>
    %82 = arith.subf %78, %81 : vector<8x8xf32>
    %83 = math.exp %82 : vector<8x8xf32>
    %cst_39 = arith.constant dense<0.000000e+00> : vector<8xf32>
    %84 = vector.multi_reduction <add>, %83, %cst_39 [1] : vector<8x8xf32> to vector<8xf32>
    %85 = vector.shape_cast %84 : vector<8xf32> to vector<8x1xf32>
    %86 = tpu.reciprocal %85 {approx = true} : vector<8x1xf32> -> vector<8x1xf32>
    %87 = arith.truncf %83 : vector<8x8xf32> to vector<8x8xbf16>
    %88 = vector.extract_strided_slice %11 {offsets = [0, 16], sizes = [8, 8], strides = [1, 1]} : vector<8x32xbf16> to vector<8x8xbf16>
    %cst_40 = arith.constant dense<0.000000e+00> : vector<8x8xf32>
    %89 = tpu.matmul %87, %88, %cst_40 {dimension_numbers = #tpu.dot_dimension_numbers<[1], [0], [0], [1], [0, 0, 1, 1], [], []>} : vector<8x8xbf16>, vector<8x8xbf16>, vector<8x8xf32> -> vector<8x8xf32>
    %90 = vector.broadcast %86 : vector<8x1xf32> to vector<8x8xf32>
    %91 = arith.mulf %89, %90 : vector<8x8xf32>
    %92 = arith.truncf %91 : vector<8x8xf32> to vector<8x8xbf16>
    %c0_41 = arith.constant 0 : index
    %c0_42 = arith.constant 0 : index
    %c16 = arith.constant 16 : index
    %93 = vector.load %arg6[%c0_41, %c0_42, %c16] : memref<1x8x32xbf16, #tpu.memory_space<vmem>>, vector<1x8x8xbf16>
    %94 = vector.shape_cast %93 : vector<1x8x8xbf16> to vector<8x8xbf16>
    %95 = vector.shape_cast %92 : vector<8x8xbf16> to vector<1x8x8xbf16>
    tpu.vector_store %arg6[%c0_41, %c0_42, %c16], %95 {strides = array<i32>} : memref<1x8x32xbf16, #tpu.memory_space<vmem>>, vector<1x8x8xbf16>,
    %96 = vector.broadcast %86 : vector<8x1xf32> to vector<8x8xf32>
    %97 = arith.mulf %83, %96 : vector<8x8xf32>
    %98 = arith.truncf %97 : vector<8x8xf32> to vector<8x8xbf16>
    %c0_43 = arith.constant 0 : index
    %c2 = arith.constant 2 : index
    %c0_44 = arith.constant 0 : index
    %c0_45 = arith.constant 0 : index
    %99 = vector.load %arg7[%c0_43, %c2, %c0_44, %c0_45] : memref<1x4x8x8xbf16, #tpu.memory_space<vmem>>, vector<1x1x8x8xbf16>
    %100 = vector.shape_cast %99 : vector<1x1x8x8xbf16> to vector<8x8xbf16>
    %101 = vector.shape_cast %98 : vector<8x8xbf16> to vector<1x1x8x8xbf16>
    tpu.vector_store %arg7[%c0_43, %c2, %c0_44, %c0_45], %101 {strides = array<i32>} : memref<1x4x8x8xbf16, #tpu.memory_space<vmem>>, vector<1x1x8x8xbf16>,
    %102 = vector.extract_strided_slice %7 {offsets = [0, 24], sizes = [8, 8], strides = [1, 1]} : vector<8x32xbf16> to vector<8x8xbf16>
    %103 = vector.extract_strided_slice %9 {offsets = [24, 0], sizes = [8, 8], strides = [1, 1]} : vector<32x8xbf16> to vector<8x8xbf16>
    %cst_46 = arith.constant dense<0.000000e+00> : vector<8x8xf32>
    %104 = tpu.matmul %102, %103, %cst_46 {dimension_numbers = #tpu.dot_dimension_numbers<[1], [0], [0], [1], [0, 0, 1, 1], [], []>} : vector<8x8xbf16>, vector<8x8xbf16>, vector<8x8xf32> -> vector<8x8xf32>
    %cst_47 = arith.constant 0.353553385 : f32
    %105 = vector.broadcast %cst_47 : f32 to vector<8x8xf32>
    %106 = arith.mulf %104, %105 : vector<8x8xf32>
    %cst_48 = arith.constant -1.000000e+10 : f32
    %107 = vector.broadcast %cst_48 : f32 to vector<8x8xf32>
    %108 = arith.select %5, %106, %107 : vector<8x8xi1>, vector<8x8xf32>
    %cst_49 = arith.constant dense<0xFF800000> : vector<8xf32>
    %109 = vector.multi_reduction <maximumf>, %108, %cst_49 [1] : vector<8x8xf32> to vector<8xf32>
    %110 = vector.shape_cast %109 : vector<8xf32> to vector<8x1xf32>
    %111 = vector.broadcast %110 : vector<8x1xf32> to vector<8x8xf32>
    %112 = arith.subf %108, %111 : vector<8x8xf32>
    %113 = math.exp %112 : vector<8x8xf32>
    %cst_50 = arith.constant dense<0.000000e+00> : vector<8xf32>
    %114 = vector.multi_reduction <add>, %113, %cst_50 [1] : vector<8x8xf32> to vector<8xf32>
    %115 = vector.shape_cast %114 : vector<8xf32> to vector<8x1xf32>
    %116 = tpu.reciprocal %115 {approx = true} : vector<8x1xf32> -> vector<8x1xf32>
    %117 = arith.truncf %113 : vector<8x8xf32> to vector<8x8xbf16>
    %118 = vector.extract_strided_slice %11 {offsets = [0, 24], sizes = [8, 8], strides = [1, 1]} : vector<8x32xbf16> to vector<8x8xbf16>
    %cst_51 = arith.constant dense<0.000000e+00> : vector<8x8xf32>
    %119 = tpu.matmul %117, %118, %cst_51 {dimension_numbers = #tpu.dot_dimension_numbers<[1], [0], [0], [1], [0, 0, 1, 1], [], []>} : vector<8x8xbf16>, vector<8x8xbf16>, vector<8x8xf32> -> vector<8x8xf32>
    %120 = vector.broadcast %116 : vector<8x1xf32> to vector<8x8xf32>
    %121 = arith.mulf %119, %120 : vector<8x8xf32>
    %122 = arith.truncf %121 : vector<8x8xf32> to vector<8x8xbf16>
    %c0_52 = arith.constant 0 : index
    %c0_53 = arith.constant 0 : index
    %c24 = arith.constant 24 : index
    %123 = vector.load %arg6[%c0_52, %c0_53, %c24] : memref<1x8x32xbf16, #tpu.memory_space<vmem>>, vector<1x8x8xbf16>
    %124 = vector.shape_cast %123 : vector<1x8x8xbf16> to vector<8x8xbf16>
    %125 = vector.shape_cast %122 : vector<8x8xbf16> to vector<1x8x8xbf16>
    tpu.vector_store %arg6[%c0_52, %c0_53, %c24], %125 {strides = array<i32>} : memref<1x8x32xbf16, #tpu.memory_space<vmem>>, vector<1x8x8xbf16>,
    %126 = vector.broadcast %116 : vector<8x1xf32> to vector<8x8xf32>
    %127 = arith.mulf %113, %126 : vector<8x8xf32>
    %128 = arith.truncf %127 : vector<8x8xf32> to vector<8x8xbf16>
    %c0_54 = arith.constant 0 : index
    %c3 = arith.constant 3 : index
    %c0_55 = arith.constant 0 : index
    %c0_56 = arith.constant 0 : index
    %129 = vector.load %arg7[%c0_54, %c3, %c0_55, %c0_56] : memref<1x4x8x8xbf16, #tpu.memory_space<vmem>>, vector<1x1x8x8xbf16>
    %130 = vector.shape_cast %129 : vector<1x1x8x8xbf16> to vector<8x8xbf16>
    %131 = vector.shape_cast %128 : vector<8x8xbf16> to vector<1x1x8x8xbf16>
    tpu.vector_store %arg7[%c0_54, %c3, %c0_55, %c0_56], %131 {strides = array<i32>} : memref<1x4x8x8xbf16, #tpu.memory_space<vmem>>, vector<1x1x8x8xbf16>,
    return
  }
  func.func @transform_0(%arg0: i32, %arg1: i32) -> (i32, i32, i32) {
    %c0_i32 = arith.constant 0 : i32
    %c0_i32_0 = arith.constant 0 : i32
    return %arg0, %c0_i32, %arg1 : i32, i32, i32
  }
  func.func @transform_1(%arg0: i32, %arg1: i32) -> (i32, i32, i32) {
    %c0_i32 = arith.constant 0 : i32
    %c0_i32_0 = arith.constant 0 : i32
    return %arg0, %arg1, %c0_i32 : i32, i32, i32
  }
  func.func @transform_2(%arg0: i32, %arg1: i32) -> (i32, i32, i32) {
    %c0_i32 = arith.constant 0 : i32
    %c0_i32_0 = arith.constant 0 : i32
    return %arg0, %c0_i32, %arg1 : i32, i32, i32
  }
  func.func @transform_3(%arg0: i32, %arg1: i32) -> (i32, i32, i32) {
    %c0_i32 = arith.constant 0 : i32
    %c0_i32_0 = arith.constant 0 : i32
    %c0_i32_1 = arith.constant 0 : i32
    return %arg0, %c0_i32, %c0_i32_0 : i32, i32, i32
  }
  func.func @transform_4(%arg0: i32, %arg1: i32) -> (i32, i32, i32) {
    %c0_i32 = arith.constant 0 : i32
    %c0_i32_0 = arith.constant 0 : i32
    return %arg0, %c0_i32, %arg1 : i32, i32, i32
  }
  func.func @transform_5(%arg0: i32, %arg1: i32) -> (i32, i32, i32, i32) {
    %c0_i32 = arith.constant 0 : i32
    %c0_i32_0 = arith.constant 0 : i32
    %c0_i32_1 = arith.constant 0 : i32
    return %arg0, %arg1, %c0_i32, %c0_i32_0 : i32, i32, i32, i32
  }
}

module attributes {stable_mosaic.version = 11 : i64} {
  func.func @_linear_kernel(%arg0: i32, %arg1: i32, %arg2: i32, %arg3: memref<16x32xbf16, #tpu.memory_space<vmem>>, %arg4: memref<32x16xbf16, #tpu.memory_space<vmem>>, %arg5: memref<1x16xf32, #tpu.memory_space<vmem>>, %arg6: memref<16x16xf32, #tpu.memory_space<vmem>>, %arg7: memref<16x16xf32, #tpu.memory_space<vmem>>) attributes {dimension_semantics = [#tpu.dimension_semantics<parallel>, #tpu.dimension_semantics<parallel>, #tpu.dimension_semantics<arbitrary>], iteration_bounds = array<i64: 1, 1, 1>, scalar_prefetch = 0 : i64, scratch_operands = 1 : i64, tpu.core_type = #tpu.core_type<tc>, window_params = [{transform_indices = @transform_0, window_bounds = array<i64: 16, 32>}, {transform_indices = @transform_1, window_bounds = array<i64: 32, 16>}, {transform_indices = @transform_2, window_bounds = array<i64: 1, 16>}, {transform_indices = @transform_3, window_bounds = array<i64: 16, 16>}]} {
    %c0_i32 = arith.constant 0 : i32
    %0 = arith.cmpi eq, %arg2, %c0_i32 : i32
    %1 = arith.extui %0 : i1 to i32
    %c0_i32_0 = arith.constant 0 : i32
    %2 = arith.cmpi ne, %1, %c0_i32_0 : i32
    scf.if %2 {
      %cst_10 = arith.constant 0.000000e+00 : f32
      %12 = vector.broadcast %cst_10 : f32 to vector<16x16xf32>
      %c0_11 = arith.constant 0 : index
      %c0_12 = arith.constant 0 : index
      %13 = vector.load %arg7[%c0_11, %c0_12] : memref<16x16xf32, #tpu.memory_space<vmem>>, vector<16x16xf32>
      tpu.vector_store %arg7[%c0_11, %c0_12], %12 {strides = array<i32>} : memref<16x16xf32, #tpu.memory_space<vmem>>, vector<16x16xf32>,
    } else {
    }
    %c0 = arith.constant 0 : index
    %c0_1 = arith.constant 0 : index
    %3 = vector.load %arg7[%c0, %c0_1] : memref<16x16xf32, #tpu.memory_space<vmem>>, vector<16x16xf32>
    %c0_2 = arith.constant 0 : index
    %c0_3 = arith.constant 0 : index
    %4 = vector.load %arg3[%c0_2, %c0_3] : memref<16x32xbf16, #tpu.memory_space<vmem>>, vector<16x32xbf16>
    %c0_4 = arith.constant 0 : index
    %c0_5 = arith.constant 0 : index
    %5 = vector.load %arg4[%c0_4, %c0_5] : memref<32x16xbf16, #tpu.memory_space<vmem>>, vector<32x16xbf16>
    %cst = arith.constant dense<0.000000e+00> : vector<16x16xf32>
    %6 = tpu.matmul %4, %5, %cst {dimension_numbers = #tpu.dot_dimension_numbers<[1], [0], [0], [1], [0, 0, 1, 1], [], []>} : vector<16x32xbf16>, vector<32x16xbf16>, vector<16x16xf32> -> vector<16x16xf32>
    %7 = arith.addf %3, %6 : vector<16x16xf32>
    %c0_6 = arith.constant 0 : index
    %c0_7 = arith.constant 0 : index
    %8 = vector.load %arg7[%c0_6, %c0_7] : memref<16x16xf32, #tpu.memory_space<vmem>>, vector<16x16xf32>
    tpu.vector_store %arg7[%c0_6, %c0_7], %7 {strides = array<i32>} : memref<16x16xf32, #tpu.memory_space<vmem>>, vector<16x16xf32>,
    %c0_i32_8 = arith.constant 0 : i32
    %9 = arith.cmpi eq, %arg2, %c0_i32_8 : i32
    %10 = arith.extui %9 : i1 to i32
    %c0_i32_9 = arith.constant 0 : i32
    %11 = arith.cmpi ne, %10, %c0_i32_9 : i32
    scf.if %11 {
      %c0_10 = arith.constant 0 : index
      %c0_11 = arith.constant 0 : index
      %12 = vector.load %arg7[%c0_10, %c0_11] : memref<16x16xf32, #tpu.memory_space<vmem>>, vector<16x16xf32>
      %c0_12 = arith.constant 0 : index
      %c0_13 = arith.constant 0 : index
      %13 = vector.load %arg5[%c0_12, %c0_13] : memref<1x16xf32, #tpu.memory_space<vmem>>, vector<1x16xf32>
      %14 = vector.broadcast %13 : vector<1x16xf32> to vector<16x16xf32>
      %15 = arith.addf %12, %14 : vector<16x16xf32>
      %c0_14 = arith.constant 0 : index
      %c0_15 = arith.constant 0 : index
      %16 = vector.load %arg6[%c0_14, %c0_15] : memref<16x16xf32, #tpu.memory_space<vmem>>, vector<16x16xf32>
      tpu.vector_store %arg6[%c0_14, %c0_15], %15 {strides = array<i32>} : memref<16x16xf32, #tpu.memory_space<vmem>>, vector<16x16xf32>,
    } else {
    }
    return
  }
  func.func @transform_0(%arg0: i32, %arg1: i32, %arg2: i32) -> (i32, i32) {
    %c0_i32 = arith.constant 0 : i32
    return %arg0, %arg2 : i32, i32
  }
  func.func @transform_1(%arg0: i32, %arg1: i32, %arg2: i32) -> (i32, i32) {
    %c0_i32 = arith.constant 0 : i32
    return %arg2, %arg1 : i32, i32
  }
  func.func @transform_2(%arg0: i32, %arg1: i32, %arg2: i32) -> (i32, i32) {
    %c0_i32 = arith.constant 0 : i32
    %c0_i32_0 = arith.constant 0 : i32
    return %c0_i32, %arg1 : i32, i32
  }
  func.func @transform_3(%arg0: i32, %arg1: i32, %arg2: i32) -> (i32, i32) {
    %c0_i32 = arith.constant 0 : i32
    return %arg0, %arg1 : i32, i32
  }
}

</mosaic_0001>

<llo_original>
// kernel: seq2seq_forward.42
$region0: #{seq2seq_forward.42}
  #allocation0 [shape = 'u32[]', space=smem, size = 0x4, offset = 0x4, fixed_abs, tag = 'smem constant byte address 0x4 - core index']
  #allocation1 [shape = 'u32[144,128]{1,0:T(1,128)}', space=vmem, size = 0x12000, scoped, tag = 'internal scratch']
  #allocation2 [shape = 'f32[16,32]{1,0:T(8,128)}', space=vmem, size = 0x2000, scoped, tag = 'scratch operand']
  %s0 = inlined_call_operand.vmem [shape: bf16[16,32], index: 0, kind: input, shape index: {}]
  %s1 = inlined_call_operand.vmem [shape: bf16[32,32], index: 1, kind: input, shape index: {}]
  %s2 = inlined_call_operand.vmem [shape: f32[1,32], index: 2, kind: input, shape index: {}]
  %s3 = inlined_call_operand.vmem [shape: bf16[16,32], index: 3, kind: output, shape index: {}]
  %s4 = sld [smem:[#allocation0]]
  $region30: #{seq2seq_forward.42} parent=0
    _
  %s6 = ssub.s32 1, %s4
  %s7 = scalar_select 0, %s6, %s4
  // Predicated region
  $region2: #{seq2seq_forward.42} parent=0 // pred_check
    _
  $region3: #{seq2seq_forward.42} parent=0 // pred_check_branch
    %9 = sbr.rel (0) target = $region5
  $region4: #{seq2seq_forward.42} parent=0 // pred_region
    _
  $region5: #{seq2seq_forward.42} parent=0 // pred_fallthru
    _
  // Predicated region
  $region6: #{seq2seq_forward.42} parent=0 // pred_check
    _
  $region7: #{seq2seq_forward.42} parent=0 // pred_check_branch
    %11 = sbr.rel (0) target = $region9
  $region8: #{seq2seq_forward.42} parent=0 // pred_region
    _
  $region9: #{seq2seq_forward.42} parent=0 // pred_fallthru
    _
  // Predicated region
  $region10: #{seq2seq_forward.42} parent=0 // pred_check
    _
  $region11: #{seq2seq_forward.42} parent=0 // pred_check_branch
    %13 = sbr.rel (0) target = $region13
  $region12: #{seq2seq_forward.42} parent=0 // pred_region
    _
  $region13: #{seq2seq_forward.42} parent=0 // pred_fallthru
    _
  %p15 = scmp.eq.s32.totalorder 0, 0
  // Predicated region
  $region14: #{seq2seq_forward.42} parent=0 // pred_check
    %p16 = pneg %p15
  $region15: #{seq2seq_forward.42} parent=0 // pred_check_branch
    %18 = sbr.rel (%p16) target = $region17
  $region16: #{seq2seq_forward.42} parent=0 // pred_region
    %vm19 = vcmask 261120
    %20 = vst.msk [vmem:[#allocation2] sm:$0xff] %vm19, 0.0
    %21 = vst.msk [vmem:[#allocation2 + $0x8] sm:$0xff] %vm19, 0.0
  $region17: #{seq2seq_forward.42} parent=0 // pred_fallthru
    _
  %v22 = vld [vmem:[#allocation2] sm:$0xff]
  %v23 = vld [vmem:[#allocation2 + $0x8] sm:$0xff]
  %v24 = vld [vmem:[%s0] sm:$0xf]
  %v25 = vld [vmem:[%s0 + $0x4] sm:$0xf]
  %v26 = vld [vmem:[%s1] sm:$0xf]
  %v27 = vld [vmem:[%s1 + $0x4] sm:$0xf]
  %v28 = vld [vmem:[%s1 + $0x8] sm:$0xf]
  %v29 = vld [vmem:[%s1 + $0xc] sm:$0xf]
  %v32 = vunpack.c.l.b16 %v24
  %v33 = vunpack.c.l.b16 %v25
  %v34 = vpack.c.b16 %v33, %v32
  %v39 = vunpack.c.l.b16 %v26
  %v40 = vunpack.c.l.b16 %v27
  %v41 = vunpack.c.l.b16 %v28
  %v42 = vunpack.c.l.b16 %v29
  %v43 = vpack.c.b16 %v40, %v39
  %v44 = vpack.c.b16 %v42, %v41
  %vm47 = vcmask 261120
  %v49 = vsel %vm47, %v34, 0
  %51 = vmatprep.subr.bf16.mxu0 0
  %52 = vmatpush1.bf16.msra.mxu0 %v43
  %53 = vmatprep.subr.bf16.mxu0 0
  %54 = vmatpush1.bf16.msra.mxu0 %v44
  %55 = vmatprep.subr.bf16.mxu0 0
  %56 = vmatpush1.bf16.msra.mxu0 0
  %57 = vmatprep.subr.bf16.mxu0 0
  %58 = vmatpush1.bf16.msra.mxu0 0
  %59 = vmatprep.subr.bf16.mxu0 0
  %60 = vmatpush1.bf16.msra.mxu0 0
  %61 = vmatprep.subr.bf16.mxu0 0
  %62 = vmatpush1.bf16.msra.mxu0 0
  %63 = vmatprep.subr.bf16.mxu0 0
  %64 = vmatpush1.bf16.msra.mxu0 0
  %65 = vmatprep.subr.bf16.mxu0 0
  %66 = vmatpush1.bf16.msra.mxu0 0
  %67 = vmatprep.subr.bf16.mxu0 0
  %68 = vmatpush1.bf16.msra.mxu0 0
  %69 = vmatprep.subr.bf16.mxu0 0
  %70 = vmatpush1.bf16.msra.mxu0 0
  %71 = vmatprep.subr.bf16.mxu0 0
  %72 = vmatpush1.bf16.msra.mxu0 0
  %73 = vmatprep.subr.bf16.mxu0 0
  %74 = vmatpush1.bf16.msra.mxu0 0
  %75 = vmatprep.subr.bf16.mxu0 0
  %76 = vmatpush1.bf16.msra.mxu0 0
  %77 = vmatprep.subr.bf16.mxu0 0
  %78 = vmatpush1.bf16.msra.mxu0 0
  %79 = vmatprep.subr.bf16.mxu0 0
  %80 = vmatpush1.bf16.msra.mxu0 0
  %81 = vmatprep.subr.bf16.mxu0 0
  %82 = vmatpush1.bf16.msra.mxu0 0
  %83 = vmatprep.mubr.bf16.mxu0 0
  %84 = vmatmul.mubr.bf16.gmra.mrb[0].mxu0 %v49
  %v85 = vpop.f32.mrb[0].mxu0
  %v86 = vadd.f32 0.0, %v85
  %v87 = vpop.f32.mrb[0].mxu0
  %v88 = vpop.f32.mrb[0].mxu0
  %v89 = vadd.f32 0.0, %v88
  %v90 = vpop.f32.mrb[0].mxu0
  %91 = vdwg.mxu0
  %v92 = vadd.f32 %v22, %v86
  %v93 = vadd.f32 %v23, %v89
  %94 = vst.msk [vmem:[#allocation2] sm:$0xff] %vm47, %v92
  %95 = vst.msk [vmem:[#allocation2 + $0x8] sm:$0xff] %vm47, %v93
  // Predicated region
  $region18: #{seq2seq_forward.42} parent=0 // pred_check
    %p96 = pneg %p15
  $region19: #{seq2seq_forward.42} parent=0 // pred_check_branch
    %98 = sbr.rel (%p96) target = $region21
  $region20: #{seq2seq_forward.42} parent=0 // pred_region
    %v99 = vld [vmem:[#allocation2] sm:$0xff]
    %v100 = vld [vmem:[#allocation2 + $0x8] sm:$0xff]
    %v101 = vld [vmem:[%s2] sm:$0x1]
    %v103 = vlaneseq
    %v104 = vshrl.u32 %v103, 7
    %v105 = vsub.s32 0, %v104
    %v106 = vrot.slane %v101, %v105
    %v108 = vadd.f32 %v99, %v106
    %v109 = vadd.f32 %v100, %v106
    %v110 = vpack.c.bf16 %v109, %v108
    %v112 = vunpack.c.l.b16 %v110
    %v113 = vunpack.c.h.b16 %v110
    %v114 = vpack.c.b16 %v112, %v112
    %v115 = vpack.c.b16 %v113, %v113
    %vm118 = vcmask 257024
    %119 = vst.msk [vmem:[%s3] sm:$0xf] %vm118, %v114
    %120 = vst.msk [vmem:[%s3 + $0x4] sm:$0xf] %vm118, %v115
  $region21: #{seq2seq_forward.42} parent=0 // pred_fallthru
    _
  // Predicated region
  $region22: #{seq2seq_forward.42} parent=0 // pred_check
    _
  $region23: #{seq2seq_forward.42} parent=0 // pred_check_branch
    %122 = sbr.rel (0) target = $region25
  $region24: #{seq2seq_forward.42} parent=0 // pred_region
    _
  $region25: #{seq2seq_forward.42} parent=0 // pred_fallthru
    _
  // Predicated region
  $region26: #{seq2seq_forward.42} parent=0 // pred_check
    _
  $region27: #{seq2seq_forward.42} parent=0 // pred_check_branch
    %124 = sbr.rel (0) target = $region29
  $region28: #{seq2seq_forward.42} parent=0 // pred_region
    _
  $region29: #{seq2seq_forward.42} parent=0 // pred_fallthru
    _

// kernel: seq2seq_forward.39
$region0: #{seq2seq_forward.39}
  #allocation0 [shape = 'u32[]', space=smem, size = 0x4, offset = 0x4, fixed_abs, tag = 'smem constant byte address 0x4 - core index']
  #allocation1 [shape = 'u32[144,128]{1,0:T(1,128)}', space=vmem, size = 0x12000, scoped, tag = 'internal scratch']
  #allocation2 [shape = 'f32[16,96]{1,0:T(8,128)}', space=vmem, size = 0x2000, scoped, tag = 'scratch operand']
  %s0 = inlined_call_operand.vmem [shape: bf16[16,32], index: 0, kind: input, shape index: {}]
  %s1 = inlined_call_operand.vmem [shape: bf16[32,96], index: 1, kind: input, shape index: {}]
  %s2 = inlined_call_operand.vmem [shape: f32[1,96], index: 2, kind: input, shape index: {}]
  %s3 = inlined_call_operand.vmem [shape: bf16[16,96], index: 3, kind: output, shape index: {}]
  %s4 = sld [smem:[#allocation0]]
  $region30: #{seq2seq_forward.39} parent=0
    _
  %s6 = ssub.s32 1, %s4
  %s7 = scalar_select 0, %s6, %s4
  // Predicated region
  $region2: #{seq2seq_forward.39} parent=0 // pred_check
    _
  $region3: #{seq2seq_forward.39} parent=0 // pred_check_branch
    %9 = sbr.rel (0) target = $region5
  $region4: #{seq2seq_forward.39} parent=0 // pred_region
    _
  $region5: #{seq2seq_forward.39} parent=0 // pred_fallthru
    _
  // Predicated region
  $region6: #{seq2seq_forward.39} parent=0 // pred_check
    _
  $region7: #{seq2seq_forward.39} parent=0 // pred_check_branch
    %11 = sbr.rel (0) target = $region9
  $region8: #{seq2seq_forward.39} parent=0 // pred_region
    _
  $region9: #{seq2seq_forward.39} parent=0 // pred_fallthru
    _
  // Predicated region
  $region10: #{seq2seq_forward.39} parent=0 // pred_check
    _
  $region11: #{seq2seq_forward.39} parent=0 // pred_check_branch
    %13 = sbr.rel (0) target = $region13
  $region12: #{seq2seq_forward.39} parent=0 // pred_region
    _
  $region13: #{seq2seq_forward.39} parent=0 // pred_fallthru
    _
  %p15 = scmp.eq.s32.totalorder 0, 0
  // Predicated region
  $region14: #{seq2seq_forward.39} parent=0 // pred_check
    %p16 = pneg %p15
  $region15: #{seq2seq_forward.39} parent=0 // pred_check_branch
    %18 = sbr.rel (%p16) target = $region17
  $region16: #{seq2seq_forward.39} parent=0 // pred_region
    %vm19 = vcmask 785408
    %20 = vst.msk [vmem:[#allocation2] sm:$0xff] %vm19, 0.0
    %21 = vst.msk [vmem:[#allocation2 + $0x8] sm:$0xff] %vm19, 0.0
  $region17: #{seq2seq_forward.39} parent=0 // pred_fallthru
    _
  %v22 = vld [vmem:[#allocation2] sm:$0xff]
  %v23 = vld [vmem:[#allocation2 + $0x8] sm:$0xff]
  %v24 = vld [vmem:[%s0] sm:$0xf]
  %v25 = vld [vmem:[%s0 + $0x4] sm:$0xf]
  %v26 = vld [vmem:[%s1] sm:$0xf]
  %v27 = vld [vmem:[%s1 + $0x4] sm:$0xf]
  %v28 = vld [vmem:[%s1 + $0x8] sm:$0xf]
  %v29 = vld [vmem:[%s1 + $0xc] sm:$0xf]
  %v32 = vunpack.c.l.b16 %v24
  %v33 = vunpack.c.l.b16 %v25
  %v34 = vpack.c.b16 %v33, %v32
  %v39 = vunpack.c.l.b16 %v26
  %v40 = vunpack.c.l.b16 %v27
  %v41 = vunpack.c.l.b16 %v28
  %v42 = vunpack.c.l.b16 %v29
  %v43 = vpack.c.b16 %v40, %v39
  %v44 = vpack.c.b16 %v42, %v41
  %vm47 = vcmask 261120
  %v49 = vsel %vm47, %v34, 0
  %51 = vmatprep.subr.bf16.mxu0 0
  %52 = vmatpush1.bf16.msra.mxu0 %v43
  %53 = vmatprep.subr.bf16.mxu0 0
  %54 = vmatpush1.bf16.msra.mxu0 %v44
  %55 = vmatprep.subr.bf16.mxu0 0
  %56 = vmatpush1.bf16.msra.mxu0 0
  %57 = vmatprep.subr.bf16.mxu0 0
  %58 = vmatpush1.bf16.msra.mxu0 0
  %59 = vmatprep.subr.bf16.mxu0 0
  %60 = vmatpush1.bf16.msra.mxu0 0
  %61 = vmatprep.subr.bf16.mxu0 0
  %62 = vmatpush1.bf16.msra.mxu0 0
  %63 = vmatprep.subr.bf16.mxu0 0
  %64 = vmatpush1.bf16.msra.mxu0 0
  %65 = vmatprep.subr.bf16.mxu0 0
  %66 = vmatpush1.bf16.msra.mxu0 0
  %67 = vmatprep.subr.bf16.mxu0 0
  %68 = vmatpush1.bf16.msra.mxu0 0
  %69 = vmatprep.subr.bf16.mxu0 0
  %70 = vmatpush1.bf16.msra.mxu0 0
  %71 = vmatprep.subr.bf16.mxu0 0
  %72 = vmatpush1.bf16.msra.mxu0 0
  %73 = vmatprep.subr.bf16.mxu0 0
  %74 = vmatpush1.bf16.msra.mxu0 0
  %75 = vmatprep.subr.bf16.mxu0 0
  %76 = vmatpush1.bf16.msra.mxu0 0
  %77 = vmatprep.subr.bf16.mxu0 0
  %78 = vmatpush1.bf16.msra.mxu0 0
  %79 = vmatprep.subr.bf16.mxu0 0
  %80 = vmatpush1.bf16.msra.mxu0 0
  %81 = vmatprep.subr.bf16.mxu0 0
  %82 = vmatpush1.bf16.msra.mxu0 0
  %83 = vmatprep.mubr.bf16.mxu0 0
  %84 = vmatmul.mubr.bf16.gmra.mrb[0].mxu0 %v49
  %v85 = vpop.f32.mrb[0].mxu0
  %v86 = vadd.f32 0.0, %v85
  %v87 = vpop.f32.mrb[0].mxu0
  %v88 = vpop.f32.mrb[0].mxu0
  %v89 = vadd.f32 0.0, %v88
  %v90 = vpop.f32.mrb[0].mxu0
  %91 = vdwg.mxu0
  %v92 = vadd.f32 %v22, %v86
  %v93 = vadd.f32 %v23, %v89
  %vm94 = vcmask 785408
  %95 = vst.msk [vmem:[#allocation2] sm:$0xff] %vm94, %v92
  %96 = vst.msk [vmem:[#allocation2 + $0x8] sm:$0xff] %vm94, %v93
  // Predicated region
  $region18: #{seq2seq_forward.39} parent=0 // pred_check
    %p97 = pneg %p15
  $region19: #{seq2seq_forward.39} parent=0 // pred_check_branch
    %99 = sbr.rel (%p97) target = $region21
  $region20: #{seq2seq_forward.39} parent=0 // pred_region
    %v100 = vld [vmem:[#allocation2] sm:$0xff]
    %v101 = vld [vmem:[#allocation2 + $0x8] sm:$0xff]
    %v102 = vld [vmem:[%s2] sm:$0x1]
    %v104 = vlaneseq
    %v105 = vshrl.u32 %v104, 7
    %v106 = vsub.s32 0, %v105
    %v107 = vrot.slane %v102, %v106
    %v109 = vadd.f32 %v100, %v107
    %v110 = vadd.f32 %v101, %v107
    %v111 = vpack.c.bf16 %v110, %v109
    %v113 = vunpack.c.l.b16 %v111
    %v114 = vunpack.c.h.b16 %v111
    %v115 = vpack.c.b16 %v113, %v113
    %v116 = vpack.c.b16 %v114, %v114
    %vm119 = vcmask 781312
    %120 = vst.msk [vmem:[%s3] sm:$0xf] %vm119, %v115
    %121 = vst.msk [vmem:[%s3 + $0x4] sm:$0xf] %vm119, %v116
  $region21: #{seq2seq_forward.39} parent=0 // pred_fallthru
    _
  // Predicated region
  $region22: #{seq2seq_forward.39} parent=0 // pred_check
    _
  $region23: #{seq2seq_forward.39} parent=0 // pred_check_branch
    %123 = sbr.rel (0) target = $region25
  $region24: #{seq2seq_forward.39} parent=0 // pred_region
    _
  $region25: #{seq2seq_forward.39} parent=0 // pred_fallthru
    _
  // Predicated region
  $region26: #{seq2seq_forward.39} parent=0 // pred_check
    _
  $region27: #{seq2seq_forward.39} parent=0 // pred_check_branch
    %125 = sbr.rel (0) target = $region29
  $region28: #{seq2seq_forward.39} parent=0 // pred_region
    _
  $region29: #{seq2seq_forward.39} parent=0 // pred_fallthru
    _

// kernel: seq2seq_forward.41
$region0: #{seq2seq_forward.41}
  #allocation0 [shape = 'u32[]', space=smem, size = 0x4, offset = 0x4, fixed_abs, tag = 'smem constant byte address 0x4 - core index']
  #allocation1 [shape = 'u32[144,128]{1,0:T(1,128)}', space=vmem, size = 0x12000, scoped, tag = 'internal scratch']
  #allocation2 [shape = 'f32[16,32]{1,0:T(8,128)}', space=vmem, size = 0x2000, scoped, tag = 'scratch operand']
  %s0 = inlined_call_operand.vmem [shape: bf16[16,32], index: 0, kind: input, shape index: {}]
  %s1 = inlined_call_operand.vmem [shape: bf16[32,32], index: 1, kind: input, shape index: {}]
  %s2 = inlined_call_operand.vmem [shape: f32[1,32], index: 2, kind: input, shape index: {}]
  %s3 = inlined_call_operand.vmem [shape: bf16[16,32], index: 3, kind: input, shape index: {}]
  %s4 = inlined_call_operand.vmem [shape: f32[1,32], index: 4, kind: input, shape index: {}]
  %s5 = inlined_call_operand.vmem [shape: f32[1,32], index: 5, kind: input, shape index: {}]
  %s6 = inlined_call_operand.vmem [shape: bf16[16,32], index: 6, kind: output, shape index: {}]
  %s7 = sld [smem:[#allocation0]]
  $region42: #{seq2seq_forward.41} parent=0
    _
  %s9 = ssub.s32 1, %s7
  %s10 = scalar_select 0, %s9, %s7
  // Predicated region
  $region2: #{seq2seq_forward.41} parent=0 // pred_check
    _
  $region3: #{seq2seq_forward.41} parent=0 // pred_check_branch
    %12 = sbr.rel (0) target = $region5
  $region4: #{seq2seq_forward.41} parent=0 // pred_region
    _
  $region5: #{seq2seq_forward.41} parent=0 // pred_fallthru
    _
  // Predicated region
  $region6: #{seq2seq_forward.41} parent=0 // pred_check
    _
  $region7: #{seq2seq_forward.41} parent=0 // pred_check_branch
    %14 = sbr.rel (0) target = $region9
  $region8: #{seq2seq_forward.41} parent=0 // pred_region
    _
  $region9: #{seq2seq_forward.41} parent=0 // pred_fallthru
    _
  // Predicated region
  $region10: #{seq2seq_forward.41} parent=0 // pred_check
    _
  $region11: #{seq2seq_forward.41} parent=0 // pred_check_branch
    %16 = sbr.rel (0) target = $region13
  $region12: #{seq2seq_forward.41} parent=0 // pred_region
    _
  $region13: #{seq2seq_forward.41} parent=0 // pred_fallthru
    _
  // Predicated region
  $region14: #{seq2seq_forward.41} parent=0 // pred_check
    _
  $region15: #{seq2seq_forward.41} parent=0 // pred_check_branch
    %18 = sbr.rel (0) target = $region17
  $region16: #{seq2seq_forward.41} parent=0 // pred_region
    _
  $region17: #{seq2seq_forward.41} parent=0 // pred_fallthru
    _
  // Predicated region
  $region18: #{seq2seq_forward.41} parent=0 // pred_check
    _
  $region19: #{seq2seq_forward.41} parent=0 // pred_check_branch
    %20 = sbr.rel (0) target = $region21
  $region20: #{seq2seq_forward.41} parent=0 // pred_region
    _
  $region21: #{seq2seq_forward.41} parent=0 // pred_fallthru
    _
  // Predicated region
  $region22: #{seq2seq_forward.41} parent=0 // pred_check
    _
  $region23: #{seq2seq_forward.41} parent=0 // pred_check_branch
    %22 = sbr.rel (0) target = $region25
  $region24: #{seq2seq_forward.41} parent=0 // pred_region
    _
  $region25: #{seq2seq_forward.41} parent=0 // pred_fallthru
    _
  %p24 = scmp.eq.s32.totalorder 0, 0
  // Predicated region
  $region26: #{seq2seq_forward.41} parent=0 // pred_check
    %p25 = pneg %p24
  $region27: #{seq2seq_forward.41} parent=0 // pred_check_branch
    %27 = sbr.rel (%p25) target = $region29
  $region28: #{seq2seq_forward.41} parent=0 // pred_region
    %vm28 = vcmask 261120
    %29 = vst.msk [vmem:[#allocation2] sm:$0xff] %vm28, 0.0
    %30 = vst.msk [vmem:[#allocation2 + $0x8] sm:$0xff] %vm28, 0.0
  $region29: #{seq2seq_forward.41} parent=0 // pred_fallthru
    _
  %v31 = vld [vmem:[#allocation2] sm:$0xff]
  %v32 = vld [vmem:[#allocation2 + $0x8] sm:$0xff]
  %v33 = vld [vmem:[%s0] sm:$0xf]
  %v34 = vld [vmem:[%s0 + $0x4] sm:$0xf]
  %v35 = vld [vmem:[%s1] sm:$0xf]
  %v36 = vld [vmem:[%s1 + $0x4] sm:$0xf]
  %v37 = vld [vmem:[%s1 + $0x8] sm:$0xf]
  %v38 = vld [vmem:[%s1 + $0xc] sm:$0xf]
  %v41 = vunpack.c.l.b16 %v33
  %v42 = vunpack.c.l.b16 %v34
  %v43 = vpack.c.b16 %v42, %v41
  %v48 = vunpack.c.l.b16 %v35
  %v49 = vunpack.c.l.b16 %v36
  %v50 = vunpack.c.l.b16 %v37
  %v51 = vunpack.c.l.b16 %v38
  %v52 = vpack.c.b16 %v49, %v48
  %v53 = vpack.c.b16 %v51, %v50
  %vm56 = vcmask 261120
  %v58 = vsel %vm56, %v43, 0
  %60 = vmatprep.subr.bf16.mxu0 0
  %61 = vmatpush1.bf16.msra.mxu0 %v52
  %62 = vmatprep.subr.bf16.mxu0 0
  %63 = vmatpush1.bf16.msra.mxu0 %v53
  %64 = vmatprep.subr.bf16.mxu0 0
  %65 = vmatpush1.bf16.msra.mxu0 0
  %66 = vmatprep.subr.bf16.mxu0 0
  %67 = vmatpush1.bf16.msra.mxu0 0
  %68 = vmatprep.subr.bf16.mxu0 0
  %69 = vmatpush1.bf16.msra.mxu0 0
  %70 = vmatprep.subr.bf16.mxu0 0
  %71 = vmatpush1.bf16.msra.mxu0 0
  %72 = vmatprep.subr.bf16.mxu0 0
  %73 = vmatpush1.bf16.msra.mxu0 0
  %74 = vmatprep.subr.bf16.mxu0 0
  %75 = vmatpush1.bf16.msra.mxu0 0
  %76 = vmatprep.subr.bf16.mxu0 0
  %77 = vmatpush1.bf16.msra.mxu0 0
  %78 = vmatprep.subr.bf16.mxu0 0
  %79 = vmatpush1.bf16.msra.mxu0 0
  %80 = vmatprep.subr.bf16.mxu0 0
  %81 = vmatpush1.bf16.msra.mxu0 0
  %82 = vmatprep.subr.bf16.mxu0 0
  %83 = vmatpush1.bf16.msra.mxu0 0
  %84 = vmatprep.subr.bf16.mxu0 0
  %85 = vmatpush1.bf16.msra.mxu0 0
  %86 = vmatprep.subr.bf16.mxu0 0
  %87 = vmatpush1.bf16.msra.mxu0 0
  %88 = vmatprep.subr.bf16.mxu0 0
  %89 = vmatpush1.bf16.msra.mxu0 0
  %90 = vmatprep.subr.bf16.mxu0 0
  %91 = vmatpush1.bf16.msra.mxu0 0
  %92 = vmatprep.mubr.bf16.mxu0 0
  %93 = vmatmul.mubr.bf16.gmra.mrb[0].mxu0 %v58
  %v94 = vpop.f32.mrb[0].mxu0
  %v95 = vadd.f32 0.0, %v94
  %v96 = vpop.f32.mrb[0].mxu0
  %v97 = vpop.f32.mrb[0].mxu0
  %v98 = vadd.f32 0.0, %v97
  %v99 = vpop.f32.mrb[0].mxu0
  %100 = vdwg.mxu0
  %v101 = vadd.f32 %v31, %v95
  %v102 = vadd.f32 %v32, %v98
  %103 = vst.msk [vmem:[#allocation2] sm:$0xff] %vm56, %v101
  %104 = vst.msk [vmem:[#allocation2 + $0x8] sm:$0xff] %vm56, %v102
  // Predicated region
  $region30: #{seq2seq_forward.41} parent=0 // pred_check
    %p105 = pneg %p24
  $region31: #{seq2seq_forward.41} parent=0 // pred_check_branch
    %107 = sbr.rel (%p105) target = $region33
  $region32: #{seq2seq_forward.41} parent=0 // pred_region
    %v108 = vld [vmem:[#allocation2] sm:$0xff]
    %v109 = vld [vmem:[#allocation2 + $0x8] sm:$0xff]
    %v110 = vld [vmem:[%s2] sm:$0x1]
    %v112 = vlaneseq
    %v113 = vshrl.u32 %v112, 7
    %v114 = vsub.s32 0, %v113
    %v115 = vrot.slane %v110, %v114
    %v117 = vadd.f32 %v108, %v115
    %v118 = vadd.f32 %v109, %v115
    %v119 = vld [vmem:[%s3] sm:$0xf]
    %v120 = vld [vmem:[%s3 + $0x4] sm:$0xf]
    %v121 = vunpack.c.l.bf16 %v119
    %v122 = vunpack.c.l.bf16 %v120
    %v123 = vadd.f32 %v117, %v121
    %v124 = vadd.f32 %v118, %v122
    %v125 = vsel %vm56, %v123, 0.0
    %126 = vadd.xlane.f32.xlu0 %v125
    %v127 = vpop.xlane.xlu0 %126
    %v128 = vsel %vm56, %v124, 0.0
    %129 = vadd.xlane.f32.xlu0 %v128
    %v130 = vpop.xlane.xlu0 %129
    %v131 = vrcp.pop 32.0
    %v132 = vmul.f32 %v127, %v131
    %v133 = vmul.f32 %v130, %v131
    %v134 = vsub.f32 %v123, %v132
    %v135 = vsub.f32 %v124, %v133
    %v136 = vmul.f32 %v134, %v134
    %v137 = vmul.f32 %v135, %v135
    %v138 = vsel %vm56, %v136, 0.0
    %139 = vadd.xlane.f32.xlu0 %v138
    %v140 = vpop.xlane.xlu0 %139
    %v141 = vsel %vm56, %v137, 0.0
    %142 = vadd.xlane.f32.xlu0 %v141
    %v143 = vpop.xlane.xlu0 %142
    %v144 = vmul.f32 %v140, %v131
    %v145 = vmul.f32 %v143, %v131
    %v146 = vadd.f32 %v144, 1e-05
    %v147 = vadd.f32 %v145, 1e-05
    %v148 = vrsqrt.pop %v146
    %v149 = vrsqrt.pop %v147
    %v150 = vmul.f32 %v134, %v148
    %v151 = vmul.f32 %v135, %v149
    %v152 = vld [vmem:[%s4] sm:$0x1]
    %v154 = vlaneseq
    %v155 = vshrl.u32 %v154, 7
    %v156 = vsub.s32 0, %v155
    %v157 = vrot.slane %v152, %v156
    %v159 = vmul.f32 %v150, %v157
    %v160 = vmul.f32 %v151, %v157
    %v161 = vld [vmem:[%s5] sm:$0x1]
    %v163 = vlaneseq
    %v164 = vshrl.u32 %v163, 7
    %v165 = vsub.s32 0, %v164
    %v166 = vrot.slane %v161, %v165
    %v168 = vadd.f32 %v159, %v166
    %v169 = vadd.f32 %v160, %v166
    %v170 = vpack.c.bf16 %v169, %v168
    %v172 = vunpack.c.l.b16 %v170
    %v173 = vunpack.c.h.b16 %v170
    %v174 = vpack.c.b16 %v172, %v172
    %v175 = vpack.c.b16 %v173, %v173
    %vm178 = vcmask 257024
    %179 = vst.msk [vmem:[%s6] sm:$0xf] %vm178, %v174
    %180 = vst.msk [vmem:[%s6 + $0x4] sm:$0xf] %vm178, %v175
  $region33: #{seq2seq_forward.41} parent=0 // pred_fallthru
    _
  // Predicated region
  $region34: #{seq2seq_forward.41} parent=0 // pred_check
    _
  $region35: #{seq2seq_forward.41} parent=0 // pred_check_branch
    %182 = sbr.rel (0) target = $region37
  $region36: #{seq2seq_forward.41} parent=0 // pred_region
    _
  $region37: #{seq2seq_forward.41} parent=0 // pred_fallthru
    _
  // Predicated region
  $region38: #{seq2seq_forward.41} parent=0 // pred_check
    _
  $region39: #{seq2seq_forward.41} parent=0 // pred_check_branch
    %184 = sbr.rel (0) target = $region41
  $region40: #{seq2seq_forward.41} parent=0 // pred_region
    _
  $region41: #{seq2seq_forward.41} parent=0 // pred_fallthru
    _

// kernel: seq2seq_forward.40
$region0: #{seq2seq_forward.40}
  #allocation0 [shape = 'u32[]', space=smem, size = 0x4, offset = 0x4, fixed_abs, tag = 'smem constant byte address 0x4 - core index']
  #allocation1 [shape = 'u32[144,128]{1,0:T(1,128)}', space=vmem, size = 0x12000, scoped, tag = 'internal scratch']
  %s0 = inlined_call_operand.vmem [shape: bf16[2,8,32], index: 0, kind: input, shape index: {}]
  %s1 = inlined_call_operand.vmem [shape: bf16[2,32,8], index: 1, kind: input, shape index: {}]
  %s2 = inlined_call_operand.vmem [shape: bf16[2,8,32], index: 2, kind: input, shape index: {}]
  %s3 = inlined_call_operand.vmem [shape: f32[2,1,8], index: 3, kind: input, shape index: {}]
  %s4 = inlined_call_operand.vmem [shape: bf16[2,8,32], index: 4, kind: output, shape index: {}]
  %s5 = sld [smem:[#allocation0]]
  $region49: #{seq2seq_forward.40} parent=0
    _
  %s7 = ssub.s32 1, %s5
  %s8 = scalar_select 0, %s7, %s5
  loop: start=0, step=1, limit=4
  $region2: #{seq2seq_forward.40} parent=0 // loop_pre_header
    _
  $region3: #{seq2seq_forward.40} parent=0 // loop_header
    %s10 = sphi 0, %s14
    %p11 = scmp.ge.s32.totalorder %s10, 4
    %s17 = sphi 0, %s29
    %s18 = sphi 0, %s25
    %s19 = sphi 0, %s17
    %s20 = sphi 0, %s18
    %s21 = sphi 0, %s19
    %s22 = sphi 0, %s20
    %s34 = sphi 0, %s36
    %s37 = sphi 0, %s34
    %s38 = sphi 0, %s37
    %s54 = sphi 0, %s38
    %s62 = sphi 0, %s64
    %s65 = sphi 0, %s62
    %s66 = sphi 0, %s65
    %s82 = sphi 0, %s66
    %s90 = sphi 0, %s92
    %s93 = sphi 0, %s90
    %s94 = sphi 0, %s93
    %s110 = sphi 0, %s94
    %s116 = sphi 0, %s118
    %s119 = sphi 0, %s116
    %s120 = sphi 0, %s119
    %s136 = sphi 0, %s120
    %s144 = sphi 0, %s146
    %s147 = sphi 0, %s144
    %s148 = sphi 0, %s147
    %s164 = sphi 0, %s148
  $region4: #{seq2seq_forward.40} parent=0 // loop_header_branch
    %13 = sbr.rel (%p11) target = $region8
  $region5: #{seq2seq_forward.40} parent=0 // loop_body
    %s15 = ssub.s32 %s10, 1
    %s16 = ssub.s32 %s10, 2
    %s23 = sadd.s32 1, %s18
    %p24 = scmp.ge.s32.totalorder %s23, 1
    %s25 = scalar_select %p24, 0, %s23
    %s26 = sadd.s32 1, %s17
    %s27 = scalar_select %p24, %s26, %s17
    %p28 = scmp.ge.s32.totalorder %s27, 2
    %s29 = scalar_select %p28, 0, %s27
    %s30 = ssub.s32 %s17, %s29
    %s31 = ssub.s32 %s18, %s25
    %s32 = sor.u32 %s30, %s31
    %p33 = scmp.eq.s32.totalorder %s32, 0
    %s35 = sadd.s32 %s34, 1
    %s36 = scalar_select %p33, %s34, %s35
    %p39 = pneg %p33
    %p40 = scmp.eq.s32.totalorder %s10, 1
    %p41 = por %p39, %p40
    %p42 = scmp.ne.s32.totalorder %s34, %s37
    %p43 = scmp.eq.s32.totalorder %s10, 0
    %p44 = por %p42, %p43
    %p45 = scmp.ne.s32.totalorder %s34, %s37
    %p46 = scmp.eq.s32.totalorder %s15, 1
    %p47 = por %p45, %p46
    %p48 = scmp.ne.s32.totalorder %s37, %s38
    %p49 = scmp.eq.s32.totalorder %s15, 0
    %p50 = por %p48, %p49
    %p51 = scmp.ne.s32.totalorder %s37, %s38
    %p52 = scmp.eq.s32.totalorder %s16, 1
    %p53 = por %p51, %p52
    %p55 = scmp.ne.s32.totalorder %s38, %s54
    %p56 = scmp.eq.s32.totalorder %s16, 0
    %p57 = por %p55, %p56
    %s58 = ssub.s32 %s17, %s29
    %s59 = ssub.s32 %s18, %s25
    %s60 = sor.u32 %s58, %s59
    %p61 = scmp.eq.s32.totalorder %s60, 0
    %s63 = sadd.s32 %s62, 1
    %s64 = scalar_select %p61, %s62, %s63
    %p67 = pneg %p61
    %p68 = scmp.eq.s32.totalorder %s10, 1
    %p69 = por %p67, %p68
    %p70 = scmp.ne.s32.totalorder %s62, %s65
    %p71 = scmp.eq.s32.totalorder %s10, 0
    %p72 = por %p70, %p71
    %p73 = scmp.ne.s32.totalorder %s62, %s65
    %p74 = scmp.eq.s32.totalorder %s15, 1
    %p75 = por %p73, %p74
    %p76 = scmp.ne.s32.totalorder %s65, %s66
    %p77 = scmp.eq.s32.totalorder %s15, 0
    %p78 = por %p76, %p77
    %p79 = scmp.ne.s32.totalorder %s65, %s66
    %p80 = scmp.eq.s32.totalorder %s16, 1
    %p81 = por %p79, %p80
    %p83 = scmp.ne.s32.totalorder %s66, %s82
    %p84 = scmp.eq.s32.totalorder %s16, 0
    %p85 = por %p83, %p84
    %s86 = ssub.s32 %s17, %s29
    %s87 = ssub.s32 %s18, %s25
    %s88 = sor.u32 %s86, %s87
    %p89 = scmp.eq.s32.totalorder %s88, 0
    %s91 = sadd.s32 %s90, 1
    %s92 = scalar_select %p89, %s90, %s91
    %p95 = pneg %p89
    %p96 = scmp.eq.s32.totalorder %s10, 1
    %p97 = por %p95, %p96
    %p98 = scmp.ne.s32.totalorder %s90, %s93
    %p99 = scmp.eq.s32.totalorder %s10, 0
    %p100 = por %p98, %p99
    %p101 = scmp.ne.s32.totalorder %s90, %s93
    %p102 = scmp.eq.s32.totalorder %s15, 1
    %p103 = por %p101, %p102
    %p104 = scmp.ne.s32.totalorder %s93, %s94
    %p105 = scmp.eq.s32.totalorder %s15, 0
    %p106 = por %p104, %p105
    %p107 = scmp.ne.s32.totalorder %s93, %s94
    %p108 = scmp.eq.s32.totalorder %s16, 1
    %p109 = por %p107, %p108
    %p111 = scmp.ne.s32.totalorder %s94, %s110
    %p112 = scmp.eq.s32.totalorder %s16, 0
    %p113 = por %p111, %p112
    %s114 = ssub.s32 %s17, %s29
    %p115 = scmp.eq.s32.totalorder %s114, 0
    %s117 = sadd.s32 %s116, 1
    %s118 = scalar_select %p115, %s116, %s117
    %p121 = pneg %p115
    %p122 = scmp.eq.s32.totalorder %s10, 1
    %p123 = por %p121, %p122
    %p124 = scmp.ne.s32.totalorder %s116, %s119
    %p125 = scmp.eq.s32.totalorder %s10, 0
    %p126 = por %p124, %p125
    %p127 = scmp.ne.s32.totalorder %s116, %s119
    %p128 = scmp.eq.s32.totalorder %s15, 1
    %p129 = por %p127, %p128
    %p130 = scmp.ne.s32.totalorder %s119, %s120
    %p131 = scmp.eq.s32.totalorder %s15, 0
    %p132 = por %p130, %p131
    %p133 = scmp.ne.s32.totalorder %s119, %s120
    %p134 = scmp.eq.s32.totalorder %s16, 1
    %p135 = por %p133, %p134
    %p137 = scmp.ne.s32.totalorder %s120, %s136
    %p138 = scmp.eq.s32.totalorder %s16, 0
    %p139 = por %p137, %p138
    %s140 = ssub.s32 %s17, %s29
    %s141 = ssub.s32 %s18, %s25
    %s142 = sor.u32 %s140, %s141
    %p143 = scmp.eq.s32.totalorder %s142, 0
    %s145 = sadd.s32 %s144, 1
    %s146 = scalar_select %p143, %s144, %s145
    %p149 = pneg %p143
    %p150 = scmp.eq.s32.totalorder %s10, 1
    %p151 = por %p149, %p150
    %p152 = scmp.ne.s32.totalorder %s144, %s147
    %p153 = scmp.eq.s32.totalorder %s10, 0
    %p154 = por %p152, %p153
    %p155 = scmp.ne.s32.totalorder %s144, %s147
    %p156 = scmp.eq.s32.totalorder %s15, 1
    %p157 = por %p155, %p156
    %p158 = scmp.ne.s32.totalorder %s147, %s148
    %p159 = scmp.eq.s32.totalorder %s15, 0
    %p160 = por %p158, %p159
    %p161 = scmp.ne.s32.totalorder %s147, %s148
    %p162 = scmp.eq.s32.totalorder %s16, 1
    %p163 = por %p161, %p162
    %p165 = scmp.ne.s32.totalorder %s148, %s164
    %p166 = scmp.eq.s32.totalorder %s16, 0
    %p167 = por %p165, %p166
    %p168 = scmp.le.s32.totalorder 1, %s10
    %p169 = scmp.lt.s32.totalorder %s10, 3
    %p170 = pnand %p168, %p169
    %p171 = pneg %p170
    // Predicated region
    $region9: #{seq2seq_forward.40} parent=5 // pred_check
      _
    $region10: #{seq2seq_forward.40} parent=5 // pred_check_branch
      %173 = sbr.rel (%p170) target = $region12
    $region11: #{seq2seq_forward.40} parent=5 // pred_region
      %s174 = ssub.s32 %s10, 1
    $region12: #{seq2seq_forward.40} parent=5 // pred_fallthru
      _
    %p175 = scmp.lt.s32.totalorder %s10, 2
    // Predicated region
    $region13: #{seq2seq_forward.40} parent=5 // pred_check
      %p176 = pneg %p175
    $region14: #{seq2seq_forward.40} parent=5 // pred_check_branch
      %178 = sbr.rel (%p176) target = $region16
    $region15: #{seq2seq_forward.40} parent=5 // pred_region
      // Predicated region
      $region17: #{seq2seq_forward.40} parent=15 // pred_check
        %p179 = pneg %p44
      $region18: #{seq2seq_forward.40} parent=15 // pred_check_branch
        %181 = sbr.rel (%p179) target = $region20
      $region19: #{seq2seq_forward.40} parent=15 // pred_region
        %p182 = scmp.lt.s32.totalorder %s17, 1
        %s183 = scalar_select %p182, %s17, 1
        %p184 = scmp.lt.s32.totalorder %s18, 0
        %s185 = scalar_select %p184, %s18, 0
        %s186 = sadd.s32 %s185, %s183
        %s187 = smul.addr %s186, 4
        %s188 = scalar_lea.vmem %s0, %s187
      $region20: #{seq2seq_forward.40} parent=15 // pred_fallthru
        _
      // Predicated region
      $region21: #{seq2seq_forward.40} parent=15 // pred_check
        %p189 = pneg %p72
      $region22: #{seq2seq_forward.40} parent=15 // pred_check_branch
        %191 = sbr.rel (%p189) target = $region24
      $region23: #{seq2seq_forward.40} parent=15 // pred_region
        %s192 = smul.u32 4, %s18
        %p193 = scmp.lt.s32.totalorder %s17, 1
        %s194 = scalar_select %p193, %s17, 1
        %p195 = scmp.lt.s32.totalorder %s192, 3
        %s196 = scalar_select %p195, %s192, 3
        %s197 = smul.addr %s194, 4
        %s198 = sadd.s32 %s196, %s197
        %s199 = smul.addr %s198, 4
        %s200 = scalar_lea.vmem %s1, %s199
        %s201 = smul.u32 4, %s18
      $region24: #{seq2seq_forward.40} parent=15 // pred_fallthru
        _
      // Predicated region
      $region25: #{seq2seq_forward.40} parent=15 // pred_check
        %p202 = pneg %p100
      $region26: #{seq2seq_forward.40} parent=15 // pred_check_branch
        %204 = sbr.rel (%p202) target = $region28
      $region27: #{seq2seq_forward.40} parent=15 // pred_region
        %p205 = scmp.lt.s32.totalorder %s17, 1
        %s206 = scalar_select %p205, %s17, 1
        %p207 = scmp.lt.s32.totalorder %s18, 0
        %s208 = scalar_select %p207, %s18, 0
        %s209 = sadd.s32 %s208, %s206
        %s210 = smul.addr %s209, 4
        %s211 = scalar_lea.vmem %s2, %s210
      $region28: #{seq2seq_forward.40} parent=15 // pred_fallthru
        _
      // Predicated region
      $region29: #{seq2seq_forward.40} parent=15 // pred_check
        %p212 = pneg %p126
      $region30: #{seq2seq_forward.40} parent=15 // pred_check_branch
        %214 = sbr.rel (%p212) target = $region32
      $region31: #{seq2seq_forward.40} parent=15 // pred_region
        %p215 = scmp.lt.s32.totalorder %s17, 1
        %s216 = scalar_select %p215, %s17, 1
        %s217 = scalar_lea.vmem %s3, %s216
      $region32: #{seq2seq_forward.40} parent=15 // pred_fallthru
        _
    $region16: #{seq2seq_forward.40} parent=5 // pred_fallthru
      _
    %p218 = scmp.le.s32.totalorder 1, %s10
    %p219 = scmp.lt.s32.totalorder %s10, 3
    %p220 = pnand %p218, %p219
    %p221 = pneg %p220
    // Predicated region
    $region33: #{seq2seq_forward.40} parent=5 // pred_check
      _
    $region34: #{seq2seq_forward.40} parent=5 // pred_check_branch
      %223 = sbr.rel (%p220) target = $region36
    $region35: #{seq2seq_forward.40} parent=5 // pred_region
      %s224 = ssub.s32 %s10, 1
      %p225 = scmp.lt.s32.totalorder %s19, 1
      %s226 = scalar_select %p225, %s19, 1
      %p227 = scmp.lt.s32.totalorder %s20, 0
      %s228 = scalar_select %p227, %s20, 0
      %s229 = sadd.s32 %s228, %s226
      %s230 = smul.addr %s229, 4
      %s231 = scalar_lea.vmem %s0, %s230
      %p232 = pneg %p50
      %p233 = pneg %p47
      %s234 = smul.u32 4, %s20
      %p235 = scmp.lt.s32.totalorder %s19, 1
      %s236 = scalar_select %p235, %s19, 1
      %p237 = scmp.lt.s32.totalorder %s234, 3
      %s238 = scalar_select %p237, %s234, 3
      %s239 = smul.addr %s236, 4
      %s240 = sadd.s32 %s238, %s239
      %s241 = smul.addr %s240, 4
      %s242 = scalar_lea.vmem %s1, %s241
      %p243 = pneg %p78
      %p244 = pneg %p75
      %p245 = scmp.lt.s32.totalorder %s19, 1
      %s246 = scalar_select %p245, %s19, 1
      %p247 = scmp.lt.s32.totalorder %s20, 0
      %s248 = scalar_select %p247, %s20, 0
      %s249 = sadd.s32 %s248, %s246
      %s250 = smul.addr %s249, 4
      %s251 = scalar_lea.vmem %s2, %s250
      %p252 = pneg %p106
      %p253 = pneg %p103
      %p254 = scmp.lt.s32.totalorder %s19, 1
      %s255 = scalar_select %p254, %s19, 1
      %s256 = scalar_lea.vmem %s3, %s255
      %p257 = pneg %p132
      %p258 = pneg %p129
      %p259 = pneg %p160
      %p260 = pneg %p157
      %p261 = scmp.lt.s32.totalorder %s19, 1
      %s262 = scalar_select %p261, %s19, 1
      %p263 = scmp.lt.s32.totalorder %s20, 0
      %s264 = scalar_select %p263, %s20, 0
      %s265 = sadd.s32 %s264, %s262
      %s266 = smul.addr %s265, 4
      %s267 = scalar_lea.vmem %s4, %s266
      %p268 = scmp.lt.s32.totalorder %s19, 1
      %s269 = scalar_select %p268, %s19, 1
      %p270 = scmp.lt.s32.totalorder %s20, 0
      %s271 = scalar_select %p270, %s20, 0
      %s272 = sadd.s32 %s271, %s269
      %s273 = smul.addr %s272, 4
      %s274 = scalar_lea.vmem %s0, %s273
      %s275 = smul.u32 4, %s20
      %p276 = scmp.lt.s32.totalorder %s19, 1
      %s277 = scalar_select %p276, %s19, 1
      %p278 = scmp.lt.s32.totalorder %s275, 3
      %s279 = scalar_select %p278, %s275, 3
      %s280 = smul.addr %s277, 4
      %s281 = sadd.s32 %s279, %s280
      %s282 = smul.addr %s281, 4
      %s283 = scalar_lea.vmem %s1, %s282
      %s284 = smul.u32 4, %s20
      %p285 = scmp.lt.s32.totalorder %s19, 1
      %s286 = scalar_select %p285, %s19, 1
      %p287 = scmp.lt.s32.totalorder %s20, 0
      %s288 = scalar_select %p287, %s20, 0
      %s289 = sadd.s32 %s288, %s286
      %s290 = smul.addr %s289, 4
      %s291 = scalar_lea.vmem %s2, %s290
      %p292 = scmp.lt.s32.totalorder %s19, 1
      %s293 = scalar_select %p292, %s19, 1
      %s294 = scalar_lea.vmem %s3, %s293
      %p295 = scmp.lt.s32.totalorder %s19, 1
      %s296 = scalar_select %p295, %s19, 1
      %p297 = scmp.lt.s32.totalorder %s20, 0
      %s298 = scalar_select %p297, %s20, 0
      %s299 = sadd.s32 %s298, %s296
      %s300 = smul.addr %s299, 4
      %s301 = scalar_lea.vmem %s4, %s300
      %v303 = vld [vmem:[%s294] sm:$0x1]
      %vm304 = vcmp.gt.f32.partialorder %v303, 0.5
      %v305 = vsel %vm304, 1, 0
      %v306 = vlaneseq
      %v307 = vshrl.u32 %v306, 7
      %v308 = vsub.s32 0, %v307
      %v309 = vrot.slane %v305, %v308
      %vm310 = vcmp.eq.s32.totalorder %v309, 1
      %v311 = vlaneseq
      %v312 = vshrl.u32 %v311, 7
      %v313 = vlaneseq
      %v314 = vand.u32 %v313, 127
      %vm315 = vcmp.le.s32.totalorder %v314, %v312
      %vm316 = vmand %vm310, %vm315
      %v317 = vld [vmem:[%s274] sm:$0xf]
      %v318 = vld [vmem:[%s283] sm:$0xf]
      %v319 = vld [vmem:[%s283 + $0x4] sm:$0xf]
      %v320 = vld [vmem:[%s283 + $0x8] sm:$0xf]
      %v321 = vld [vmem:[%s283 + $0xc] sm:$0xf]
      %v322 = vld [vmem:[%s291] sm:$0xf]
      %vm323 = vcmask 64512
      %v325 = vsel %vm323, %v317, 0
      %vm327 = vcmask 1043456
      %v329 = vsel %vm327, %v318, 0
      %331 = vmatprep.subr.bf16.mxu0 0
      %332 = vmatpush1.bf16.msra.mxu0 %v329
      %333 = vmatprep.subr.bf16.mxu0 0
      %334 = vmatpush1.bf16.msra.mxu0 0
      %335 = vmatprep.subr.bf16.mxu0 0
      %336 = vmatpush1.bf16.msra.mxu0 0
      %337 = vmatprep.subr.bf16.mxu0 0
      %338 = vmatpush1.bf16.msra.mxu0 0
      %339 = vmatprep.subr.bf16.mxu0 0
      %340 = vmatpush1.bf16.msra.mxu0 0
      %341 = vmatprep.subr.bf16.mxu0 0
      %342 = vmatpush1.bf16.msra.mxu0 0
      %343 = vmatprep.subr.bf16.mxu0 0
      %344 = vmatpush1.bf16.msra.mxu0 0
      %345 = vmatprep.subr.bf16.mxu0 0
      %346 = vmatpush1.bf16.msra.mxu0 0
      %347 = vmatprep.subr.bf16.mxu0 0
      %348 = vmatpush1.bf16.msra.mxu0 0
      %349 = vmatprep.subr.bf16.mxu0 0
      %350 = vmatpush1.bf16.msra.mxu0 0
      %351 = vmatprep.subr.bf16.mxu0 0
      %352 = vmatpush1.bf16.msra.mxu0 0
      %353 = vmatprep.subr.bf16.mxu0 0
      %354 = vmatpush1.bf16.msra.mxu0 0
      %355 = vmatprep.subr.bf16.mxu0 0
      %356 = vmatpush1.bf16.msra.mxu0 0
      %357 = vmatprep.subr.bf16.mxu0 0
      %358 = vmatpush1.bf16.msra.mxu0 0
      %359 = vmatprep.subr.bf16.mxu0 0
      %360 = vmatpush1.bf16.msra.mxu0 0
      %361 = vmatprep.subr.bf16.mxu0 0
      %362 = vmatpush1.bf16.msra.mxu0 0
      %363 = vmatprep.mubr.bf16.mxu0 0
      %364 = vmatmul.mubr.bf16.gmra.mrb[0].mxu0 %v325
      %v365 = vpop.f32.mrb[0].mxu0
      %v366 = vadd.f32 0.0, %v365
      %v367 = vpop.f32.mrb[0].mxu0
      %v368 = vpop.f32.mrb[0].mxu0
      %v369 = vpop.f32.mrb[0].mxu0
      %370 = vdwg.mxu0
      %v371 = vmul.f32 %v366, 0.35355338
      %v372 = vsel %vm316, %v371, -1e+10
      %v373 = vsel %vm323, %v372, -inf
      %374 = vmax.xlane.f32.xlu0 %v373
      %v375 = vpop.xlane.xlu0 %374
      %v376 = vsub.f32 %v372, %v375
      %v377 = vmul.f32 %v376, 1.442695
      %v378 = vpow.pop %v377
      %v379 = vsel %vm323, %v378, 0.0
      %380 = vadd.xlane.f32.xlu0 %v379
      %v381 = vpop.xlane.xlu0 %380
      %v382 = vrcp.pop %v381
      %v383 = vpack.c.bf16 %v378, %v378
      %v385 = vsel %vm323, %v383, 0
      %v388 = vsel %vm327, %v322, 0
      %390 = vmatprep.subr.bf16.mxu0 0
      %391 = vmatpush1.bf16.msra.mxu0 %v388
      %392 = vmatprep.subr.bf16.mxu0 0
      %393 = vmatpush1.bf16.msra.mxu0 0
      %394 = vmatprep.subr.bf16.mxu0 0
      %395 = vmatpush1.bf16.msra.mxu0 0
      %396 = vmatprep.subr.bf16.mxu0 0
      %397 = vmatpush1.bf16.msra.mxu0 0
      %398 = vmatprep.subr.bf16.mxu0 0
      %399 = vmatpush1.bf16.msra.mxu0 0
      %400 = vmatprep.subr.bf16.mxu0 0
      %401 = vmatpush1.bf16.msra.mxu0 0
      %402 = vmatprep.subr.bf16.mxu0 0
      %403 = vmatpush1.bf16.msra.mxu0 0
      %404 = vmatprep.subr.bf16.mxu0 0
      %405 = vmatpush1.bf16.msra.mxu0 0
      %406 = vmatprep.subr.bf16.mxu0 0
      %407 = vmatpush1.bf16.msra.mxu0 0
      %408 = vmatprep.subr.bf16.mxu0 0
      %409 = vmatpush1.bf16.msra.mxu0 0
      %410 = vmatprep.subr.bf16.mxu0 0
      %411 = vmatpush1.bf16.msra.mxu0 0
      %412 = vmatprep.subr.bf16.mxu0 0
      %413 = vmatpush1.bf16.msra.mxu0 0
      %414 = vmatprep.subr.bf16.mxu0 0
      %415 = vmatpush1.bf16.msra.mxu0 0
      %416 = vmatprep.subr.bf16.mxu0 0
      %417 = vmatpush1.bf16.msra.mxu0 0
      %418 = vmatprep.subr.bf16.mxu0 0
      %419 = vmatpush1.bf16.msra.mxu0 0
      %420 = vmatprep.subr.bf16.mxu0 0
      %421 = vmatpush1.bf16.msra.mxu0 0
      %422 = vmatprep.mubr.bf16.mxu0 0
      %423 = vmatmul.mubr.bf16.gmra.mrb[0].mxu0 %v385
      %v424 = vpop.f32.mrb[0].mxu0
      %v425 = vadd.f32 0.0, %v424
      %v426 = vpop.f32.mrb[0].mxu0
      %v427 = vpop.f32.mrb[0].mxu0
      %v428 = vpop.f32.mrb[0].mxu0
      %429 = vdwg.mxu0
      %v430 = vmul.f32 %v425, %v382
      %v431 = vpack.c.bf16 %v430, %v430
      %vm432 = vcmask 60416
      %433 = vst.msk [vmem:[%s301] sm:$0xf] %vm432, %v431
      %v435 = vunpack.c.l.b16 %v317
      %v436 = vpack.c.b16 %v435, %v435
      %437 = vrot.lane.b32.xlu0 %v436, 120
      %v438 = vpop.permute.xlu0 %437
      %v440 = vsel %vm323, %v438, 0
      %v443 = vsel %vm327, %v319, 0
      %445 = vmatprep.subr.bf16.mxu0 0
      %446 = vmatpush1.bf16.msra.mxu0 %v443
      %447 = vmatprep.subr.bf16.mxu0 0
      %448 = vmatpush1.bf16.msra.mxu0 0
      %449 = vmatprep.subr.bf16.mxu0 0
      %450 = vmatpush1.bf16.msra.mxu0 0
      %451 = vmatprep.subr.bf16.mxu0 0
      %452 = vmatpush1.bf16.msra.mxu0 0
      %453 = vmatprep.subr.bf16.mxu0 0
      %454 = vmatpush1.bf16.msra.mxu0 0
      %455 = vmatprep.subr.bf16.mxu0 0
      %456 = vmatpush1.bf16.msra.mxu0 0
      %457 = vmatprep.subr.bf16.mxu0 0
      %458 = vmatpush1.bf16.msra.mxu0 0
      %459 = vmatprep.subr.bf16.mxu0 0
      %460 = vmatpush1.bf16.msra.mxu0 0
      %461 = vmatprep.subr.bf16.mxu0 0
      %462 = vmatpush1.bf16.msra.mxu0 0
      %463 = vmatprep.subr.bf16.mxu0 0
      %464 = vmatpush1.bf16.msra.mxu0 0
      %465 = vmatprep.subr.bf16.mxu0 0
      %466 = vmatpush1.bf16.msra.mxu0 0
      %467 = vmatprep.subr.bf16.mxu0 0
      %468 = vmatpush1.bf16.msra.mxu0 0
      %469 = vmatprep.subr.bf16.mxu0 0
      %470 = vmatpush1.bf16.msra.mxu0 0
      %471 = vmatprep.subr.bf16.mxu0 0
      %472 = vmatpush1.bf16.msra.mxu0 0
      %473 = vmatprep.subr.bf16.mxu0 0
      %474 = vmatpush1.bf16.msra.mxu0 0
      %475 = vmatprep.subr.bf16.mxu0 0
      %476 = vmatpush1.bf16.msra.mxu0 0
      %477 = vmatprep.mubr.bf16.mxu0 0
      %478 = vmatmul.mubr.bf16.gmra.mrb[0].mxu0 %v440
      %v479 = vpop.f32.mrb[0].mxu0
      %v480 = vadd.f32 0.0, %v479
      %v481 = vpop.f32.mrb[0].mxu0
      %v482 = vpop.f32.mrb[0].mxu0
      %v483 = vpop.f32.mrb[0].mxu0
      %484 = vdwg.mxu0
      %v485 = vmul.f32 %v480, 0.35355338
      %v486 = vsel %vm316, %v485, -1e+10
      %v487 = vsel %vm323, %v486, -inf
      %488 = vmax.xlane.f32.xlu0 %v487
      %v489 = vpop.xlane.xlu0 %488
      %v490 = vsub.f32 %v486, %v489
      %v491 = vmul.f32 %v490, 1.442695
      %v492 = vpow.pop %v491
      %v493 = vsel %vm323, %v492, 0.0
      %494 = vadd.xlane.f32.xlu0 %v493
      %v495 = vpop.xlane.xlu0 %494
      %v496 = vrcp.pop %v495
      %v497 = vpack.c.bf16 %v492, %v492
      %v499 = vunpack.c.l.b16 %v322
      %v500 = vpack.c.b16 %v499, %v499
      %501 = vrot.lane.b32.xlu0 %v500, 120
      %v502 = vpop.permute.xlu0 %501
      %v504 = vsel %vm323, %v497, 0
      %v507 = vsel %vm327, %v502, 0
      %509 = vmatprep.subr.bf16.mxu0 0
      %510 = vmatpush1.bf16.msra.mxu0 %v507
      %511 = vmatprep.subr.bf16.mxu0 0
      %512 = vmatpush1.bf16.msra.mxu0 0
      %513 = vmatprep.subr.bf16.mxu0 0
      %514 = vmatpush1.bf16.msra.mxu0 0
      %515 = vmatprep.subr.bf16.mxu0 0
      %516 = vmatpush1.bf16.msra.mxu0 0
      %517 = vmatprep.subr.bf16.mxu0 0
      %518 = vmatpush1.bf16.msra.mxu0 0
      %519 = vmatprep.subr.bf16.mxu0 0
      %520 = vmatpush1.bf16.msra.mxu0 0
      %521 = vmatprep.subr.bf16.mxu0 0
      %522 = vmatpush1.bf16.msra.mxu0 0
      %523 = vmatprep.subr.bf16.mxu0 0
      %524 = vmatpush1.bf16.msra.mxu0 0
      %525 = vmatprep.subr.bf16.mxu0 0
      %526 = vmatpush1.bf16.msra.mxu0 0
      %527 = vmatprep.subr.bf16.mxu0 0
      %528 = vmatpush1.bf16.msra.mxu0 0
      %529 = vmatprep.subr.bf16.mxu0 0
      %530 = vmatpush1.bf16.msra.mxu0 0
      %531 = vmatprep.subr.bf16.mxu0 0
      %532 = vmatpush1.bf16.msra.mxu0 0
      %533 = vmatprep.subr.bf16.mxu0 0
      %534 = vmatpush1.bf16.msra.mxu0 0
      %535 = vmatprep.subr.bf16.mxu0 0
      %536 = vmatpush1.bf16.msra.mxu0 0
      %537 = vmatprep.subr.bf16.mxu0 0
      %538 = vmatpush1.bf16.msra.mxu0 0
      %539 = vmatprep.subr.bf16.mxu0 0
      %540 = vmatpush1.bf16.msra.mxu0 0
      %541 = vmatprep.mubr.bf16.mxu0 0
      %542 = vmatmul.mubr.bf16.gmra.mrb[0].mxu0 %v504
      %v543 = vpop.f32.mrb[0].mxu0
      %v544 = vadd.f32 0.0, %v543
      %v545 = vpop.f32.mrb[0].mxu0
      %v546 = vpop.f32.mrb[0].mxu0
      %v547 = vpop.f32.mrb[0].mxu0
      %548 = vdwg.mxu0
      %v549 = vmul.f32 %v544, %v496
      %v550 = vpack.c.bf16 %v549, %v549
      %v552 = vunpack.c.l.b16 %v550
      %v553 = vpack.c.b16 %v552, %v552
      %554 = vrot.lane.b32.xlu0 %v553, 8
      %v555 = vpop.permute.xlu0 %554
      %vm557 = vcmask 126016
      %558 = vst.msk [vmem:[%s301] sm:$0xf] %vm557, %v555
      %559 = vrot.lane.b32.xlu0 %v436, 112
      %v560 = vpop.permute.xlu0 %559
      %v562 = vsel %vm323, %v560, 0
      %v565 = vsel %vm327, %v320, 0
      %567 = vmatprep.subr.bf16.mxu0 0
      %568 = vmatpush1.bf16.msra.mxu0 %v565
      %569 = vmatprep.subr.bf16.mxu0 0
      %570 = vmatpush1.bf16.msra.mxu0 0
      %571 = vmatprep.subr.bf16.mxu0 0
      %572 = vmatpush1.bf16.msra.mxu0 0
      %573 = vmatprep.subr.bf16.mxu0 0
      %574 = vmatpush1.bf16.msra.mxu0 0
      %575 = vmatprep.subr.bf16.mxu0 0
      %576 = vmatpush1.bf16.msra.mxu0 0
      %577 = vmatprep.subr.bf16.mxu0 0
      %578 = vmatpush1.bf16.msra.mxu0 0
      %579 = vmatprep.subr.bf16.mxu0 0
      %580 = vmatpush1.bf16.msra.mxu0 0
      %581 = vmatprep.subr.bf16.mxu0 0
      %582 = vmatpush1.bf16.msra.mxu0 0
      %583 = vmatprep.subr.bf16.mxu0 0
      %584 = vmatpush1.bf16.msra.mxu0 0
      %585 = vmatprep.subr.bf16.mxu0 0
      %586 = vmatpush1.bf16.msra.mxu0 0
      %587 = vmatprep.subr.bf16.mxu0 0
      %588 = vmatpush1.bf16.msra.mxu0 0
      %589 = vmatprep.subr.bf16.mxu0 0
      %590 = vmatpush1.bf16.msra.mxu0 0
      %591 = vmatprep.subr.bf16.mxu0 0
      %592 = vmatpush1.bf16.msra.mxu0 0
      %593 = vmatprep.subr.bf16.mxu0 0
      %594 = vmatpush1.bf16.msra.mxu0 0
      %595 = vmatprep.subr.bf16.mxu0 0
      %596 = vmatpush1.bf16.msra.mxu0 0
      %597 = vmatprep.subr.bf16.mxu0 0
      %598 = vmatpush1.bf16.msra.mxu0 0
      %599 = vmatprep.mubr.bf16.mxu0 0
      %600 = vmatmul.mubr.bf16.gmra.mrb[0].mxu0 %v562
      %v601 = vpop.f32.mrb[0].mxu0
      %v602 = vadd.f32 0.0, %v601
      %v603 = vpop.f32.mrb[0].mxu0
      %v604 = vpop.f32.mrb[0].mxu0
      %v605 = vpop.f32.mrb[0].mxu0
      %606 = vdwg.mxu0
      %v607 = vmul.f32 %v602, 0.35355338
      %v608 = vsel %vm316, %v607, -1e+10
      %v609 = vsel %vm323, %v608, -inf
      %610 = vmax.xlane.f32.xlu0 %v609
      %v611 = vpop.xlane.xlu0 %610
      %v612 = vsub.f32 %v608, %v611
      %v613 = vmul.f32 %v612, 1.442695
      %v614 = vpow.pop %v613
      %v615 = vsel %vm323, %v614, 0.0
      %616 = vadd.xlane.f32.xlu0 %v615
      %v617 = vpop.xlane.xlu0 %616
      %v618 = vrcp.pop %v617
      %v619 = vpack.c.bf16 %v614, %v614
      %620 = vrot.lane.b32.xlu0 %v500, 112
      %v621 = vpop.permute.xlu0 %620
      %v623 = vsel %vm323, %v619, 0
      %v626 = vsel %vm327, %v621, 0
      %628 = vmatprep.subr.bf16.mxu0 0
      %629 = vmatpush1.bf16.msra.mxu0 %v626
      %630 = vmatprep.subr.bf16.mxu0 0
      %631 = vmatpush1.bf16.msra.mxu0 0
      %632 = vmatprep.subr.bf16.mxu0 0
      %633 = vmatpush1.bf16.msra.mxu0 0
      %634 = vmatprep.subr.bf16.mxu0 0
      %635 = vmatpush1.bf16.msra.mxu0 0
      %636 = vmatprep.subr.bf16.mxu0 0
      %637 = vmatpush1.bf16.msra.mxu0 0
      %638 = vmatprep.subr.bf16.mxu0 0
      %639 = vmatpush1.bf16.msra.mxu0 0
      %640 = vmatprep.subr.bf16.mxu0 0
      %641 = vmatpush1.bf16.msra.mxu0 0
      %642 = vmatprep.subr.bf16.mxu0 0
      %643 = vmatpush1.bf16.msra.mxu0 0
      %644 = vmatprep.subr.bf16.mxu0 0
      %645 = vmatpush1.bf16.msra.mxu0 0
      %646 = vmatprep.subr.bf16.mxu0 0
      %647 = vmatpush1.bf16.msra.mxu0 0
      %648 = vmatprep.subr.bf16.mxu0 0
      %649 = vmatpush1.bf16.msra.mxu0 0
      %650 = vmatprep.subr.bf16.mxu0 0
      %651 = vmatpush1.bf16.msra.mxu0 0
      %652 = vmatprep.subr.bf16.mxu0 0
      %653 = vmatpush1.bf16.msra.mxu0 0
      %654 = vmatprep.subr.bf16.mxu0 0
      %655 = vmatpush1.bf16.msra.mxu0 0
      %656 = vmatprep.subr.bf16.mxu0 0
      %657 = vmatpush1.bf16.msra.mxu0 0
      %658 = vmatprep.subr.bf16.mxu0 0
      %659 = vmatpush1.bf16.msra.mxu0 0
      %660 = vmatprep.mubr.bf16.mxu0 0
      %661 = vmatmul.mubr.bf16.gmra.mrb[0].mxu0 %v623
      %v662 = vpop.f32.mrb[0].mxu0
      %v663 = vadd.f32 0.0, %v662
      %v664 = vpop.f32.mrb[0].mxu0
      %v665 = vpop.f32.mrb[0].mxu0
      %v666 = vpop.f32.mrb[0].mxu0
      %667 = vdwg.mxu0
      %v668 = vmul.f32 %v663, %v618
      %v669 = vpack.c.bf16 %v668, %v668
      %v671 = vunpack.c.l.b16 %v669
      %v672 = vpack.c.b16 %v671, %v671
      %673 = vrot.lane.b32.xlu0 %v672, 16
      %v674 = vpop.permute.xlu0 %673
      %vm676 = vcmask 191616
      %677 = vst.msk [vmem:[%s301] sm:$0xf] %vm676, %v674
      %678 = vrot.lane.b32.xlu0 %v436, 104
      %v679 = vpop.permute.xlu0 %678
      %v681 = vsel %vm323, %v679, 0
      %v684 = vsel %vm327, %v321, 0
      %686 = vmatprep.subr.bf16.mxu0 0
      %687 = vmatpush1.bf16.msra.mxu0 %v684
      %688 = vmatprep.subr.bf16.mxu0 0
      %689 = vmatpush1.bf16.msra.mxu0 0
      %690 = vmatprep.subr.bf16.mxu0 0
      %691 = vmatpush1.bf16.msra.mxu0 0
      %692 = vmatprep.subr.bf16.mxu0 0
      %693 = vmatpush1.bf16.msra.mxu0 0
      %694 = vmatprep.subr.bf16.mxu0 0
      %695 = vmatpush1.bf16.msra.mxu0 0
      %696 = vmatprep.subr.bf16.mxu0 0
      %697 = vmatpush1.bf16.msra.mxu0 0
      %698 = vmatprep.subr.bf16.mxu0 0
      %699 = vmatpush1.bf16.msra.mxu0 0
      %700 = vmatprep.subr.bf16.mxu0 0
      %701 = vmatpush1.bf16.msra.mxu0 0
      %702 = vmatprep.subr.bf16.mxu0 0
      %703 = vmatpush1.bf16.msra.mxu0 0
      %704 = vmatprep.subr.bf16.mxu0 0
      %705 = vmatpush1.bf16.msra.mxu0 0
      %706 = vmatprep.subr.bf16.mxu0 0
      %707 = vmatpush1.bf16.msra.mxu0 0
      %708 = vmatprep.subr.bf16.mxu0 0
      %709 = vmatpush1.bf16.msra.mxu0 0
      %710 = vmatprep.subr.bf16.mxu0 0
      %711 = vmatpush1.bf16.msra.mxu0 0
      %712 = vmatprep.subr.bf16.mxu0 0
      %713 = vmatpush1.bf16.msra.mxu0 0
      %714 = vmatprep.subr.bf16.mxu0 0
      %715 = vmatpush1.bf16.msra.mxu0 0
      %716 = vmatprep.subr.bf16.mxu0 0
      %717 = vmatpush1.bf16.msra.mxu0 0
      %718 = vmatprep.mubr.bf16.mxu0 0
      %719 = vmatmul.mubr.bf16.gmra.mrb[0].mxu0 %v681
      %v720 = vpop.f32.mrb[0].mxu0
      %v721 = vadd.f32 0.0, %v720
      %v722 = vpop.f32.mrb[0].mxu0
      %v723 = vpop.f32.mrb[0].mxu0
      %v724 = vpop.f32.mrb[0].mxu0
      %725 = vdwg.mxu0
      %v726 = vmul.f32 %v721, 0.35355338
      %v727 = vsel %vm316, %v726, -1e+10
      %v728 = vsel %vm323, %v727, -inf
      %729 = vmax.xlane.f32.xlu0 %v728
      %v730 = vpop.xlane.xlu0 %729
      %v731 = vsub.f32 %v727, %v730
      %v732 = vmul.f32 %v731, 1.442695
      %v733 = vpow.pop %v732
      %v734 = vsel %vm323, %v733, 0.0
      %735 = vadd.xlane.f32.xlu0 %v734
      %v736 = vpop.xlane.xlu0 %735
      %v737 = vrcp.pop %v736
      %v738 = vpack.c.bf16 %v733, %v733
      %739 = vrot.lane.b32.xlu0 %v500, 104
      %v740 = vpop.permute.xlu0 %739
      %v742 = vsel %vm323, %v738, 0
      %v745 = vsel %vm327, %v740, 0
      %747 = vmatprep.subr.bf16.mxu0 0
      %748 = vmatpush1.bf16.msra.mxu0 %v745
      %749 = vmatprep.subr.bf16.mxu0 0
      %750 = vmatpush1.bf16.msra.mxu0 0
      %751 = vmatprep.subr.bf16.mxu0 0
      %752 = vmatpush1.bf16.msra.mxu0 0
      %753 = vmatprep.subr.bf16.mxu0 0
      %754 = vmatpush1.bf16.msra.mxu0 0
      %755 = vmatprep.subr.bf16.mxu0 0
      %756 = vmatpush1.bf16.msra.mxu0 0
      %757 = vmatprep.subr.bf16.mxu0 0
      %758 = vmatpush1.bf16.msra.mxu0 0
      %759 = vmatprep.subr.bf16.mxu0 0
      %760 = vmatpush1.bf16.msra.mxu0 0
      %761 = vmatprep.subr.bf16.mxu0 0
      %762 = vmatpush1.bf16.msra.mxu0 0
      %763 = vmatprep.subr.bf16.mxu0 0
      %764 = vmatpush1.bf16.msra.mxu0 0
      %765 = vmatprep.subr.bf16.mxu0 0
      %766 = vmatpush1.bf16.msra.mxu0 0
      %767 = vmatprep.subr.bf16.mxu0 0
      %768 = vmatpush1.bf16.msra.mxu0 0
      %769 = vmatprep.subr.bf16.mxu0 0
      %770 = vmatpush1.bf16.msra.mxu0 0
      %771 = vmatprep.subr.bf16.mxu0 0
      %772 = vmatpush1.bf16.msra.mxu0 0
      %773 = vmatprep.subr.bf16.mxu0 0
      %774 = vmatpush1.bf16.msra.mxu0 0
      %775 = vmatprep.subr.bf16.mxu0 0
      %776 = vmatpush1.bf16.msra.mxu0 0
      %777 = vmatprep.subr.bf16.mxu0 0
      %778 = vmatpush1.bf16.msra.mxu0 0
      %779 = vmatprep.mubr.bf16.mxu0 0
      %780 = vmatmul.mubr.bf16.gmra.mrb[0].mxu0 %v742
      %v781 = vpop.f32.mrb[0].mxu0
      %v782 = vadd.f32 0.0, %v781
      %v783 = vpop.f32.mrb[0].mxu0
      %v784 = vpop.f32.mrb[0].mxu0
      %v785 = vpop.f32.mrb[0].mxu0
      %786 = vdwg.mxu0
      %v787 = vmul.f32 %v782, %v737
      %v788 = vpack.c.bf16 %v787, %v787
      %v790 = vunpack.c.l.b16 %v788
      %v791 = vpack.c.b16 %v790, %v790
      %792 = vrot.lane.b32.xlu0 %v791, 24
      %v793 = vpop.permute.xlu0 %792
      %vm795 = vcmask 257216
      %796 = vst.msk [vmem:[%s301] sm:$0xf] %vm795, %v793
      %p797 = scmp.lt.s32.totalorder %s19, 1
      %s798 = scalar_select %p797, %s19, 1
      %p799 = scmp.lt.s32.totalorder %s20, 0
      %s800 = scalar_select %p799, %s20, 0
      %s801 = sadd.s32 %s800, %s798
      %s802 = smul.addr %s801, 4
      %s803 = scalar_lea.vmem %s4, %s802
      // Predicated region
      $region37: #{seq2seq_forward.40} parent=35 // pred_check
        %p804 = pneg %p157
      $region38: #{seq2seq_forward.40} parent=35 // pred_check_branch
        %806 = sbr.rel (%p804) target = $region40
      $region39: #{seq2seq_forward.40} parent=35 // pred_region
        _
      $region40: #{seq2seq_forward.40} parent=35 // pred_fallthru
        _
    $region36: #{seq2seq_forward.40} parent=5 // pred_fallthru
      _
    %p807 = scmp.le.s32.totalorder 2, %s10
    // Predicated region
    $region41: #{seq2seq_forward.40} parent=5 // pred_check
      %p808 = pneg %p807
    $region42: #{seq2seq_forward.40} parent=5 // pred_check_branch
      %810 = sbr.rel (%p808) target = $region44
    $region43: #{seq2seq_forward.40} parent=5 // pred_region
      %s811 = ssub.s32 %s10, 2
      // Predicated region
      $region45: #{seq2seq_forward.40} parent=43 // pred_check
        %p812 = pneg %p163
      $region46: #{seq2seq_forward.40} parent=43 // pred_check_branch
        %814 = sbr.rel (%p812) target = $region48
      $region47: #{seq2seq_forward.40} parent=43 // pred_region
        %p815 = scmp.lt.s32.totalorder %s21, 1
        %s816 = scalar_select %p815, %s21, 1
        %p817 = scmp.lt.s32.totalorder %s22, 0
        %s818 = scalar_select %p817, %s22, 0
        %s819 = sadd.s32 %s818, %s816
        %s820 = smul.addr %s819, 4
        %s821 = scalar_lea.vmem %s4, %s820
      $region48: #{seq2seq_forward.40} parent=43 // pred_fallthru
        _
    $region44: #{seq2seq_forward.40} parent=5 // pred_fallthru
      _
  $region6: #{seq2seq_forward.40} parent=0 // loop_footer
    %s14 = sadd.s32 1, %s10
  $region7: #{seq2seq_forward.40} parent=0 // loop_footer_branch
    %9 = sbr.rel target = $region3
  $region8: #{seq2seq_forward.40} parent=0 // loop_exit
    _

// kernel: seq2seq_forward.32
$region0: #{seq2seq_forward.32}
  #allocation0 [shape = 'u32[]', space=smem, size = 0x4, offset = 0x4, fixed_abs, tag = 'smem constant byte address 0x4 - core index']
  #allocation1 [shape = 'u32[144,128]{1,0:T(1,128)}', space=vmem, size = 0x12000, scoped, tag = 'internal scratch']
  #allocation2 [shape = 'f32[16,64]{1,0:T(8,128)}', space=vmem, size = 0x2000, scoped, tag = 'scratch operand']
  %s0 = inlined_call_operand.vmem [shape: bf16[16,32], index: 0, kind: input, shape index: {}]
  %s1 = inlined_call_operand.vmem [shape: bf16[32,64], index: 1, kind: input, shape index: {}]
  %s2 = inlined_call_operand.vmem [shape: f32[1,64], index: 2, kind: input, shape index: {}]
  %s3 = inlined_call_operand.vmem [shape: bf16[16,64], index: 3, kind: output, shape index: {}]
  %s4 = sld [smem:[#allocation0]]
  $region30: #{seq2seq_forward.32} parent=0
    _
  %s6 = ssub.s32 1, %s4
  %s7 = scalar_select 0, %s6, %s4
  // Predicated region
  $region2: #{seq2seq_forward.32} parent=0 // pred_check
    _
  $region3: #{seq2seq_forward.32} parent=0 // pred_check_branch
    %9 = sbr.rel (0) target = $region5
  $region4: #{seq2seq_forward.32} parent=0 // pred_region
    _
  $region5: #{seq2seq_forward.32} parent=0 // pred_fallthru
    _
  // Predicated region
  $region6: #{seq2seq_forward.32} parent=0 // pred_check
    _
  $region7: #{seq2seq_forward.32} parent=0 // pred_check_branch
    %11 = sbr.rel (0) target = $region9
  $region8: #{seq2seq_forward.32} parent=0 // pred_region
    _
  $region9: #{seq2seq_forward.32} parent=0 // pred_fallthru
    _
  // Predicated region
  $region10: #{seq2seq_forward.32} parent=0 // pred_check
    _
  $region11: #{seq2seq_forward.32} parent=0 // pred_check_branch
    %13 = sbr.rel (0) target = $region13
  $region12: #{seq2seq_forward.32} parent=0 // pred_region
    _
  $region13: #{seq2seq_forward.32} parent=0 // pred_fallthru
    _
  %p15 = scmp.eq.s32.totalorder 0, 0
  // Predicated region
  $region14: #{seq2seq_forward.32} parent=0 // pred_check
    %p16 = pneg %p15
  $region15: #{seq2seq_forward.32} parent=0 // pred_check_branch
    %18 = sbr.rel (%p16) target = $region17
  $region16: #{seq2seq_forward.32} parent=0 // pred_region
    %vm19 = vcmask 523264
    %20 = vst.msk [vmem:[#allocation2] sm:$0xff] %vm19, 0.0
    %21 = vst.msk [vmem:[#allocation2 + $0x8] sm:$0xff] %vm19, 0.0
  $region17: #{seq2seq_forward.32} parent=0 // pred_fallthru
    _
  %v22 = vld [vmem:[#allocation2] sm:$0xff]
  %v23 = vld [vmem:[#allocation2 + $0x8] sm:$0xff]
  %v24 = vld [vmem:[%s0] sm:$0xf]
  %v25 = vld [vmem:[%s0 + $0x4] sm:$0xf]
  %v26 = vld [vmem:[%s1] sm:$0xf]
  %v27 = vld [vmem:[%s1 + $0x4] sm:$0xf]
  %v28 = vld [vmem:[%s1 + $0x8] sm:$0xf]
  %v29 = vld [vmem:[%s1 + $0xc] sm:$0xf]
  %v32 = vunpack.c.l.b16 %v24
  %v33 = vunpack.c.l.b16 %v25
  %v34 = vpack.c.b16 %v33, %v32
  %v39 = vunpack.c.l.b16 %v26
  %v40 = vunpack.c.l.b16 %v27
  %v41 = vunpack.c.l.b16 %v28
  %v42 = vunpack.c.l.b16 %v29
  %v43 = vpack.c.b16 %v40, %v39
  %v44 = vpack.c.b16 %v42, %v41
  %vm47 = vcmask 261120
  %v49 = vsel %vm47, %v34, 0
  %51 = vmatprep.subr.bf16.mxu0 0
  %52 = vmatpush1.bf16.msra.mxu0 %v43
  %53 = vmatprep.subr.bf16.mxu0 0
  %54 = vmatpush1.bf16.msra.mxu0 %v44
  %55 = vmatprep.subr.bf16.mxu0 0
  %56 = vmatpush1.bf16.msra.mxu0 0
  %57 = vmatprep.subr.bf16.mxu0 0
  %58 = vmatpush1.bf16.msra.mxu0 0
  %59 = vmatprep.subr.bf16.mxu0 0
  %60 = vmatpush1.bf16.msra.mxu0 0
  %61 = vmatprep.subr.bf16.mxu0 0
  %62 = vmatpush1.bf16.msra.mxu0 0
  %63 = vmatprep.subr.bf16.mxu0 0
  %64 = vmatpush1.bf16.msra.mxu0 0
  %65 = vmatprep.subr.bf16.mxu0 0
  %66 = vmatpush1.bf16.msra.mxu0 0
  %67 = vmatprep.subr.bf16.mxu0 0
  %68 = vmatpush1.bf16.msra.mxu0 0
  %69 = vmatprep.subr.bf16.mxu0 0
  %70 = vmatpush1.bf16.msra.mxu0 0
  %71 = vmatprep.subr.bf16.mxu0 0
  %72 = vmatpush1.bf16.msra.mxu0 0
  %73 = vmatprep.subr.bf16.mxu0 0
  %74 = vmatpush1.bf16.msra.mxu0 0
  %75 = vmatprep.subr.bf16.mxu0 0
  %76 = vmatpush1.bf16.msra.mxu0 0
  %77 = vmatprep.subr.bf16.mxu0 0
  %78 = vmatpush1.bf16.msra.mxu0 0
  %79 = vmatprep.subr.bf16.mxu0 0
  %80 = vmatpush1.bf16.msra.mxu0 0
  %81 = vmatprep.subr.bf16.mxu0 0
  %82 = vmatpush1.bf16.msra.mxu0 0
  %83 = vmatprep.mubr.bf16.mxu0 0
  %84 = vmatmul.mubr.bf16.gmra.mrb[0].mxu0 %v49
  %v85 = vpop.f32.mrb[0].mxu0
  %v86 = vadd.f32 0.0, %v85
  %v87 = vpop.f32.mrb[0].mxu0
  %v88 = vpop.f32.mrb[0].mxu0
  %v89 = vadd.f32 0.0, %v88
  %v90 = vpop.f32.mrb[0].mxu0
  %91 = vdwg.mxu0
  %v92 = vadd.f32 %v22, %v86
  %v93 = vadd.f32 %v23, %v89
  %vm94 = vcmask 523264
  %95 = vst.msk [vmem:[#allocation2] sm:$0xff] %vm94, %v92
  %96 = vst.msk [vmem:[#allocation2 + $0x8] sm:$0xff] %vm94, %v93
  // Predicated region
  $region18: #{seq2seq_forward.32} parent=0 // pred_check
    %p97 = pneg %p15
  $region19: #{seq2seq_forward.32} parent=0 // pred_check_branch
    %99 = sbr.rel (%p97) target = $region21
  $region20: #{seq2seq_forward.32} parent=0 // pred_region
    %v100 = vld [vmem:[#allocation2] sm:$0xff]
    %v101 = vld [vmem:[#allocation2 + $0x8] sm:$0xff]
    %v102 = vld [vmem:[%s2] sm:$0x1]
    %v104 = vlaneseq
    %v105 = vshrl.u32 %v104, 7
    %v106 = vsub.s32 0, %v105
    %v107 = vrot.slane %v102, %v106
    %v109 = vadd.f32 %v100, %v107
    %v110 = vadd.f32 %v101, %v107
    %v111 = vmax.f32 %v109, 0.0
    %v112 = vmax.f32 %v110, 0.0
    %v113 = vpack.c.bf16 %v112, %v111
    %v115 = vunpack.c.l.b16 %v113
    %v116 = vunpack.c.h.b16 %v113
    %v117 = vpack.c.b16 %v115, %v115
    %v118 = vpack.c.b16 %v116, %v116
    %vm121 = vcmask 519168
    %122 = vst.msk [vmem:[%s3] sm:$0xf] %vm121, %v117
    %123 = vst.msk [vmem:[%s3 + $0x4] sm:$0xf] %vm121, %v118
  $region21: #{seq2seq_forward.32} parent=0 // pred_fallthru
    _
  // Predicated region
  $region22: #{seq2seq_forward.32} parent=0 // pred_check
    _
  $region23: #{seq2seq_forward.32} parent=0 // pred_check_branch
    %125 = sbr.rel (0) target = $region25
  $region24: #{seq2seq_forward.32} parent=0 // pred_region
    _
  $region25: #{seq2seq_forward.32} parent=0 // pred_fallthru
    _
  // Predicated region
  $region26: #{seq2seq_forward.32} parent=0 // pred_check
    _
  $region27: #{seq2seq_forward.32} parent=0 // pred_check_branch
    %127 = sbr.rel (0) target = $region29
  $region28: #{seq2seq_forward.32} parent=0 // pred_region
    _
  $region29: #{seq2seq_forward.32} parent=0 // pred_fallthru
    _

// kernel: seq2seq_forward.33
$region0: #{seq2seq_forward.33}
  #allocation0 [shape = 'u32[]', space=smem, size = 0x4, offset = 0x4, fixed_abs, tag = 'smem constant byte address 0x4 - core index']
  #allocation1 [shape = 'u32[144,128]{1,0:T(1,128)}', space=vmem, size = 0x12000, scoped, tag = 'internal scratch']
  #allocation2 [shape = 'f32[16,32]{1,0:T(8,128)}', space=vmem, size = 0x2000, scoped, tag = 'scratch operand']
  %s0 = inlined_call_operand.vmem [shape: bf16[16,64], index: 0, kind: input, shape index: {}]
  %s1 = inlined_call_operand.vmem [shape: bf16[64,32], index: 1, kind: input, shape index: {}]
  %s2 = inlined_call_operand.vmem [shape: f32[1,32], index: 2, kind: input, shape index: {}]
  %s3 = inlined_call_operand.vmem [shape: bf16[16,32], index: 3, kind: input, shape index: {}]
  %s4 = inlined_call_operand.vmem [shape: f32[1,32], index: 4, kind: input, shape index: {}]
  %s5 = inlined_call_operand.vmem [shape: f32[1,32], index: 5, kind: input, shape index: {}]
  %s6 = inlined_call_operand.vmem [shape: bf16[16,32], index: 6, kind: output, shape index: {}]
  %s7 = sld [smem:[#allocation0]]
  $region42: #{seq2seq_forward.33} parent=0
    _
  %s9 = ssub.s32 1, %s7
  %s10 = scalar_select 0, %s9, %s7
  // Predicated region
  $region2: #{seq2seq_forward.33} parent=0 // pred_check
    _
  $region3: #{seq2seq_forward.33} parent=0 // pred_check_branch
    %12 = sbr.rel (0) target = $region5
  $region4: #{seq2seq_forward.33} parent=0 // pred_region
    _
  $region5: #{seq2seq_forward.33} parent=0 // pred_fallthru
    _
  // Predicated region
  $region6: #{seq2seq_forward.33} parent=0 // pred_check
    _
  $region7: #{seq2seq_forward.33} parent=0 // pred_check_branch
    %14 = sbr.rel (0) target = $region9
  $region8: #{seq2seq_forward.33} parent=0 // pred_region
    _
  $region9: #{seq2seq_forward.33} parent=0 // pred_fallthru
    _
  // Predicated region
  $region10: #{seq2seq_forward.33} parent=0 // pred_check
    _
  $region11: #{seq2seq_forward.33} parent=0 // pred_check_branch
    %16 = sbr.rel (0) target = $region13
  $region12: #{seq2seq_forward.33} parent=0 // pred_region
    _
  $region13: #{seq2seq_forward.33} parent=0 // pred_fallthru
    _
  // Predicated region
  $region14: #{seq2seq_forward.33} parent=0 // pred_check
    _
  $region15: #{seq2seq_forward.33} parent=0 // pred_check_branch
    %18 = sbr.rel (0) target = $region17
  $region16: #{seq2seq_forward.33} parent=0 // pred_region
    _
  $region17: #{seq2seq_forward.33} parent=0 // pred_fallthru
    _
  // Predicated region
  $region18: #{seq2seq_forward.33} parent=0 // pred_check
    _
  $region19: #{seq2seq_forward.33} parent=0 // pred_check_branch
    %20 = sbr.rel (0) target = $region21
  $region20: #{seq2seq_forward.33} parent=0 // pred_region
    _
  $region21: #{seq2seq_forward.33} parent=0 // pred_fallthru
    _
  // Predicated region
  $region22: #{seq2seq_forward.33} parent=0 // pred_check
    _
  $region23: #{seq2seq_forward.33} parent=0 // pred_check_branch
    %22 = sbr.rel (0) target = $region25
  $region24: #{seq2seq_forward.33} parent=0 // pred_region
    _
  $region25: #{seq2seq_forward.33} parent=0 // pred_fallthru
    _
  %p24 = scmp.eq.s32.totalorder 0, 0
  // Predicated region
  $region26: #{seq2seq_forward.33} parent=0 // pred_check
    %p25 = pneg %p24
  $region27: #{seq2seq_forward.33} parent=0 // pred_check_branch
    %27 = sbr.rel (%p25) target = $region29
  $region28: #{seq2seq_forward.33} parent=0 // pred_region
    %vm28 = vcmask 261120
    %29 = vst.msk [vmem:[#allocation2] sm:$0xff] %vm28, 0.0
    %30 = vst.msk [vmem:[#allocation2 + $0x8] sm:$0xff] %vm28, 0.0
  $region29: #{seq2seq_forward.33} parent=0 // pred_fallthru
    _
  %v31 = vld [vmem:[#allocation2] sm:$0xff]
  %v32 = vld [vmem:[#allocation2 + $0x8] sm:$0xff]
  %v33 = vld [vmem:[%s0] sm:$0xf]
  %v34 = vld [vmem:[%s0 + $0x4] sm:$0xf]
  %v35 = vld [vmem:[%s1] sm:$0xf]
  %v36 = vld [vmem:[%s1 + $0x4] sm:$0xf]
  %v37 = vld [vmem:[%s1 + $0x8] sm:$0xf]
  %v38 = vld [vmem:[%s1 + $0xc] sm:$0xf]
  %v39 = vld [vmem:[%s1 + $0x10] sm:$0xf]
  %v40 = vld [vmem:[%s1 + $0x14] sm:$0xf]
  %v41 = vld [vmem:[%s1 + $0x18] sm:$0xf]
  %v42 = vld [vmem:[%s1 + $0x1c] sm:$0xf]
  %v45 = vunpack.c.l.b16 %v33
  %v46 = vunpack.c.l.b16 %v34
  %v47 = vpack.c.b16 %v46, %v45
  %v56 = vunpack.c.l.b16 %v35
  %v57 = vunpack.c.l.b16 %v36
  %v58 = vunpack.c.l.b16 %v37
  %v59 = vunpack.c.l.b16 %v38
  %v60 = vunpack.c.l.b16 %v39
  %v61 = vunpack.c.l.b16 %v40
  %v62 = vunpack.c.l.b16 %v41
  %v63 = vunpack.c.l.b16 %v42
  %v64 = vpack.c.b16 %v57, %v56
  %v65 = vpack.c.b16 %v59, %v58
  %v66 = vpack.c.b16 %v61, %v60
  %v67 = vpack.c.b16 %v63, %v62
  %vm72 = vcmask 523264
  %v74 = vsel %vm72, %v47, 0
  %76 = vmatprep.subr.bf16.mxu0 0
  %77 = vmatpush1.bf16.msra.mxu0 %v64
  %78 = vmatprep.subr.bf16.mxu0 0
  %79 = vmatpush1.bf16.msra.mxu0 %v65
  %80 = vmatprep.subr.bf16.mxu0 0
  %81 = vmatpush1.bf16.msra.mxu0 %v66
  %82 = vmatprep.subr.bf16.mxu0 0
  %83 = vmatpush1.bf16.msra.mxu0 %v67
  %84 = vmatprep.subr.bf16.mxu0 0
  %85 = vmatpush1.bf16.msra.mxu0 0
  %86 = vmatprep.subr.bf16.mxu0 0
  %87 = vmatpush1.bf16.msra.mxu0 0
  %88 = vmatprep.subr.bf16.mxu0 0
  %89 = vmatpush1.bf16.msra.mxu0 0
  %90 = vmatprep.subr.bf16.mxu0 0
  %91 = vmatpush1.bf16.msra.mxu0 0
  %92 = vmatprep.subr.bf16.mxu0 0
  %93 = vmatpush1.bf16.msra.mxu0 0
  %94 = vmatprep.subr.bf16.mxu0 0
  %95 = vmatpush1.bf16.msra.mxu0 0
  %96 = vmatprep.subr.bf16.mxu0 0
  %97 = vmatpush1.bf16.msra.mxu0 0
  %98 = vmatprep.subr.bf16.mxu0 0
  %99 = vmatpush1.bf16.msra.mxu0 0
  %100 = vmatprep.subr.bf16.mxu0 0
  %101 = vmatpush1.bf16.msra.mxu0 0
  %102 = vmatprep.subr.bf16.mxu0 0
  %103 = vmatpush1.bf16.msra.mxu0 0
  %104 = vmatprep.subr.bf16.mxu0 0
  %105 = vmatpush1.bf16.msra.mxu0 0
  %106 = vmatprep.subr.bf16.mxu0 0
  %107 = vmatpush1.bf16.msra.mxu0 0
  %108 = vmatprep.mubr.bf16.mxu0 0
  %109 = vmatmul.mubr.bf16.gmra.mrb[0].mxu0 %v74
  %v110 = vpop.f32.mrb[0].mxu0
  %v111 = vadd.f32 0.0, %v110
  %v112 = vpop.f32.mrb[0].mxu0
  %v113 = vpop.f32.mrb[0].mxu0
  %v114 = vadd.f32 0.0, %v113
  %v115 = vpop.f32.mrb[0].mxu0
  %116 = vdwg.mxu0
  %v117 = vadd.f32 %v31, %v111
  %v118 = vadd.f32 %v32, %v114
  %vm119 = vcmask 261120
  %120 = vst.msk [vmem:[#allocation2] sm:$0xff] %vm119, %v117
  %121 = vst.msk [vmem:[#allocation2 + $0x8] sm:$0xff] %vm119, %v118
  // Predicated region
  $region30: #{seq2seq_forward.33} parent=0 // pred_check
    %p122 = pneg %p24
  $region31: #{seq2seq_forward.33} parent=0 // pred_check_branch
    %124 = sbr.rel (%p122) target = $region33
  $region32: #{seq2seq_forward.33} parent=0 // pred_region
    %v125 = vld [vmem:[#allocation2] sm:$0xff]
    %v126 = vld [vmem:[#allocation2 + $0x8] sm:$0xff]
    %v127 = vld [vmem:[%s2] sm:$0x1]
    %v129 = vlaneseq
    %v130 = vshrl.u32 %v129, 7
    %v131 = vsub.s32 0, %v130
    %v132 = vrot.slane %v127, %v131
    %v134 = vadd.f32 %v125, %v132
    %v135 = vadd.f32 %v126, %v132
    %v136 = vld [vmem:[%s3] sm:$0xf]
    %v137 = vld [vmem:[%s3 + $0x4] sm:$0xf]
    %v138 = vunpack.c.l.bf16 %v136
    %v139 = vunpack.c.l.bf16 %v137
    %v140 = vadd.f32 %v134, %v138
    %v141 = vadd.f32 %v135, %v139
    %v142 = vsel %vm119, %v140, 0.0
    %143 = vadd.xlane.f32.xlu0 %v142
    %v144 = vpop.xlane.xlu0 %143
    %v145 = vsel %vm119, %v141, 0.0
    %146 = vadd.xlane.f32.xlu0 %v145
    %v147 = vpop.xlane.xlu0 %146
    %v148 = vrcp.pop 32.0
    %v149 = vmul.f32 %v144, %v148
    %v150 = vmul.f32 %v147, %v148
    %v151 = vsub.f32 %v140, %v149
    %v152 = vsub.f32 %v141, %v150
    %v153 = vmul.f32 %v151, %v151
    %v154 = vmul.f32 %v152, %v152
    %v155 = vsel %vm119, %v153, 0.0
    %156 = vadd.xlane.f32.xlu0 %v155
    %v157 = vpop.xlane.xlu0 %156
    %v158 = vsel %vm119, %v154, 0.0
    %159 = vadd.xlane.f32.xlu0 %v158
    %v160 = vpop.xlane.xlu0 %159
    %v161 = vmul.f32 %v157, %v148
    %v162 = vmul.f32 %v160, %v148
    %v163 = vadd.f32 %v161, 1e-05
    %v164 = vadd.f32 %v162, 1e-05
    %v165 = vrsqrt.pop %v163
    %v166 = vrsqrt.pop %v164
    %v167 = vmul.f32 %v151, %v165
    %v168 = vmul.f32 %v152, %v166
    %v169 = vld [vmem:[%s4] sm:$0x1]
    %v171 = vlaneseq
    %v172 = vshrl.u32 %v171, 7
    %v173 = vsub.s32 0, %v172
    %v174 = vrot.slane %v169, %v173
    %v176 = vmul.f32 %v167, %v174
    %v177 = vmul.f32 %v168, %v174
    %v178 = vld [vmem:[%s5] sm:$0x1]
    %v180 = vlaneseq
    %v181 = vshrl.u32 %v180, 7
    %v182 = vsub.s32 0, %v181
    %v183 = vrot.slane %v178, %v182
    %v185 = vadd.f32 %v176, %v183
    %v186 = vadd.f32 %v177, %v183
    %v187 = vpack.c.bf16 %v186, %v185
    %v189 = vunpack.c.l.b16 %v187
    %v190 = vunpack.c.h.b16 %v187
    %v191 = vpack.c.b16 %v189, %v189
    %v192 = vpack.c.b16 %v190, %v190
    %vm195 = vcmask 257024
    %196 = vst.msk [vmem:[%s6] sm:$0xf] %vm195, %v191
    %197 = vst.msk [vmem:[%s6 + $0x4] sm:$0xf] %vm195, %v192
  $region33: #{seq2seq_forward.33} parent=0 // pred_fallthru
    _
  // Predicated region
  $region34: #{seq2seq_forward.33} parent=0 // pred_check
    _
  $region35: #{seq2seq_forward.33} parent=0 // pred_check_branch
    %199 = sbr.rel (0) target = $region37
  $region36: #{seq2seq_forward.33} parent=0 // pred_region
    _
  $region37: #{seq2seq_forward.33} parent=0 // pred_fallthru
    _
  // Predicated region
  $region38: #{seq2seq_forward.33} parent=0 // pred_check
    _
  $region39: #{seq2seq_forward.33} parent=0 // pred_check_branch
    %201 = sbr.rel (0) target = $region41
  $region40: #{seq2seq_forward.33} parent=0 // pred_region
    _
  $region41: #{seq2seq_forward.33} parent=0 // pred_fallthru
    _

// kernel: seq2seq_forward.43
$region0: #{seq2seq_forward.43}
  #allocation0 [shape = 'u32[]', space=smem, size = 0x4, offset = 0x4, fixed_abs, tag = 'smem constant byte address 0x4 - core index']
  #allocation1 [shape = 'u32[144,128]{1,0:T(1,128)}', space=vmem, size = 0x12000, scoped, tag = 'internal scratch']
  #allocation2 [shape = 'f32[16,64]{1,0:T(8,128)}', space=vmem, size = 0x2000, scoped, tag = 'scratch operand']
  %s0 = inlined_call_operand.vmem [shape: bf16[16,32], index: 0, kind: input, shape index: {}]
  %s1 = inlined_call_operand.vmem [shape: bf16[32,64], index: 1, kind: input, shape index: {}]
  %s2 = inlined_call_operand.vmem [shape: f32[1,64], index: 2, kind: input, shape index: {}]
  %s3 = inlined_call_operand.vmem [shape: bf16[16,64], index: 3, kind: output, shape index: {}]
  %s4 = sld [smem:[#allocation0]]
  $region30: #{seq2seq_forward.43} parent=0
    _
  %s6 = ssub.s32 1, %s4
  %s7 = scalar_select 0, %s6, %s4
  // Predicated region
  $region2: #{seq2seq_forward.43} parent=0 // pred_check
    _
  $region3: #{seq2seq_forward.43} parent=0 // pred_check_branch
    %9 = sbr.rel (0) target = $region5
  $region4: #{seq2seq_forward.43} parent=0 // pred_region
    _
  $region5: #{seq2seq_forward.43} parent=0 // pred_fallthru
    _
  // Predicated region
  $region6: #{seq2seq_forward.43} parent=0 // pred_check
    _
  $region7: #{seq2seq_forward.43} parent=0 // pred_check_branch
    %11 = sbr.rel (0) target = $region9
  $region8: #{seq2seq_forward.43} parent=0 // pred_region
    _
  $region9: #{seq2seq_forward.43} parent=0 // pred_fallthru
    _
  // Predicated region
  $region10: #{seq2seq_forward.43} parent=0 // pred_check
    _
  $region11: #{seq2seq_forward.43} parent=0 // pred_check_branch
    %13 = sbr.rel (0) target = $region13
  $region12: #{seq2seq_forward.43} parent=0 // pred_region
    _
  $region13: #{seq2seq_forward.43} parent=0 // pred_fallthru
    _
  %p15 = scmp.eq.s32.totalorder 0, 0
  // Predicated region
  $region14: #{seq2seq_forward.43} parent=0 // pred_check
    %p16 = pneg %p15
  $region15: #{seq2seq_forward.43} parent=0 // pred_check_branch
    %18 = sbr.rel (%p16) target = $region17
  $region16: #{seq2seq_forward.43} parent=0 // pred_region
    %vm19 = vcmask 523264
    %20 = vst.msk [vmem:[#allocation2] sm:$0xff] %vm19, 0.0
    %21 = vst.msk [vmem:[#allocation2 + $0x8] sm:$0xff] %vm19, 0.0
  $region17: #{seq2seq_forward.43} parent=0 // pred_fallthru
    _
  %v22 = vld [vmem:[#allocation2] sm:$0xff]
  %v23 = vld [vmem:[#allocation2 + $0x8] sm:$0xff]
  %v24 = vld [vmem:[%s0] sm:$0xf]
  %v25 = vld [vmem:[%s0 + $0x4] sm:$0xf]
  %v26 = vld [vmem:[%s1] sm:$0xf]
  %v27 = vld [vmem:[%s1 + $0x4] sm:$0xf]
  %v28 = vld [vmem:[%s1 + $0x8] sm:$0xf]
  %v29 = vld [vmem:[%s1 + $0xc] sm:$0xf]
  %v32 = vunpack.c.l.b16 %v24
  %v33 = vunpack.c.l.b16 %v25
  %v34 = vpack.c.b16 %v33, %v32
  %v39 = vunpack.c.l.b16 %v26
  %v40 = vunpack.c.l.b16 %v27
  %v41 = vunpack.c.l.b16 %v28
  %v42 = vunpack.c.l.b16 %v29
  %v43 = vpack.c.b16 %v40, %v39
  %v44 = vpack.c.b16 %v42, %v41
  %vm47 = vcmask 261120
  %v49 = vsel %vm47, %v34, 0
  %51 = vmatprep.subr.bf16.mxu0 0
  %52 = vmatpush1.bf16.msra.mxu0 %v43
  %53 = vmatprep.subr.bf16.mxu0 0
  %54 = vmatpush1.bf16.msra.mxu0 %v44
  %55 = vmatprep.subr.bf16.mxu0 0
  %56 = vmatpush1.bf16.msra.mxu0 0
  %57 = vmatprep.subr.bf16.mxu0 0
  %58 = vmatpush1.bf16.msra.mxu0 0
  %59 = vmatprep.subr.bf16.mxu0 0
  %60 = vmatpush1.bf16.msra.mxu0 0
  %61 = vmatprep.subr.bf16.mxu0 0
  %62 = vmatpush1.bf16.msra.mxu0 0
  %63 = vmatprep.subr.bf16.mxu0 0
  %64 = vmatpush1.bf16.msra.mxu0 0
  %65 = vmatprep.subr.bf16.mxu0 0
  %66 = vmatpush1.bf16.msra.mxu0 0
  %67 = vmatprep.subr.bf16.mxu0 0
  %68 = vmatpush1.bf16.msra.mxu0 0
  %69 = vmatprep.subr.bf16.mxu0 0
  %70 = vmatpush1.bf16.msra.mxu0 0
  %71 = vmatprep.subr.bf16.mxu0 0
  %72 = vmatpush1.bf16.msra.mxu0 0
  %73 = vmatprep.subr.bf16.mxu0 0
  %74 = vmatpush1.bf16.msra.mxu0 0
  %75 = vmatprep.subr.bf16.mxu0 0
  %76 = vmatpush1.bf16.msra.mxu0 0
  %77 = vmatprep.subr.bf16.mxu0 0
  %78 = vmatpush1.bf16.msra.mxu0 0
  %79 = vmatprep.subr.bf16.mxu0 0
  %80 = vmatpush1.bf16.msra.mxu0 0
  %81 = vmatprep.subr.bf16.mxu0 0
  %82 = vmatpush1.bf16.msra.mxu0 0
  %83 = vmatprep.mubr.bf16.mxu0 0
  %84 = vmatmul.mubr.bf16.gmra.mrb[0].mxu0 %v49
  %v85 = vpop.f32.mrb[0].mxu0
  %v86 = vadd.f32 0.0, %v85
  %v87 = vpop.f32.mrb[0].mxu0
  %v88 = vpop.f32.mrb[0].mxu0
  %v89 = vadd.f32 0.0, %v88
  %v90 = vpop.f32.mrb[0].mxu0
  %91 = vdwg.mxu0
  %v92 = vadd.f32 %v22, %v86
  %v93 = vadd.f32 %v23, %v89
  %vm94 = vcmask 523264
  %95 = vst.msk [vmem:[#allocation2] sm:$0xff] %vm94, %v92
  %96 = vst.msk [vmem:[#allocation2 + $0x8] sm:$0xff] %vm94, %v93
  // Predicated region
  $region18: #{seq2seq_forward.43} parent=0 // pred_check
    %p97 = pneg %p15
  $region19: #{seq2seq_forward.43} parent=0 // pred_check_branch
    %99 = sbr.rel (%p97) target = $region21
  $region20: #{seq2seq_forward.43} parent=0 // pred_region
    %v100 = vld [vmem:[#allocation2] sm:$0xff]
    %v101 = vld [vmem:[#allocation2 + $0x8] sm:$0xff]
    %v102 = vld [vmem:[%s2] sm:$0x1]
    %v104 = vlaneseq
    %v105 = vshrl.u32 %v104, 7
    %v106 = vsub.s32 0, %v105
    %v107 = vrot.slane %v102, %v106
    %v109 = vadd.f32 %v100, %v107
    %v110 = vadd.f32 %v101, %v107
    %v111 = vpack.c.bf16 %v110, %v109
    %v113 = vunpack.c.l.b16 %v111
    %v114 = vunpack.c.h.b16 %v111
    %v115 = vpack.c.b16 %v113, %v113
    %v116 = vpack.c.b16 %v114, %v114
    %vm119 = vcmask 519168
    %120 = vst.msk [vmem:[%s3] sm:$0xf] %vm119, %v115
    %121 = vst.msk [vmem:[%s3 + $0x4] sm:$0xf] %vm119, %v116
  $region21: #{seq2seq_forward.43} parent=0 // pred_fallthru
    _
  // Predicated region
  $region22: #{seq2seq_forward.43} parent=0 // pred_check
    _
  $region23: #{seq2seq_forward.43} parent=0 // pred_check_branch
    %123 = sbr.rel (0) target = $region25
  $region24: #{seq2seq_forward.43} parent=0 // pred_region
    _
  $region25: #{seq2seq_forward.43} parent=0 // pred_fallthru
    _
  // Predicated region
  $region26: #{seq2seq_forward.43} parent=0 // pred_check
    _
  $region27: #{seq2seq_forward.43} parent=0 // pred_check_branch
    %125 = sbr.rel (0) target = $region29
  $region28: #{seq2seq_forward.43} parent=0 // pred_region
    _
  $region29: #{seq2seq_forward.43} parent=0 // pred_fallthru
    _

// kernel: seq2seq_forward.30
$region0: #{seq2seq_forward.30}
  #allocation0 [shape = 'u32[]', space=smem, size = 0x4, offset = 0x4, fixed_abs, tag = 'smem constant byte address 0x4 - core index']
  #allocation1 [shape = 'u32[144,128]{1,0:T(1,128)}', space=vmem, size = 0x12000, scoped, tag = 'internal scratch']
  %s0 = inlined_call_operand.vmem [shape: bf16[2,8,32], index: 0, kind: input, shape index: {}]
  %s1 = inlined_call_operand.vmem [shape: bf16[2,32,8], index: 1, kind: input, shape index: {}]
  %s2 = inlined_call_operand.vmem [shape: bf16[2,8,32], index: 2, kind: input, shape index: {}]
  %s3 = inlined_call_operand.vmem [shape: f32[2,1,8], index: 3, kind: input, shape index: {}]
  %s4 = inlined_call_operand.vmem [shape: bf16[2,8,32], index: 4, kind: output, shape index: {}]
  %s5 = sld [smem:[#allocation0]]
  $region49: #{seq2seq_forward.30} parent=0
    _
  %s7 = ssub.s32 1, %s5
  %s8 = scalar_select 0, %s7, %s5
  loop: start=0, step=1, limit=4
  $region2: #{seq2seq_forward.30} parent=0 // loop_pre_header
    _
  $region3: #{seq2seq_forward.30} parent=0 // loop_header
    %s10 = sphi 0, %s14
    %p11 = scmp.ge.s32.totalorder %s10, 4
    %s17 = sphi 0, %s29
    %s18 = sphi 0, %s25
    %s19 = sphi 0, %s17
    %s20 = sphi 0, %s18
    %s21 = sphi 0, %s19
    %s22 = sphi 0, %s20
    %s34 = sphi 0, %s36
    %s37 = sphi 0, %s34
    %s38 = sphi 0, %s37
    %s54 = sphi 0, %s38
    %s62 = sphi 0, %s64
    %s65 = sphi 0, %s62
    %s66 = sphi 0, %s65
    %s82 = sphi 0, %s66
    %s90 = sphi 0, %s92
    %s93 = sphi 0, %s90
    %s94 = sphi 0, %s93
    %s110 = sphi 0, %s94
    %s116 = sphi 0, %s118
    %s119 = sphi 0, %s116
    %s120 = sphi 0, %s119
    %s136 = sphi 0, %s120
    %s144 = sphi 0, %s146
    %s147 = sphi 0, %s144
    %s148 = sphi 0, %s147
    %s164 = sphi 0, %s148
  $region4: #{seq2seq_forward.30} parent=0 // loop_header_branch
    %13 = sbr.rel (%p11) target = $region8
  $region5: #{seq2seq_forward.30} parent=0 // loop_body
    %s15 = ssub.s32 %s10, 1
    %s16 = ssub.s32 %s10, 2
    %s23 = sadd.s32 1, %s18
    %p24 = scmp.ge.s32.totalorder %s23, 1
    %s25 = scalar_select %p24, 0, %s23
    %s26 = sadd.s32 1, %s17
    %s27 = scalar_select %p24, %s26, %s17
    %p28 = scmp.ge.s32.totalorder %s27, 2
    %s29 = scalar_select %p28, 0, %s27
    %s30 = ssub.s32 %s17, %s29
    %s31 = ssub.s32 %s18, %s25
    %s32 = sor.u32 %s30, %s31
    %p33 = scmp.eq.s32.totalorder %s32, 0
    %s35 = sadd.s32 %s34, 1
    %s36 = scalar_select %p33, %s34, %s35
    %p39 = pneg %p33
    %p40 = scmp.eq.s32.totalorder %s10, 1
    %p41 = por %p39, %p40
    %p42 = scmp.ne.s32.totalorder %s34, %s37
    %p43 = scmp.eq.s32.totalorder %s10, 0
    %p44 = por %p42, %p43
    %p45 = scmp.ne.s32.totalorder %s34, %s37
    %p46 = scmp.eq.s32.totalorder %s15, 1
    %p47 = por %p45, %p46
    %p48 = scmp.ne.s32.totalorder %s37, %s38
    %p49 = scmp.eq.s32.totalorder %s15, 0
    %p50 = por %p48, %p49
    %p51 = scmp.ne.s32.totalorder %s37, %s38
    %p52 = scmp.eq.s32.totalorder %s16, 1
    %p53 = por %p51, %p52
    %p55 = scmp.ne.s32.totalorder %s38, %s54
    %p56 = scmp.eq.s32.totalorder %s16, 0
    %p57 = por %p55, %p56
    %s58 = ssub.s32 %s17, %s29
    %s59 = ssub.s32 %s18, %s25
    %s60 = sor.u32 %s58, %s59
    %p61 = scmp.eq.s32.totalorder %s60, 0
    %s63 = sadd.s32 %s62, 1
    %s64 = scalar_select %p61, %s62, %s63
    %p67 = pneg %p61
    %p68 = scmp.eq.s32.totalorder %s10, 1
    %p69 = por %p67, %p68
    %p70 = scmp.ne.s32.totalorder %s62, %s65
    %p71 = scmp.eq.s32.totalorder %s10, 0
    %p72 = por %p70, %p71
    %p73 = scmp.ne.s32.totalorder %s62, %s65
    %p74 = scmp.eq.s32.totalorder %s15, 1
    %p75 = por %p73, %p74
    %p76 = scmp.ne.s32.totalorder %s65, %s66
    %p77 = scmp.eq.s32.totalorder %s15, 0
    %p78 = por %p76, %p77
    %p79 = scmp.ne.s32.totalorder %s65, %s66
    %p80 = scmp.eq.s32.totalorder %s16, 1
    %p81 = por %p79, %p80
    %p83 = scmp.ne.s32.totalorder %s66, %s82
    %p84 = scmp.eq.s32.totalorder %s16, 0
    %p85 = por %p83, %p84
    %s86 = ssub.s32 %s17, %s29
    %s87 = ssub.s32 %s18, %s25
    %s88 = sor.u32 %s86, %s87
    %p89 = scmp.eq.s32.totalorder %s88, 0
    %s91 = sadd.s32 %s90, 1
    %s92 = scalar_select %p89, %s90, %s91
    %p95 = pneg %p89
    %p96 = scmp.eq.s32.totalorder %s10, 1
    %p97 = por %p95, %p96
    %p98 = scmp.ne.s32.totalorder %s90, %s93
    %p99 = scmp.eq.s32.totalorder %s10, 0
    %p100 = por %p98, %p99
    %p101 = scmp.ne.s32.totalorder %s90, %s93
    %p102 = scmp.eq.s32.totalorder %s15, 1
    %p103 = por %p101, %p102
    %p104 = scmp.ne.s32.totalorder %s93, %s94
    %p105 = scmp.eq.s32.totalorder %s15, 0
    %p106 = por %p104, %p105
    %p107 = scmp.ne.s32.totalorder %s93, %s94
    %p108 = scmp.eq.s32.totalorder %s16, 1
    %p109 = por %p107, %p108
    %p111 = scmp.ne.s32.totalorder %s94, %s110
    %p112 = scmp.eq.s32.totalorder %s16, 0
    %p113 = por %p111, %p112
    %s114 = ssub.s32 %s17, %s29
    %p115 = scmp.eq.s32.totalorder %s114, 0
    %s117 = sadd.s32 %s116, 1
    %s118 = scalar_select %p115, %s116, %s117
    %p121 = pneg %p115
    %p122 = scmp.eq.s32.totalorder %s10, 1
    %p123 = por %p121, %p122
    %p124 = scmp.ne.s32.totalorder %s116, %s119
    %p125 = scmp.eq.s32.totalorder %s10, 0
    %p126 = por %p124, %p125
    %p127 = scmp.ne.s32.totalorder %s116, %s119
    %p128 = scmp.eq.s32.totalorder %s15, 1
    %p129 = por %p127, %p128
    %p130 = scmp.ne.s32.totalorder %s119, %s120
    %p131 = scmp.eq.s32.totalorder %s15, 0
    %p132 = por %p130, %p131
    %p133 = scmp.ne.s32.totalorder %s119, %s120
    %p134 = scmp.eq.s32.totalorder %s16, 1
    %p135 = por %p133, %p134
    %p137 = scmp.ne.s32.totalorder %s120, %s136
    %p138 = scmp.eq.s32.totalorder %s16, 0
    %p139 = por %p137, %p138
    %s140 = ssub.s32 %s17, %s29
    %s141 = ssub.s32 %s18, %s25
    %s142 = sor.u32 %s140, %s141
    %p143 = scmp.eq.s32.totalorder %s142, 0
    %s145 = sadd.s32 %s144, 1
    %s146 = scalar_select %p143, %s144, %s145
    %p149 = pneg %p143
    %p150 = scmp.eq.s32.totalorder %s10, 1
    %p151 = por %p149, %p150
    %p152 = scmp.ne.s32.totalorder %s144, %s147
    %p153 = scmp.eq.s32.totalorder %s10, 0
    %p154 = por %p152, %p153
    %p155 = scmp.ne.s32.totalorder %s144, %s147
    %p156 = scmp.eq.s32.totalorder %s15, 1
    %p157 = por %p155, %p156
    %p158 = scmp.ne.s32.totalorder %s147, %s148
    %p159 = scmp.eq.s32.totalorder %s15, 0
    %p160 = por %p158, %p159
    %p161 = scmp.ne.s32.totalorder %s147, %s148
    %p162 = scmp.eq.s32.totalorder %s16, 1
    %p163 = por %p161, %p162
    %p165 = scmp.ne.s32.totalorder %s148, %s164
    %p166 = scmp.eq.s32.totalorder %s16, 0
    %p167 = por %p165, %p166
    %p168 = scmp.le.s32.totalorder 1, %s10
    %p169 = scmp.lt.s32.totalorder %s10, 3
    %p170 = pnand %p168, %p169
    %p171 = pneg %p170
    // Predicated region
    $region9: #{seq2seq_forward.30} parent=5 // pred_check
      _
    $region10: #{seq2seq_forward.30} parent=5 // pred_check_branch
      %173 = sbr.rel (%p170) target = $region12
    $region11: #{seq2seq_forward.30} parent=5 // pred_region
      %s174 = ssub.s32 %s10, 1
    $region12: #{seq2seq_forward.30} parent=5 // pred_fallthru
      _
    %p175 = scmp.lt.s32.totalorder %s10, 2
    // Predicated region
    $region13: #{seq2seq_forward.30} parent=5 // pred_check
      %p176 = pneg %p175
    $region14: #{seq2seq_forward.30} parent=5 // pred_check_branch
      %178 = sbr.rel (%p176) target = $region16
    $region15: #{seq2seq_forward.30} parent=5 // pred_region
      // Predicated region
      $region17: #{seq2seq_forward.30} parent=15 // pred_check
        %p179 = pneg %p44
      $region18: #{seq2seq_forward.30} parent=15 // pred_check_branch
        %181 = sbr.rel (%p179) target = $region20
      $region19: #{seq2seq_forward.30} parent=15 // pred_region
        %p182 = scmp.lt.s32.totalorder %s17, 1
        %s183 = scalar_select %p182, %s17, 1
        %p184 = scmp.lt.s32.totalorder %s18, 0
        %s185 = scalar_select %p184, %s18, 0
        %s186 = sadd.s32 %s185, %s183
        %s187 = smul.addr %s186, 4
        %s188 = scalar_lea.vmem %s0, %s187
      $region20: #{seq2seq_forward.30} parent=15 // pred_fallthru
        _
      // Predicated region
      $region21: #{seq2seq_forward.30} parent=15 // pred_check
        %p189 = pneg %p72
      $region22: #{seq2seq_forward.30} parent=15 // pred_check_branch
        %191 = sbr.rel (%p189) target = $region24
      $region23: #{seq2seq_forward.30} parent=15 // pred_region
        %s192 = smul.u32 4, %s18
        %p193 = scmp.lt.s32.totalorder %s17, 1
        %s194 = scalar_select %p193, %s17, 1
        %p195 = scmp.lt.s32.totalorder %s192, 3
        %s196 = scalar_select %p195, %s192, 3
        %s197 = smul.addr %s194, 4
        %s198 = sadd.s32 %s196, %s197
        %s199 = smul.addr %s198, 4
        %s200 = scalar_lea.vmem %s1, %s199
        %s201 = smul.u32 4, %s18
      $region24: #{seq2seq_forward.30} parent=15 // pred_fallthru
        _
      // Predicated region
      $region25: #{seq2seq_forward.30} parent=15 // pred_check
        %p202 = pneg %p100
      $region26: #{seq2seq_forward.30} parent=15 // pred_check_branch
        %204 = sbr.rel (%p202) target = $region28
      $region27: #{seq2seq_forward.30} parent=15 // pred_region
        %p205 = scmp.lt.s32.totalorder %s17, 1
        %s206 = scalar_select %p205, %s17, 1
        %p207 = scmp.lt.s32.totalorder %s18, 0
        %s208 = scalar_select %p207, %s18, 0
        %s209 = sadd.s32 %s208, %s206
        %s210 = smul.addr %s209, 4
        %s211 = scalar_lea.vmem %s2, %s210
      $region28: #{seq2seq_forward.30} parent=15 // pred_fallthru
        _
      // Predicated region
      $region29: #{seq2seq_forward.30} parent=15 // pred_check
        %p212 = pneg %p126
      $region30: #{seq2seq_forward.30} parent=15 // pred_check_branch
        %214 = sbr.rel (%p212) target = $region32
      $region31: #{seq2seq_forward.30} parent=15 // pred_region
        %p215 = scmp.lt.s32.totalorder %s17, 1
        %s216 = scalar_select %p215, %s17, 1
        %s217 = scalar_lea.vmem %s3, %s216
      $region32: #{seq2seq_forward.30} parent=15 // pred_fallthru
        _
    $region16: #{seq2seq_forward.30} parent=5 // pred_fallthru
      _
    %p218 = scmp.le.s32.totalorder 1, %s10
    %p219 = scmp.lt.s32.totalorder %s10, 3
    %p220 = pnand %p218, %p219
    %p221 = pneg %p220
    // Predicated region
    $region33: #{seq2seq_forward.30} parent=5 // pred_check
      _
    $region34: #{seq2seq_forward.30} parent=5 // pred_check_branch
      %223 = sbr.rel (%p220) target = $region36
    $region35: #{seq2seq_forward.30} parent=5 // pred_region
      %s224 = ssub.s32 %s10, 1
      %p225 = scmp.lt.s32.totalorder %s19, 1
      %s226 = scalar_select %p225, %s19, 1
      %p227 = scmp.lt.s32.totalorder %s20, 0
      %s228 = scalar_select %p227, %s20, 0
      %s229 = sadd.s32 %s228, %s226
      %s230 = smul.addr %s229, 4
      %s231 = scalar_lea.vmem %s0, %s230
      %p232 = pneg %p50
      %p233 = pneg %p47
      %s234 = smul.u32 4, %s20
      %p235 = scmp.lt.s32.totalorder %s19, 1
      %s236 = scalar_select %p235, %s19, 1
      %p237 = scmp.lt.s32.totalorder %s234, 3
      %s238 = scalar_select %p237, %s234, 3
      %s239 = smul.addr %s236, 4
      %s240 = sadd.s32 %s238, %s239
      %s241 = smul.addr %s240, 4
      %s242 = scalar_lea.vmem %s1, %s241
      %p243 = pneg %p78
      %p244 = pneg %p75
      %p245 = scmp.lt.s32.totalorder %s19, 1
      %s246 = scalar_select %p245, %s19, 1
      %p247 = scmp.lt.s32.totalorder %s20, 0
      %s248 = scalar_select %p247, %s20, 0
      %s249 = sadd.s32 %s248, %s246
      %s250 = smul.addr %s249, 4
      %s251 = scalar_lea.vmem %s2, %s250
      %p252 = pneg %p106
      %p253 = pneg %p103
      %p254 = scmp.lt.s32.totalorder %s19, 1
      %s255 = scalar_select %p254, %s19, 1
      %s256 = scalar_lea.vmem %s3, %s255
      %p257 = pneg %p132
      %p258 = pneg %p129
      %p259 = pneg %p160
      %p260 = pneg %p157
      %p261 = scmp.lt.s32.totalorder %s19, 1
      %s262 = scalar_select %p261, %s19, 1
      %p263 = scmp.lt.s32.totalorder %s20, 0
      %s264 = scalar_select %p263, %s20, 0
      %s265 = sadd.s32 %s264, %s262
      %s266 = smul.addr %s265, 4
      %s267 = scalar_lea.vmem %s4, %s266
      %p268 = scmp.lt.s32.totalorder %s19, 1
      %s269 = scalar_select %p268, %s19, 1
      %p270 = scmp.lt.s32.totalorder %s20, 0
      %s271 = scalar_select %p270, %s20, 0
      %s272 = sadd.s32 %s271, %s269
      %s273 = smul.addr %s272, 4
      %s274 = scalar_lea.vmem %s0, %s273
      %s275 = smul.u32 4, %s20
      %p276 = scmp.lt.s32.totalorder %s19, 1
      %s277 = scalar_select %p276, %s19, 1
      %p278 = scmp.lt.s32.totalorder %s275, 3
      %s279 = scalar_select %p278, %s275, 3
      %s280 = smul.addr %s277, 4
      %s281 = sadd.s32 %s279, %s280
      %s282 = smul.addr %s281, 4
      %s283 = scalar_lea.vmem %s1, %s282
      %s284 = smul.u32 4, %s20
      %p285 = scmp.lt.s32.totalorder %s19, 1
      %s286 = scalar_select %p285, %s19, 1
      %p287 = scmp.lt.s32.totalorder %s20, 0
      %s288 = scalar_select %p287, %s20, 0
      %s289 = sadd.s32 %s288, %s286
      %s290 = smul.addr %s289, 4
      %s291 = scalar_lea.vmem %s2, %s290
      %p292 = scmp.lt.s32.totalorder %s19, 1
      %s293 = scalar_select %p292, %s19, 1
      %s294 = scalar_lea.vmem %s3, %s293
      %p295 = scmp.lt.s32.totalorder %s19, 1
      %s296 = scalar_select %p295, %s19, 1
      %p297 = scmp.lt.s32.totalorder %s20, 0
      %s298 = scalar_select %p297, %s20, 0
      %s299 = sadd.s32 %s298, %s296
      %s300 = smul.addr %s299, 4
      %s301 = scalar_lea.vmem %s4, %s300
      %v303 = vld [vmem:[%s294] sm:$0x1]
      %vm304 = vcmp.gt.f32.partialorder %v303, 0.5
      %v305 = vsel %vm304, 1, 0
      %v306 = vlaneseq
      %v307 = vshrl.u32 %v306, 7
      %v308 = vsub.s32 0, %v307
      %v309 = vrot.slane %v305, %v308
      %vm310 = vcmp.eq.s32.totalorder %v309, 1
      %v311 = vld [vmem:[%s274] sm:$0xf]
      %v312 = vld [vmem:[%s283] sm:$0xf]
      %v313 = vld [vmem:[%s283 + $0x4] sm:$0xf]
      %v314 = vld [vmem:[%s283 + $0x8] sm:$0xf]
      %v315 = vld [vmem:[%s283 + $0xc] sm:$0xf]
      %v316 = vld [vmem:[%s291] sm:$0xf]
      %vm317 = vcmask 64512
      %v319 = vsel %vm317, %v311, 0
      %vm321 = vcmask 1043456
      %v323 = vsel %vm321, %v312, 0
      %325 = vmatprep.subr.bf16.mxu0 0
      %326 = vmatpush1.bf16.msra.mxu0 %v323
      %327 = vmatprep.subr.bf16.mxu0 0
      %328 = vmatpush1.bf16.msra.mxu0 0
      %329 = vmatprep.subr.bf16.mxu0 0
      %330 = vmatpush1.bf16.msra.mxu0 0
      %331 = vmatprep.subr.bf16.mxu0 0
      %332 = vmatpush1.bf16.msra.mxu0 0
      %333 = vmatprep.subr.bf16.mxu0 0
      %334 = vmatpush1.bf16.msra.mxu0 0
      %335 = vmatprep.subr.bf16.mxu0 0
      %336 = vmatpush1.bf16.msra.mxu0 0
      %337 = vmatprep.subr.bf16.mxu0 0
      %338 = vmatpush1.bf16.msra.mxu0 0
      %339 = vmatprep.subr.bf16.mxu0 0
      %340 = vmatpush1.bf16.msra.mxu0 0
      %341 = vmatprep.subr.bf16.mxu0 0
      %342 = vmatpush1.bf16.msra.mxu0 0
      %343 = vmatprep.subr.bf16.mxu0 0
      %344 = vmatpush1.bf16.msra.mxu0 0
      %345 = vmatprep.subr.bf16.mxu0 0
      %346 = vmatpush1.bf16.msra.mxu0 0
      %347 = vmatprep.subr.bf16.mxu0 0
      %348 = vmatpush1.bf16.msra.mxu0 0
      %349 = vmatprep.subr.bf16.mxu0 0
      %350 = vmatpush1.bf16.msra.mxu0 0
      %351 = vmatprep.subr.bf16.mxu0 0
      %352 = vmatpush1.bf16.msra.mxu0 0
      %353 = vmatprep.subr.bf16.mxu0 0
      %354 = vmatpush1.bf16.msra.mxu0 0
      %355 = vmatprep.subr.bf16.mxu0 0
      %356 = vmatpush1.bf16.msra.mxu0 0
      %357 = vmatprep.mubr.bf16.mxu0 0
      %358 = vmatmul.mubr.bf16.gmra.mrb[0].mxu0 %v319
      %v359 = vpop.f32.mrb[0].mxu0
      %v360 = vadd.f32 0.0, %v359
      %v361 = vpop.f32.mrb[0].mxu0
      %v362 = vpop.f32.mrb[0].mxu0
      %v363 = vpop.f32.mrb[0].mxu0
      %364 = vdwg.mxu0
      %v365 = vmul.f32 %v360, 0.35355338
      %v366 = vsel %vm310, %v365, -1e+10
      %v367 = vsel %vm317, %v366, -inf
      %368 = vmax.xlane.f32.xlu0 %v367
      %v369 = vpop.xlane.xlu0 %368
      %v370 = vsub.f32 %v366, %v369
      %v371 = vmul.f32 %v370, 1.442695
      %v372 = vpow.pop %v371
      %v373 = vsel %vm317, %v372, 0.0
      %374 = vadd.xlane.f32.xlu0 %v373
      %v375 = vpop.xlane.xlu0 %374
      %v376 = vrcp.pop %v375
      %v377 = vpack.c.bf16 %v372, %v372
      %v379 = vsel %vm317, %v377, 0
      %v382 = vsel %vm321, %v316, 0
      %384 = vmatprep.subr.bf16.mxu0 0
      %385 = vmatpush1.bf16.msra.mxu0 %v382
      %386 = vmatprep.subr.bf16.mxu0 0
      %387 = vmatpush1.bf16.msra.mxu0 0
      %388 = vmatprep.subr.bf16.mxu0 0
      %389 = vmatpush1.bf16.msra.mxu0 0
      %390 = vmatprep.subr.bf16.mxu0 0
      %391 = vmatpush1.bf16.msra.mxu0 0
      %392 = vmatprep.subr.bf16.mxu0 0
      %393 = vmatpush1.bf16.msra.mxu0 0
      %394 = vmatprep.subr.bf16.mxu0 0
      %395 = vmatpush1.bf16.msra.mxu0 0
      %396 = vmatprep.subr.bf16.mxu0 0
      %397 = vmatpush1.bf16.msra.mxu0 0
      %398 = vmatprep.subr.bf16.mxu0 0
      %399 = vmatpush1.bf16.msra.mxu0 0
      %400 = vmatprep.subr.bf16.mxu0 0
      %401 = vmatpush1.bf16.msra.mxu0 0
      %402 = vmatprep.subr.bf16.mxu0 0
      %403 = vmatpush1.bf16.msra.mxu0 0
      %404 = vmatprep.subr.bf16.mxu0 0
      %405 = vmatpush1.bf16.msra.mxu0 0
      %406 = vmatprep.subr.bf16.mxu0 0
      %407 = vmatpush1.bf16.msra.mxu0 0
      %408 = vmatprep.subr.bf16.mxu0 0
      %409 = vmatpush1.bf16.msra.mxu0 0
      %410 = vmatprep.subr.bf16.mxu0 0
      %411 = vmatpush1.bf16.msra.mxu0 0
      %412 = vmatprep.subr.bf16.mxu0 0
      %413 = vmatpush1.bf16.msra.mxu0 0
      %414 = vmatprep.subr.bf16.mxu0 0
      %415 = vmatpush1.bf16.msra.mxu0 0
      %416 = vmatprep.mubr.bf16.mxu0 0
      %417 = vmatmul.mubr.bf16.gmra.mrb[0].mxu0 %v379
      %v418 = vpop.f32.mrb[0].mxu0
      %v419 = vadd.f32 0.0, %v418
      %v420 = vpop.f32.mrb[0].mxu0
      %v421 = vpop.f32.mrb[0].mxu0
      %v422 = vpop.f32.mrb[0].mxu0
      %423 = vdwg.mxu0
      %v424 = vmul.f32 %v419, %v376
      %v425 = vpack.c.bf16 %v424, %v424
      %vm426 = vcmask 60416
      %427 = vst.msk [vmem:[%s301] sm:$0xf] %vm426, %v425
      %v429 = vunpack.c.l.b16 %v311
      %v430 = vpack.c.b16 %v429, %v429
      %431 = vrot.lane.b32.xlu0 %v430, 120
      %v432 = vpop.permute.xlu0 %431
      %v434 = vsel %vm317, %v432, 0
      %v437 = vsel %vm321, %v313, 0
      %439 = vmatprep.subr.bf16.mxu0 0
      %440 = vmatpush1.bf16.msra.mxu0 %v437
      %441 = vmatprep.subr.bf16.mxu0 0
      %442 = vmatpush1.bf16.msra.mxu0 0
      %443 = vmatprep.subr.bf16.mxu0 0
      %444 = vmatpush1.bf16.msra.mxu0 0
      %445 = vmatprep.subr.bf16.mxu0 0
      %446 = vmatpush1.bf16.msra.mxu0 0
      %447 = vmatprep.subr.bf16.mxu0 0
      %448 = vmatpush1.bf16.msra.mxu0 0
      %449 = vmatprep.subr.bf16.mxu0 0
      %450 = vmatpush1.bf16.msra.mxu0 0
      %451 = vmatprep.subr.bf16.mxu0 0
      %452 = vmatpush1.bf16.msra.mxu0 0
      %453 = vmatprep.subr.bf16.mxu0 0
      %454 = vmatpush1.bf16.msra.mxu0 0
      %455 = vmatprep.subr.bf16.mxu0 0
      %456 = vmatpush1.bf16.msra.mxu0 0
      %457 = vmatprep.subr.bf16.mxu0 0
      %458 = vmatpush1.bf16.msra.mxu0 0
      %459 = vmatprep.subr.bf16.mxu0 0
      %460 = vmatpush1.bf16.msra.mxu0 0
      %461 = vmatprep.subr.bf16.mxu0 0
      %462 = vmatpush1.bf16.msra.mxu0 0
      %463 = vmatprep.subr.bf16.mxu0 0
      %464 = vmatpush1.bf16.msra.mxu0 0
      %465 = vmatprep.subr.bf16.mxu0 0
      %466 = vmatpush1.bf16.msra.mxu0 0
      %467 = vmatprep.subr.bf16.mxu0 0
      %468 = vmatpush1.bf16.msra.mxu0 0
      %469 = vmatprep.subr.bf16.mxu0 0
      %470 = vmatpush1.bf16.msra.mxu0 0
      %471 = vmatprep.mubr.bf16.mxu0 0
      %472 = vmatmul.mubr.bf16.gmra.mrb[0].mxu0 %v434
      %v473 = vpop.f32.mrb[0].mxu0
      %v474 = vadd.f32 0.0, %v473
      %v475 = vpop.f32.mrb[0].mxu0
      %v476 = vpop.f32.mrb[0].mxu0
      %v477 = vpop.f32.mrb[0].mxu0
      %478 = vdwg.mxu0
      %v479 = vmul.f32 %v474, 0.35355338
      %v480 = vsel %vm310, %v479, -1e+10
      %v481 = vsel %vm317, %v480, -inf
      %482 = vmax.xlane.f32.xlu0 %v481
      %v483 = vpop.xlane.xlu0 %482
      %v484 = vsub.f32 %v480, %v483
      %v485 = vmul.f32 %v484, 1.442695
      %v486 = vpow.pop %v485
      %v487 = vsel %vm317, %v486, 0.0
      %488 = vadd.xlane.f32.xlu0 %v487
      %v489 = vpop.xlane.xlu0 %488
      %v490 = vrcp.pop %v489
      %v491 = vpack.c.bf16 %v486, %v486
      %v493 = vunpack.c.l.b16 %v316
      %v494 = vpack.c.b16 %v493, %v493
      %495 = vrot.lane.b32.xlu0 %v494, 120
      %v496 = vpop.permute.xlu0 %495
      %v498 = vsel %vm317, %v491, 0
      %v501 = vsel %vm321, %v496, 0
      %503 = vmatprep.subr.bf16.mxu0 0
      %504 = vmatpush1.bf16.msra.mxu0 %v501
      %505 = vmatprep.subr.bf16.mxu0 0
      %506 = vmatpush1.bf16.msra.mxu0 0
      %507 = vmatprep.subr.bf16.mxu0 0
      %508 = vmatpush1.bf16.msra.mxu0 0
      %509 = vmatprep.subr.bf16.mxu0 0
      %510 = vmatpush1.bf16.msra.mxu0 0
      %511 = vmatprep.subr.bf16.mxu0 0
      %512 = vmatpush1.bf16.msra.mxu0 0
      %513 = vmatprep.subr.bf16.mxu0 0
      %514 = vmatpush1.bf16.msra.mxu0 0
      %515 = vmatprep.subr.bf16.mxu0 0
      %516 = vmatpush1.bf16.msra.mxu0 0
      %517 = vmatprep.subr.bf16.mxu0 0
      %518 = vmatpush1.bf16.msra.mxu0 0
      %519 = vmatprep.subr.bf16.mxu0 0
      %520 = vmatpush1.bf16.msra.mxu0 0
      %521 = vmatprep.subr.bf16.mxu0 0
      %522 = vmatpush1.bf16.msra.mxu0 0
      %523 = vmatprep.subr.bf16.mxu0 0
      %524 = vmatpush1.bf16.msra.mxu0 0
      %525 = vmatprep.subr.bf16.mxu0 0
      %526 = vmatpush1.bf16.msra.mxu0 0
      %527 = vmatprep.subr.bf16.mxu0 0
      %528 = vmatpush1.bf16.msra.mxu0 0
      %529 = vmatprep.subr.bf16.mxu0 0
      %530 = vmatpush1.bf16.msra.mxu0 0
      %531 = vmatprep.subr.bf16.mxu0 0
      %532 = vmatpush1.bf16.msra.mxu0 0
      %533 = vmatprep.subr.bf16.mxu0 0
      %534 = vmatpush1.bf16.msra.mxu0 0
      %535 = vmatprep.mubr.bf16.mxu0 0
      %536 = vmatmul.mubr.bf16.gmra.mrb[0].mxu0 %v498
      %v537 = vpop.f32.mrb[0].mxu0
      %v538 = vadd.f32 0.0, %v537
      %v539 = vpop.f32.mrb[0].mxu0
      %v540 = vpop.f32.mrb[0].mxu0
      %v541 = vpop.f32.mrb[0].mxu0
      %542 = vdwg.mxu0
      %v543 = vmul.f32 %v538, %v490
      %v544 = vpack.c.bf16 %v543, %v543
      %v546 = vunpack.c.l.b16 %v544
      %v547 = vpack.c.b16 %v546, %v546
      %548 = vrot.lane.b32.xlu0 %v547, 8
      %v549 = vpop.permute.xlu0 %548
      %vm551 = vcmask 126016
      %552 = vst.msk [vmem:[%s301] sm:$0xf] %vm551, %v549
      %553 = vrot.lane.b32.xlu0 %v430, 112
      %v554 = vpop.permute.xlu0 %553
      %v556 = vsel %vm317, %v554, 0
      %v559 = vsel %vm321, %v314, 0
      %561 = vmatprep.subr.bf16.mxu0 0
      %562 = vmatpush1.bf16.msra.mxu0 %v559
      %563 = vmatprep.subr.bf16.mxu0 0
      %564 = vmatpush1.bf16.msra.mxu0 0
      %565 = vmatprep.subr.bf16.mxu0 0
      %566 = vmatpush1.bf16.msra.mxu0 0
      %567 = vmatprep.subr.bf16.mxu0 0
      %568 = vmatpush1.bf16.msra.mxu0 0
      %569 = vmatprep.subr.bf16.mxu0 0
      %570 = vmatpush1.bf16.msra.mxu0 0
      %571 = vmatprep.subr.bf16.mxu0 0
      %572 = vmatpush1.bf16.msra.mxu0 0
      %573 = vmatprep.subr.bf16.mxu0 0
      %574 = vmatpush1.bf16.msra.mxu0 0
      %575 = vmatprep.subr.bf16.mxu0 0
      %576 = vmatpush1.bf16.msra.mxu0 0
      %577 = vmatprep.subr.bf16.mxu0 0
      %578 = vmatpush1.bf16.msra.mxu0 0
      %579 = vmatprep.subr.bf16.mxu0 0
      %580 = vmatpush1.bf16.msra.mxu0 0
      %581 = vmatprep.subr.bf16.mxu0 0
      %582 = vmatpush1.bf16.msra.mxu0 0
      %583 = vmatprep.subr.bf16.mxu0 0
      %584 = vmatpush1.bf16.msra.mxu0 0
      %585 = vmatprep.subr.bf16.mxu0 0
      %586 = vmatpush1.bf16.msra.mxu0 0
      %587 = vmatprep.subr.bf16.mxu0 0
      %588 = vmatpush1.bf16.msra.mxu0 0
      %589 = vmatprep.subr.bf16.mxu0 0
      %590 = vmatpush1.bf16.msra.mxu0 0
      %591 = vmatprep.subr.bf16.mxu0 0
      %592 = vmatpush1.bf16.msra.mxu0 0
      %593 = vmatprep.mubr.bf16.mxu0 0
      %594 = vmatmul.mubr.bf16.gmra.mrb[0].mxu0 %v556
      %v595 = vpop.f32.mrb[0].mxu0
      %v596 = vadd.f32 0.0, %v595
      %v597 = vpop.f32.mrb[0].mxu0
      %v598 = vpop.f32.mrb[0].mxu0
      %v599 = vpop.f32.mrb[0].mxu0
      %600 = vdwg.mxu0
      %v601 = vmul.f32 %v596, 0.35355338
      %v602 = vsel %vm310, %v601, -1e+10
      %v603 = vsel %vm317, %v602, -inf
      %604 = vmax.xlane.f32.xlu0 %v603
      %v605 = vpop.xlane.xlu0 %604
      %v606 = vsub.f32 %v602, %v605
      %v607 = vmul.f32 %v606, 1.442695
      %v608 = vpow.pop %v607
      %v609 = vsel %vm317, %v608, 0.0
      %610 = vadd.xlane.f32.xlu0 %v609
      %v611 = vpop.xlane.xlu0 %610
      %v612 = vrcp.pop %v611
      %v613 = vpack.c.bf16 %v608, %v608
      %614 = vrot.lane.b32.xlu0 %v494, 112
      %v615 = vpop.permute.xlu0 %614
      %v617 = vsel %vm317, %v613, 0
      %v620 = vsel %vm321, %v615, 0
      %622 = vmatprep.subr.bf16.mxu0 0
      %623 = vmatpush1.bf16.msra.mxu0 %v620
      %624 = vmatprep.subr.bf16.mxu0 0
      %625 = vmatpush1.bf16.msra.mxu0 0
      %626 = vmatprep.subr.bf16.mxu0 0
      %627 = vmatpush1.bf16.msra.mxu0 0
      %628 = vmatprep.subr.bf16.mxu0 0
      %629 = vmatpush1.bf16.msra.mxu0 0
      %630 = vmatprep.subr.bf16.mxu0 0
      %631 = vmatpush1.bf16.msra.mxu0 0
      %632 = vmatprep.subr.bf16.mxu0 0
      %633 = vmatpush1.bf16.msra.mxu0 0
      %634 = vmatprep.subr.bf16.mxu0 0
      %635 = vmatpush1.bf16.msra.mxu0 0
      %636 = vmatprep.subr.bf16.mxu0 0
      %637 = vmatpush1.bf16.msra.mxu0 0
      %638 = vmatprep.subr.bf16.mxu0 0
      %639 = vmatpush1.bf16.msra.mxu0 0
      %640 = vmatprep.subr.bf16.mxu0 0
      %641 = vmatpush1.bf16.msra.mxu0 0
      %642 = vmatprep.subr.bf16.mxu0 0
      %643 = vmatpush1.bf16.msra.mxu0 0
      %644 = vmatprep.subr.bf16.mxu0 0
      %645 = vmatpush1.bf16.msra.mxu0 0
      %646 = vmatprep.subr.bf16.mxu0 0
      %647 = vmatpush1.bf16.msra.mxu0 0
      %648 = vmatprep.subr.bf16.mxu0 0
      %649 = vmatpush1.bf16.msra.mxu0 0
      %650 = vmatprep.subr.bf16.mxu0 0
      %651 = vmatpush1.bf16.msra.mxu0 0
      %652 = vmatprep.subr.bf16.mxu0 0
      %653 = vmatpush1.bf16.msra.mxu0 0
      %654 = vmatprep.mubr.bf16.mxu0 0
      %655 = vmatmul.mubr.bf16.gmra.mrb[0].mxu0 %v617
      %v656 = vpop.f32.mrb[0].mxu0
      %v657 = vadd.f32 0.0, %v656
      %v658 = vpop.f32.mrb[0].mxu0
      %v659 = vpop.f32.mrb[0].mxu0
      %v660 = vpop.f32.mrb[0].mxu0
      %661 = vdwg.mxu0
      %v662 = vmul.f32 %v657, %v612
      %v663 = vpack.c.bf16 %v662, %v662
      %v665 = vunpack.c.l.b16 %v663
      %v666 = vpack.c.b16 %v665, %v665
      %667 = vrot.lane.b32.xlu0 %v666, 16
      %v668 = vpop.permute.xlu0 %667
      %vm670 = vcmask 191616
      %671 = vst.msk [vmem:[%s301] sm:$0xf] %vm670, %v668
      %672 = vrot.lane.b32.xlu0 %v430, 104
      %v673 = vpop.permute.xlu0 %672
      %v675 = vsel %vm317, %v673, 0
      %v678 = vsel %vm321, %v315, 0
      %680 = vmatprep.subr.bf16.mxu0 0
      %681 = vmatpush1.bf16.msra.mxu0 %v678
      %682 = vmatprep.subr.bf16.mxu0 0
      %683 = vmatpush1.bf16.msra.mxu0 0
      %684 = vmatprep.subr.bf16.mxu0 0
      %685 = vmatpush1.bf16.msra.mxu0 0
      %686 = vmatprep.subr.bf16.mxu0 0
      %687 = vmatpush1.bf16.msra.mxu0 0
      %688 = vmatprep.subr.bf16.mxu0 0
      %689 = vmatpush1.bf16.msra.mxu0 0
      %690 = vmatprep.subr.bf16.mxu0 0
      %691 = vmatpush1.bf16.msra.mxu0 0
      %692 = vmatprep.subr.bf16.mxu0 0
      %693 = vmatpush1.bf16.msra.mxu0 0
      %694 = vmatprep.subr.bf16.mxu0 0
      %695 = vmatpush1.bf16.msra.mxu0 0
      %696 = vmatprep.subr.bf16.mxu0 0
      %697 = vmatpush1.bf16.msra.mxu0 0
      %698 = vmatprep.subr.bf16.mxu0 0
      %699 = vmatpush1.bf16.msra.mxu0 0
      %700 = vmatprep.subr.bf16.mxu0 0
      %701 = vmatpush1.bf16.msra.mxu0 0
      %702 = vmatprep.subr.bf16.mxu0 0
      %703 = vmatpush1.bf16.msra.mxu0 0
      %704 = vmatprep.subr.bf16.mxu0 0
      %705 = vmatpush1.bf16.msra.mxu0 0
      %706 = vmatprep.subr.bf16.mxu0 0
      %707 = vmatpush1.bf16.msra.mxu0 0
      %708 = vmatprep.subr.bf16.mxu0 0
      %709 = vmatpush1.bf16.msra.mxu0 0
      %710 = vmatprep.subr.bf16.mxu0 0
      %711 = vmatpush1.bf16.msra.mxu0 0
      %712 = vmatprep.mubr.bf16.mxu0 0
      %713 = vmatmul.mubr.bf16.gmra.mrb[0].mxu0 %v675
      %v714 = vpop.f32.mrb[0].mxu0
      %v715 = vadd.f32 0.0, %v714
      %v716 = vpop.f32.mrb[0].mxu0
      %v717 = vpop.f32.mrb[0].mxu0
      %v718 = vpop.f32.mrb[0].mxu0
      %719 = vdwg.mxu0
      %v720 = vmul.f32 %v715, 0.35355338
      %v721 = vsel %vm310, %v720, -1e+10
      %v722 = vsel %vm317, %v721, -inf
      %723 = vmax.xlane.f32.xlu0 %v722
      %v724 = vpop.xlane.xlu0 %723
      %v725 = vsub.f32 %v721, %v724
      %v726 = vmul.f32 %v725, 1.442695
      %v727 = vpow.pop %v726
      %v728 = vsel %vm317, %v727, 0.0
      %729 = vadd.xlane.f32.xlu0 %v728
      %v730 = vpop.xlane.xlu0 %729
      %v731 = vrcp.pop %v730
      %v732 = vpack.c.bf16 %v727, %v727
      %733 = vrot.lane.b32.xlu0 %v494, 104
      %v734 = vpop.permute.xlu0 %733
      %v736 = vsel %vm317, %v732, 0
      %v739 = vsel %vm321, %v734, 0
      %741 = vmatprep.subr.bf16.mxu0 0
      %742 = vmatpush1.bf16.msra.mxu0 %v739
      %743 = vmatprep.subr.bf16.mxu0 0
      %744 = vmatpush1.bf16.msra.mxu0 0
      %745 = vmatprep.subr.bf16.mxu0 0
      %746 = vmatpush1.bf16.msra.mxu0 0
      %747 = vmatprep.subr.bf16.mxu0 0
      %748 = vmatpush1.bf16.msra.mxu0 0
      %749 = vmatprep.subr.bf16.mxu0 0
      %750 = vmatpush1.bf16.msra.mxu0 0
      %751 = vmatprep.subr.bf16.mxu0 0
      %752 = vmatpush1.bf16.msra.mxu0 0
      %753 = vmatprep.subr.bf16.mxu0 0
      %754 = vmatpush1.bf16.msra.mxu0 0
      %755 = vmatprep.subr.bf16.mxu0 0
      %756 = vmatpush1.bf16.msra.mxu0 0
      %757 = vmatprep.subr.bf16.mxu0 0
      %758 = vmatpush1.bf16.msra.mxu0 0
      %759 = vmatprep.subr.bf16.mxu0 0
      %760 = vmatpush1.bf16.msra.mxu0 0
      %761 = vmatprep.subr.bf16.mxu0 0
      %762 = vmatpush1.bf16.msra.mxu0 0
      %763 = vmatprep.subr.bf16.mxu0 0
      %764 = vmatpush1.bf16.msra.mxu0 0
      %765 = vmatprep.subr.bf16.mxu0 0
      %766 = vmatpush1.bf16.msra.mxu0 0
      %767 = vmatprep.subr.bf16.mxu0 0
      %768 = vmatpush1.bf16.msra.mxu0 0
      %769 = vmatprep.subr.bf16.mxu0 0
      %770 = vmatpush1.bf16.msra.mxu0 0
      %771 = vmatprep.subr.bf16.mxu0 0
      %772 = vmatpush1.bf16.msra.mxu0 0
      %773 = vmatprep.mubr.bf16.mxu0 0
      %774 = vmatmul.mubr.bf16.gmra.mrb[0].mxu0 %v736
      %v775 = vpop.f32.mrb[0].mxu0
      %v776 = vadd.f32 0.0, %v775
      %v777 = vpop.f32.mrb[0].mxu0
      %v778 = vpop.f32.mrb[0].mxu0
      %v779 = vpop.f32.mrb[0].mxu0
      %780 = vdwg.mxu0
      %v781 = vmul.f32 %v776, %v731
      %v782 = vpack.c.bf16 %v781, %v781
      %v784 = vunpack.c.l.b16 %v782
      %v785 = vpack.c.b16 %v784, %v784
      %786 = vrot.lane.b32.xlu0 %v785, 24
      %v787 = vpop.permute.xlu0 %786
      %vm789 = vcmask 257216
      %790 = vst.msk [vmem:[%s301] sm:$0xf] %vm789, %v787
      %p791 = scmp.lt.s32.totalorder %s19, 1
      %s792 = scalar_select %p791, %s19, 1
      %p793 = scmp.lt.s32.totalorder %s20, 0
      %s794 = scalar_select %p793, %s20, 0
      %s795 = sadd.s32 %s794, %s792
      %s796 = smul.addr %s795, 4
      %s797 = scalar_lea.vmem %s4, %s796
      // Predicated region
      $region37: #{seq2seq_forward.30} parent=35 // pred_check
        %p798 = pneg %p157
      $region38: #{seq2seq_forward.30} parent=35 // pred_check_branch
        %800 = sbr.rel (%p798) target = $region40
      $region39: #{seq2seq_forward.30} parent=35 // pred_region
        _
      $region40: #{seq2seq_forward.30} parent=35 // pred_fallthru
        _
    $region36: #{seq2seq_forward.30} parent=5 // pred_fallthru
      _
    %p801 = scmp.le.s32.totalorder 2, %s10
    // Predicated region
    $region41: #{seq2seq_forward.30} parent=5 // pred_check
      %p802 = pneg %p801
    $region42: #{seq2seq_forward.30} parent=5 // pred_check_branch
      %804 = sbr.rel (%p802) target = $region44
    $region43: #{seq2seq_forward.30} parent=5 // pred_region
      %s805 = ssub.s32 %s10, 2
      // Predicated region
      $region45: #{seq2seq_forward.30} parent=43 // pred_check
        %p806 = pneg %p163
      $region46: #{seq2seq_forward.30} parent=43 // pred_check_branch
        %808 = sbr.rel (%p806) target = $region48
      $region47: #{seq2seq_forward.30} parent=43 // pred_region
        %p809 = scmp.lt.s32.totalorder %s21, 1
        %s810 = scalar_select %p809, %s21, 1
        %p811 = scmp.lt.s32.totalorder %s22, 0
        %s812 = scalar_select %p811, %s22, 0
        %s813 = sadd.s32 %s812, %s810
        %s814 = smul.addr %s813, 4
        %s815 = scalar_lea.vmem %s4, %s814
      $region48: #{seq2seq_forward.30} parent=43 // pred_fallthru
        _
    $region44: #{seq2seq_forward.30} parent=5 // pred_fallthru
      _
  $region6: #{seq2seq_forward.30} parent=0 // loop_footer
    %s14 = sadd.s32 1, %s10
  $region7: #{seq2seq_forward.30} parent=0 // loop_footer_branch
    %9 = sbr.rel target = $region3
  $region8: #{seq2seq_forward.30} parent=0 // loop_exit
    _

// kernel: seq2seq_forward.53
$region0: #{seq2seq_forward.53}
  #allocation0 [shape = 'u32[]', space=smem, size = 0x4, offset = 0x4, fixed_abs, tag = 'smem constant byte address 0x4 - core index']
  #allocation1 [shape = 'u32[144,128]{1,0:T(1,128)}', space=vmem, size = 0x12000, scoped, tag = 'internal scratch']
  %s0 = inlined_call_operand.vmem [shape: bf16[2,8,32], index: 0, kind: input, shape index: {}]
  %s1 = inlined_call_operand.vmem [shape: bf16[2,32,8], index: 1, kind: input, shape index: {}]
  %s2 = inlined_call_operand.vmem [shape: bf16[2,8,32], index: 2, kind: input, shape index: {}]
  %s3 = inlined_call_operand.vmem [shape: f32[2,1,8], index: 3, kind: input, shape index: {}]
  %s4 = inlined_call_operand.vmem [shape: bf16[2,8,32], index: 4, kind: output, shape index: {0}]
  %s5 = inlined_call_operand.hbm [shape: bf16[2,4,8,8], index: 5, kind: output, shape index: {1}]
  %6 = xla_tuple %s4, %s5
  %s7 = sld [smem:[#allocation0]]
  $region57: #{seq2seq_forward.53} parent=0
    _
  %s9 = ssub.s32 1, %s7
  %s10 = scalar_select 0, %s9, %s7
  $region1: #{seq2seq_forward.53} parent=0
    #allocation2 [shape = 'u8[16384]{0}', space=vmem, size = 0x4000, scoped, tag = 'output window, operand 1']
    #allocation3 [shape = 's32[2]{0}', space=sflag, size = 0x8, scoped, tag = 'scoped memory for seq2seq_forward.53']
    %11 = vsyncpa [#allocation3], 0
    %s12 = scalar_lea.sflag [#allocation3], 1
    %13 = vsyncpa %s12, 0
    loop: start=0, step=1, limit=4
    $region2: #{seq2seq_forward.53} parent=1 // loop_pre_header
      _
    $region3: #{seq2seq_forward.53} parent=1 // loop_header
      %s15 = sphi 0, %s19
      %p16 = scmp.ge.s32.totalorder %s15, 4
      %s22 = sphi 0, %s34
      %s23 = sphi 0, %s30
      %s24 = sphi 0, %s22
      %s25 = sphi 0, %s23
      %s26 = sphi 0, %s24
      %s27 = sphi 0, %s25
      %s39 = sphi 0, %s41
      %s42 = sphi 0, %s39
      %s43 = sphi 0, %s42
      %s59 = sphi 0, %s43
      %s67 = sphi 0, %s69
      %s70 = sphi 0, %s67
      %s71 = sphi 0, %s70
      %s87 = sphi 0, %s71
      %s95 = sphi 0, %s97
      %s98 = sphi 0, %s95
      %s99 = sphi 0, %s98
      %s115 = sphi 0, %s99
      %s121 = sphi 0, %s123
      %s124 = sphi 0, %s121
      %s125 = sphi 0, %s124
      %s141 = sphi 0, %s125
      %s149 = sphi 0, %s151
      %s152 = sphi 0, %s149
      %s153 = sphi 0, %s152
      %s169 = sphi 0, %s153
      %s177 = sphi 0, %s179
      %s180 = sphi 0, %s177
      %s181 = sphi 0, %s180
      %s197 = sphi 0, %s181
    $region4: #{seq2seq_forward.53} parent=1 // loop_header_branch
      %18 = sbr.rel (%p16) target = $region8
    $region5: #{seq2seq_forward.53} parent=1 // loop_body
      %s20 = ssub.s32 %s15, 1
      %s21 = ssub.s32 %s15, 2
      %s28 = sadd.s32 1, %s23
      %p29 = scmp.ge.s32.totalorder %s28, 1
      %s30 = scalar_select %p29, 0, %s28
      %s31 = sadd.s32 1, %s22
      %s32 = scalar_select %p29, %s31, %s22
      %p33 = scmp.ge.s32.totalorder %s32, 2
      %s34 = scalar_select %p33, 0, %s32
      %s35 = ssub.s32 %s22, %s34
      %s36 = ssub.s32 %s23, %s30
      %s37 = sor.u32 %s35, %s36
      %p38 = scmp.eq.s32.totalorder %s37, 0
      %s40 = sadd.s32 %s39, 1
      %s41 = scalar_select %p38, %s39, %s40
      %p44 = pneg %p38
      %p45 = scmp.eq.s32.totalorder %s15, 1
      %p46 = por %p44, %p45
      %p47 = scmp.ne.s32.totalorder %s39, %s42
      %p48 = scmp.eq.s32.totalorder %s15, 0
      %p49 = por %p47, %p48
      %p50 = scmp.ne.s32.totalorder %s39, %s42
      %p51 = scmp.eq.s32.totalorder %s20, 1
      %p52 = por %p50, %p51
      %p53 = scmp.ne.s32.totalorder %s42, %s43
      %p54 = scmp.eq.s32.totalorder %s20, 0
      %p55 = por %p53, %p54
      %p56 = scmp.ne.s32.totalorder %s42, %s43
      %p57 = scmp.eq.s32.totalorder %s21, 1
      %p58 = por %p56, %p57
      %p60 = scmp.ne.s32.totalorder %s43, %s59
      %p61 = scmp.eq.s32.totalorder %s21, 0
      %p62 = por %p60, %p61
      %s63 = ssub.s32 %s22, %s34
      %s64 = ssub.s32 %s23, %s30
      %s65 = sor.u32 %s63, %s64
      %p66 = scmp.eq.s32.totalorder %s65, 0
      %s68 = sadd.s32 %s67, 1
      %s69 = scalar_select %p66, %s67, %s68
      %p72 = pneg %p66
      %p73 = scmp.eq.s32.totalorder %s15, 1
      %p74 = por %p72, %p73
      %p75 = scmp.ne.s32.totalorder %s67, %s70
      %p76 = scmp.eq.s32.totalorder %s15, 0
      %p77 = por %p75, %p76
      %p78 = scmp.ne.s32.totalorder %s67, %s70
      %p79 = scmp.eq.s32.totalorder %s20, 1
      %p80 = por %p78, %p79
      %p81 = scmp.ne.s32.totalorder %s70, %s71
      %p82 = scmp.eq.s32.totalorder %s20, 0
      %p83 = por %p81, %p82
      %p84 = scmp.ne.s32.totalorder %s70, %s71
      %p85 = scmp.eq.s32.totalorder %s21, 1
      %p86 = por %p84, %p85
      %p88 = scmp.ne.s32.totalorder %s71, %s87
      %p89 = scmp.eq.s32.totalorder %s21, 0
      %p90 = por %p88, %p89
      %s91 = ssub.s32 %s22, %s34
      %s92 = ssub.s32 %s23, %s30
      %s93 = sor.u32 %s91, %s92
      %p94 = scmp.eq.s32.totalorder %s93, 0
      %s96 = sadd.s32 %s95, 1
      %s97 = scalar_select %p94, %s95, %s96
      %p100 = pneg %p94
      %p101 = scmp.eq.s32.totalorder %s15, 1
      %p102 = por %p100, %p101
      %p103 = scmp.ne.s32.totalorder %s95, %s98
      %p104 = scmp.eq.s32.totalorder %s15, 0
      %p105 = por %p103, %p104
      %p106 = scmp.ne.s32.totalorder %s95, %s98
      %p107 = scmp.eq.s32.totalorder %s20, 1
      %p108 = por %p106, %p107
      %p109 = scmp.ne.s32.totalorder %s98, %s99
      %p110 = scmp.eq.s32.totalorder %s20, 0
      %p111 = por %p109, %p110
      %p112 = scmp.ne.s32.totalorder %s98, %s99
      %p113 = scmp.eq.s32.totalorder %s21, 1
      %p114 = por %p112, %p113
      %p116 = scmp.ne.s32.totalorder %s99, %s115
      %p117 = scmp.eq.s32.totalorder %s21, 0
      %p118 = por %p116, %p117
      %s119 = ssub.s32 %s22, %s34
      %p120 = scmp.eq.s32.totalorder %s119, 0
      %s122 = sadd.s32 %s121, 1
      %s123 = scalar_select %p120, %s121, %s122
      %p126 = pneg %p120
      %p127 = scmp.eq.s32.totalorder %s15, 1
      %p128 = por %p126, %p127
      %p129 = scmp.ne.s32.totalorder %s121, %s124
      %p130 = scmp.eq.s32.totalorder %s15, 0
      %p131 = por %p129, %p130
      %p132 = scmp.ne.s32.totalorder %s121, %s124
      %p133 = scmp.eq.s32.totalorder %s20, 1
      %p134 = por %p132, %p133
      %p135 = scmp.ne.s32.totalorder %s124, %s125
      %p136 = scmp.eq.s32.totalorder %s20, 0
      %p137 = por %p135, %p136
      %p138 = scmp.ne.s32.totalorder %s124, %s125
      %p139 = scmp.eq.s32.totalorder %s21, 1
      %p140 = por %p138, %p139
      %p142 = scmp.ne.s32.totalorder %s125, %s141
      %p143 = scmp.eq.s32.totalorder %s21, 0
      %p144 = por %p142, %p143
      %s145 = ssub.s32 %s22, %s34
      %s146 = ssub.s32 %s23, %s30
      %s147 = sor.u32 %s145, %s146
      %p148 = scmp.eq.s32.totalorder %s147, 0
      %s150 = sadd.s32 %s149, 1
      %s151 = scalar_select %p148, %s149, %s150
      %p154 = pneg %p148
      %p155 = scmp.eq.s32.totalorder %s15, 1
      %p156 = por %p154, %p155
      %p157 = scmp.ne.s32.totalorder %s149, %s152
      %p158 = scmp.eq.s32.totalorder %s15, 0
      %p159 = por %p157, %p158
      %p160 = scmp.ne.s32.totalorder %s149, %s152
      %p161 = scmp.eq.s32.totalorder %s20, 1
      %p162 = por %p160, %p161
      %p163 = scmp.ne.s32.totalorder %s152, %s153
      %p164 = scmp.eq.s32.totalorder %s20, 0
      %p165 = por %p163, %p164
      %p166 = scmp.ne.s32.totalorder %s152, %s153
      %p167 = scmp.eq.s32.totalorder %s21, 1
      %p168 = por %p166, %p167
      %p170 = scmp.ne.s32.totalorder %s153, %s169
      %p171 = scmp.eq.s32.totalorder %s21, 0
      %p172 = por %p170, %p171
      %s173 = ssub.s32 %s22, %s34
      %s174 = ssub.s32 %s23, %s30
      %s175 = sor.u32 %s173, %s174
      %p176 = scmp.eq.s32.totalorder %s175, 0
      %s178 = sadd.s32 %s177, 1
      %s179 = scalar_select %p176, %s177, %s178
      %p182 = pneg %p176
      %p183 = scmp.eq.s32.totalorder %s15, 1
      %p184 = por %p182, %p183
      %p185 = scmp.ne.s32.totalorder %s177, %s180
      %p186 = scmp.eq.s32.totalorder %s15, 0
      %p187 = por %p185, %p186
      %p188 = scmp.ne.s32.totalorder %s177, %s180
      %p189 = scmp.eq.s32.totalorder %s20, 1
      %p190 = por %p188, %p189
      %p191 = scmp.ne.s32.totalorder %s180, %s181
      %p192 = scmp.eq.s32.totalorder %s20, 0
      %p193 = por %p191, %p192
      %p194 = scmp.ne.s32.totalorder %s180, %s181
      %p195 = scmp.eq.s32.totalorder %s21, 1
      %p196 = por %p194, %p195
      %p198 = scmp.ne.s32.totalorder %s181, %s197
      %p199 = scmp.eq.s32.totalorder %s21, 0
      %p200 = por %p198, %p199
      %p201 = scmp.le.s32.totalorder 1, %s15
      %p202 = scmp.lt.s32.totalorder %s15, 3
      %p203 = pnand %p201, %p202
      %p204 = pneg %p203
      // Predicated region
      $region9: #{seq2seq_forward.53} parent=5 // pred_check
        _
      $region10: #{seq2seq_forward.53} parent=5 // pred_check_branch
        %206 = sbr.rel (%p203) target = $region12
      $region11: #{seq2seq_forward.53} parent=5 // pred_region
        %s207 = ssub.s32 %s15, 1
      $region12: #{seq2seq_forward.53} parent=5 // pred_fallthru
        _
      %p208 = scmp.lt.s32.totalorder %s15, 2
      // Predicated region
      $region13: #{seq2seq_forward.53} parent=5 // pred_check
        %p209 = pneg %p208
      $region14: #{seq2seq_forward.53} parent=5 // pred_check_branch
        %211 = sbr.rel (%p209) target = $region16
      $region15: #{seq2seq_forward.53} parent=5 // pred_region
        // Predicated region
        $region17: #{seq2seq_forward.53} parent=15 // pred_check
          %p212 = pneg %p49
        $region18: #{seq2seq_forward.53} parent=15 // pred_check_branch
          %214 = sbr.rel (%p212) target = $region20
        $region19: #{seq2seq_forward.53} parent=15 // pred_region
          %p215 = scmp.lt.s32.totalorder %s22, 1
          %s216 = scalar_select %p215, %s22, 1
          %p217 = scmp.lt.s32.totalorder %s23, 0
          %s218 = scalar_select %p217, %s23, 0
          %s219 = sadd.s32 %s218, %s216
          %s220 = smul.addr %s219, 4
          %s221 = scalar_lea.vmem %s0, %s220
        $region20: #{seq2seq_forward.53} parent=15 // pred_fallthru
          _
        // Predicated region
        $region21: #{seq2seq_forward.53} parent=15 // pred_check
          %p222 = pneg %p77
        $region22: #{seq2seq_forward.53} parent=15 // pred_check_branch
          %224 = sbr.rel (%p222) target = $region24
        $region23: #{seq2seq_forward.53} parent=15 // pred_region
          %s225 = smul.u32 4, %s23
          %p226 = scmp.lt.s32.totalorder %s22, 1
          %s227 = scalar_select %p226, %s22, 1
          %p228 = scmp.lt.s32.totalorder %s225, 3
          %s229 = scalar_select %p228, %s225, 3
          %s230 = smul.addr %s227, 4
          %s231 = sadd.s32 %s229, %s230
          %s232 = smul.addr %s231, 4
          %s233 = scalar_lea.vmem %s1, %s232
          %s234 = smul.u32 4, %s23
        $region24: #{seq2seq_forward.53} parent=15 // pred_fallthru
          _
        // Predicated region
        $region25: #{seq2seq_forward.53} parent=15 // pred_check
          %p235 = pneg %p105
        $region26: #{seq2seq_forward.53} parent=15 // pred_check_branch
          %237 = sbr.rel (%p235) target = $region28
        $region27: #{seq2seq_forward.53} parent=15 // pred_region
          %p238 = scmp.lt.s32.totalorder %s22, 1
          %s239 = scalar_select %p238, %s22, 1
          %p240 = scmp.lt.s32.totalorder %s23, 0
          %s241 = scalar_select %p240, %s23, 0
          %s242 = sadd.s32 %s241, %s239
          %s243 = smul.addr %s242, 4
          %s244 = scalar_lea.vmem %s2, %s243
        $region28: #{seq2seq_forward.53} parent=15 // pred_fallthru
          _
        // Predicated region
        $region29: #{seq2seq_forward.53} parent=15 // pred_check
          %p245 = pneg %p131
        $region30: #{seq2seq_forward.53} parent=15 // pred_check_branch
          %247 = sbr.rel (%p245) target = $region32
        $region31: #{seq2seq_forward.53} parent=15 // pred_region
          %p248 = scmp.lt.s32.totalorder %s22, 1
          %s249 = scalar_select %p248, %s22, 1
          %s250 = scalar_lea.vmem %s3, %s249
        $region32: #{seq2seq_forward.53} parent=15 // pred_fallthru
          _
      $region16: #{seq2seq_forward.53} parent=5 // pred_fallthru
        _
      %p251 = scmp.le.s32.totalorder 1, %s15
      %p252 = scmp.lt.s32.totalorder %s15, 3
      %p253 = pnand %p251, %p252
      %p254 = pneg %p253
      // Predicated region
      $region33: #{seq2seq_forward.53} parent=5 // pred_check
        _
      $region34: #{seq2seq_forward.53} parent=5 // pred_check_branch
        %256 = sbr.rel (%p253) target = $region36
      $region35: #{seq2seq_forward.53} parent=5 // pred_region
        %s257 = ssub.s32 %s15, 1
        %p258 = scmp.lt.s32.totalorder %s24, 1
        %s259 = scalar_select %p258, %s24, 1
        %p260 = scmp.lt.s32.totalorder %s25, 0
        %s261 = scalar_select %p260, %s25, 0
        %s262 = sadd.s32 %s261, %s259
        %s263 = smul.addr %s262, 4
        %s264 = scalar_lea.vmem %s0, %s263
        %p265 = pneg %p55
        %p266 = pneg %p52
        %s267 = smul.u32 4, %s25
        %p268 = scmp.lt.s32.totalorder %s24, 1
        %s269 = scalar_select %p268, %s24, 1
        %p270 = scmp.lt.s32.totalorder %s267, 3
        %s271 = scalar_select %p270, %s267, 3
        %s272 = smul.addr %s269, 4
        %s273 = sadd.s32 %s271, %s272
        %s274 = smul.addr %s273, 4
        %s275 = scalar_lea.vmem %s1, %s274
        %p276 = pneg %p83
        %p277 = pneg %p80
        %p278 = scmp.lt.s32.totalorder %s24, 1
        %s279 = scalar_select %p278, %s24, 1
        %p280 = scmp.lt.s32.totalorder %s25, 0
        %s281 = scalar_select %p280, %s25, 0
        %s282 = sadd.s32 %s281, %s279
        %s283 = smul.addr %s282, 4
        %s284 = scalar_lea.vmem %s2, %s283
        %p285 = pneg %p111
        %p286 = pneg %p108
        %p287 = scmp.lt.s32.totalorder %s24, 1
        %s288 = scalar_select %p287, %s24, 1
        %s289 = scalar_lea.vmem %s3, %s288
        %p290 = pneg %p137
        %p291 = pneg %p134
        %p292 = pneg %p165
        %p293 = pneg %p162
        %p294 = scmp.lt.s32.totalorder %s24, 1
        %s295 = scalar_select %p294, %s24, 1
        %p296 = scmp.lt.s32.totalorder %s25, 0
        %s297 = scalar_select %p296, %s25, 0
        %s298 = sadd.s32 %s297, %s295
        %s299 = smul.addr %s298, 4
        %s300 = scalar_lea.vmem %s4, %s299
        %p301 = pneg %p193
        %p302 = pneg %p190
        %s303 = sand.u32 %s180, 1
        %s304 = scalar_lea.sflag [#allocation3], %s303
        %s305 = sand.u32 %s180, 1
        %s306 = smul.addr %s305, 16
        %s307 = scalar_lea.vmem [#allocation2], %s306
        %p308 = scmp.lt.s32.totalorder %s24, 1
        %s309 = scalar_select %p308, %s24, 1
        %p310 = scmp.lt.s32.totalorder %s25, 0
        %s311 = scalar_select %p310, %s25, 0
        %s312 = sadd.s32 %s311, %s309
        %s313 = smul.addr %s312, 4
        %s314 = scalar_lea.vmem %s0, %s313
        %s315 = smul.u32 4, %s25
        %p316 = scmp.lt.s32.totalorder %s24, 1
        %s317 = scalar_select %p316, %s24, 1
        %p318 = scmp.lt.s32.totalorder %s315, 3
        %s319 = scalar_select %p318, %s315, 3
        %s320 = smul.addr %s317, 4
        %s321 = sadd.s32 %s319, %s320
        %s322 = smul.addr %s321, 4
        %s323 = scalar_lea.vmem %s1, %s322
        %s324 = smul.u32 4, %s25
        %p325 = scmp.lt.s32.totalorder %s24, 1
        %s326 = scalar_select %p325, %s24, 1
        %p327 = scmp.lt.s32.totalorder %s25, 0
        %s328 = scalar_select %p327, %s25, 0
        %s329 = sadd.s32 %s328, %s326
        %s330 = smul.addr %s329, 4
        %s331 = scalar_lea.vmem %s2, %s330
        %p332 = scmp.lt.s32.totalorder %s24, 1
        %s333 = scalar_select %p332, %s24, 1
        %s334 = scalar_lea.vmem %s3, %s333
        %p335 = scmp.lt.s32.totalorder %s24, 1
        %s336 = scalar_select %p335, %s24, 1
        %p337 = scmp.lt.s32.totalorder %s25, 0
        %s338 = scalar_select %p337, %s25, 0
        %s339 = sadd.s32 %s338, %s336
        %s340 = smul.addr %s339, 4
        %s341 = scalar_lea.vmem %s4, %s340
        %s342 = smul.u32 4, %s25
        %v344 = vld [vmem:[%s334] sm:$0x1]
        %vm345 = vcmp.gt.f32.partialorder %v344, 0.5
        %v346 = vsel %vm345, 1, 0
        %v347 = vlaneseq
        %v348 = vshrl.u32 %v347, 7
        %v349 = vsub.s32 0, %v348
        %v350 = vrot.slane %v346, %v349
        %vm351 = vcmp.eq.s32.totalorder %v350, 1
        %v352 = vld [vmem:[%s314] sm:$0xf]
        %v353 = vld [vmem:[%s323] sm:$0xf]
        %v354 = vld [vmem:[%s323 + $0x4] sm:$0xf]
        %v355 = vld [vmem:[%s323 + $0x8] sm:$0xf]
        %v356 = vld [vmem:[%s323 + $0xc] sm:$0xf]
        %v357 = vld [vmem:[%s331] sm:$0xf]
        %vm358 = vcmask 64512
        %v360 = vsel %vm358, %v352, 0
        %vm362 = vcmask 1043456
        %v364 = vsel %vm362, %v353, 0
        %366 = vmatprep.subr.bf16.mxu0 0
        %367 = vmatpush1.bf16.msra.mxu0 %v364
        %368 = vmatprep.subr.bf16.mxu0 0
        %369 = vmatpush1.bf16.msra.mxu0 0
        %370 = vmatprep.subr.bf16.mxu0 0
        %371 = vmatpush1.bf16.msra.mxu0 0
        %372 = vmatprep.subr.bf16.mxu0 0
        %373 = vmatpush1.bf16.msra.mxu0 0
        %374 = vmatprep.subr.bf16.mxu0 0
        %375 = vmatpush1.bf16.msra.mxu0 0
        %376 = vmatprep.subr.bf16.mxu0 0
        %377 = vmatpush1.bf16.msra.mxu0 0
        %378 = vmatprep.subr.bf16.mxu0 0
        %379 = vmatpush1.bf16.msra.mxu0 0
        %380 = vmatprep.subr.bf16.mxu0 0
        %381 = vmatpush1.bf16.msra.mxu0 0
        %382 = vmatprep.subr.bf16.mxu0 0
        %383 = vmatpush1.bf16.msra.mxu0 0
        %384 = vmatprep.subr.bf16.mxu0 0
        %385 = vmatpush1.bf16.msra.mxu0 0
        %386 = vmatprep.subr.bf16.mxu0 0
        %387 = vmatpush1.bf16.msra.mxu0 0
        %388 = vmatprep.subr.bf16.mxu0 0
        %389 = vmatpush1.bf16.msra.mxu0 0
        %390 = vmatprep.subr.bf16.mxu0 0
        %391 = vmatpush1.bf16.msra.mxu0 0
        %392 = vmatprep.subr.bf16.mxu0 0
        %393 = vmatpush1.bf16.msra.mxu0 0
        %394 = vmatprep.subr.bf16.mxu0 0
        %395 = vmatpush1.bf16.msra.mxu0 0
        %396 = vmatprep.subr.bf16.mxu0 0
        %397 = vmatpush1.bf16.msra.mxu0 0
        %398 = vmatprep.mubr.bf16.mxu0 0
        %399 = vmatmul.mubr.bf16.gmra.mrb[0].mxu0 %v360
        %v400 = vpop.f32.mrb[0].mxu0
        %v401 = vadd.f32 0.0, %v400
        %v402 = vpop.f32.mrb[0].mxu0
        %v403 = vpop.f32.mrb[0].mxu0
        %v404 = vpop.f32.mrb[0].mxu0
        %405 = vdwg.mxu0
        %v406 = vmul.f32 %v401, 0.35355338
        %v407 = vsel %vm351, %v406, -1e+10
        %v408 = vsel %vm358, %v407, -inf
        %409 = vmax.xlane.f32.xlu0 %v408
        %v410 = vpop.xlane.xlu0 %409
        %v411 = vsub.f32 %v407, %v410
        %v412 = vmul.f32 %v411, 1.442695
        %v413 = vpow.pop %v412
        %v414 = vsel %vm358, %v413, 0.0
        %415 = vadd.xlane.f32.xlu0 %v414
        %v416 = vpop.xlane.xlu0 %415
        %v417 = vrcp.pop %v416
        %v418 = vpack.c.bf16 %v413, %v413
        %v420 = vsel %vm358, %v418, 0
        %v423 = vsel %vm362, %v357, 0
        %425 = vmatprep.subr.bf16.mxu0 0
        %426 = vmatpush1.bf16.msra.mxu0 %v423
        %427 = vmatprep.subr.bf16.mxu0 0
        %428 = vmatpush1.bf16.msra.mxu0 0
        %429 = vmatprep.subr.bf16.mxu0 0
        %430 = vmatpush1.bf16.msra.mxu0 0
        %431 = vmatprep.subr.bf16.mxu0 0
        %432 = vmatpush1.bf16.msra.mxu0 0
        %433 = vmatprep.subr.bf16.mxu0 0
        %434 = vmatpush1.bf16.msra.mxu0 0
        %435 = vmatprep.subr.bf16.mxu0 0
        %436 = vmatpush1.bf16.msra.mxu0 0
        %437 = vmatprep.subr.bf16.mxu0 0
        %438 = vmatpush1.bf16.msra.mxu0 0
        %439 = vmatprep.subr.bf16.mxu0 0
        %440 = vmatpush1.bf16.msra.mxu0 0
        %441 = vmatprep.subr.bf16.mxu0 0
        %442 = vmatpush1.bf16.msra.mxu0 0
        %443 = vmatprep.subr.bf16.mxu0 0
        %444 = vmatpush1.bf16.msra.mxu0 0
        %445 = vmatprep.subr.bf16.mxu0 0
        %446 = vmatpush1.bf16.msra.mxu0 0
        %447 = vmatprep.subr.bf16.mxu0 0
        %448 = vmatpush1.bf16.msra.mxu0 0
        %449 = vmatprep.subr.bf16.mxu0 0
        %450 = vmatpush1.bf16.msra.mxu0 0
        %451 = vmatprep.subr.bf16.mxu0 0
        %452 = vmatpush1.bf16.msra.mxu0 0
        %453 = vmatprep.subr.bf16.mxu0 0
        %454 = vmatpush1.bf16.msra.mxu0 0
        %455 = vmatprep.subr.bf16.mxu0 0
        %456 = vmatpush1.bf16.msra.mxu0 0
        %457 = vmatprep.mubr.bf16.mxu0 0
        %458 = vmatmul.mubr.bf16.gmra.mrb[0].mxu0 %v420
        %v459 = vpop.f32.mrb[0].mxu0
        %v460 = vadd.f32 0.0, %v459
        %v461 = vpop.f32.mrb[0].mxu0
        %v462 = vpop.f32.mrb[0].mxu0
        %v463 = vpop.f32.mrb[0].mxu0
        %464 = vdwg.mxu0
        %v465 = vmul.f32 %v460, %v417
        %v466 = vpack.c.bf16 %v465, %v465
        %vm467 = vcmask 60416
        %468 = vst.msk [vmem:[%s341] sm:$0xf] %vm467, %v466
        %v469 = vmul.f32 %v413, %v417
        %v470 = vpack.c.bf16 %v469, %v469
        %471 = vst.msk [vmem:[%s307] sm:$0xf] %vm467, %v470
        %v473 = vunpack.c.l.b16 %v352
        %v474 = vpack.c.b16 %v473, %v473
        %475 = vrot.lane.b32.xlu0 %v474, 120
        %v476 = vpop.permute.xlu0 %475
        %v478 = vsel %vm358, %v476, 0
        %v481 = vsel %vm362, %v354, 0
        %483 = vmatprep.subr.bf16.mxu0 0
        %484 = vmatpush1.bf16.msra.mxu0 %v481
        %485 = vmatprep.subr.bf16.mxu0 0
        %486 = vmatpush1.bf16.msra.mxu0 0
        %487 = vmatprep.subr.bf16.mxu0 0
        %488 = vmatpush1.bf16.msra.mxu0 0
        %489 = vmatprep.subr.bf16.mxu0 0
        %490 = vmatpush1.bf16.msra.mxu0 0
        %491 = vmatprep.subr.bf16.mxu0 0
        %492 = vmatpush1.bf16.msra.mxu0 0
        %493 = vmatprep.subr.bf16.mxu0 0
        %494 = vmatpush1.bf16.msra.mxu0 0
        %495 = vmatprep.subr.bf16.mxu0 0
        %496 = vmatpush1.bf16.msra.mxu0 0
        %497 = vmatprep.subr.bf16.mxu0 0
        %498 = vmatpush1.bf16.msra.mxu0 0
        %499 = vmatprep.subr.bf16.mxu0 0
        %500 = vmatpush1.bf16.msra.mxu0 0
        %501 = vmatprep.subr.bf16.mxu0 0
        %502 = vmatpush1.bf16.msra.mxu0 0
        %503 = vmatprep.subr.bf16.mxu0 0
        %504 = vmatpush1.bf16.msra.mxu0 0
        %505 = vmatprep.subr.bf16.mxu0 0
        %506 = vmatpush1.bf16.msra.mxu0 0
        %507 = vmatprep.subr.bf16.mxu0 0
        %508 = vmatpush1.bf16.msra.mxu0 0
        %509 = vmatprep.subr.bf16.mxu0 0
        %510 = vmatpush1.bf16.msra.mxu0 0
        %511 = vmatprep.subr.bf16.mxu0 0
        %512 = vmatpush1.bf16.msra.mxu0 0
        %513 = vmatprep.subr.bf16.mxu0 0
        %514 = vmatpush1.bf16.msra.mxu0 0
        %515 = vmatprep.mubr.bf16.mxu0 0
        %516 = vmatmul.mubr.bf16.gmra.mrb[0].mxu0 %v478
        %v517 = vpop.f32.mrb[0].mxu0
        %v518 = vadd.f32 0.0, %v517
        %v519 = vpop.f32.mrb[0].mxu0
        %v520 = vpop.f32.mrb[0].mxu0
        %v521 = vpop.f32.mrb[0].mxu0
        %522 = vdwg.mxu0
        %v523 = vmul.f32 %v518, 0.35355338
        %v524 = vsel %vm351, %v523, -1e+10
        %v525 = vsel %vm358, %v524, -inf
        %526 = vmax.xlane.f32.xlu0 %v525
        %v527 = vpop.xlane.xlu0 %526
        %v528 = vsub.f32 %v524, %v527
        %v529 = vmul.f32 %v528, 1.442695
        %v530 = vpow.pop %v529
        %v531 = vsel %vm358, %v530, 0.0
        %532 = vadd.xlane.f32.xlu0 %v531
        %v533 = vpop.xlane.xlu0 %532
        %v534 = vrcp.pop %v533
        %v535 = vpack.c.bf16 %v530, %v530
        %v537 = vunpack.c.l.b16 %v357
        %v538 = vpack.c.b16 %v537, %v537
        %539 = vrot.lane.b32.xlu0 %v538, 120
        %v540 = vpop.permute.xlu0 %539
        %v542 = vsel %vm358, %v535, 0
        %v545 = vsel %vm362, %v540, 0
        %547 = vmatprep.subr.bf16.mxu0 0
        %548 = vmatpush1.bf16.msra.mxu0 %v545
        %549 = vmatprep.subr.bf16.mxu0 0
        %550 = vmatpush1.bf16.msra.mxu0 0
        %551 = vmatprep.subr.bf16.mxu0 0
        %552 = vmatpush1.bf16.msra.mxu0 0
        %553 = vmatprep.subr.bf16.mxu0 0
        %554 = vmatpush1.bf16.msra.mxu0 0
        %555 = vmatprep.subr.bf16.mxu0 0
        %556 = vmatpush1.bf16.msra.mxu0 0
        %557 = vmatprep.subr.bf16.mxu0 0
        %558 = vmatpush1.bf16.msra.mxu0 0
        %559 = vmatprep.subr.bf16.mxu0 0
        %560 = vmatpush1.bf16.msra.mxu0 0
        %561 = vmatprep.subr.bf16.mxu0 0
        %562 = vmatpush1.bf16.msra.mxu0 0
        %563 = vmatprep.subr.bf16.mxu0 0
        %564 = vmatpush1.bf16.msra.mxu0 0
        %565 = vmatprep.subr.bf16.mxu0 0
        %566 = vmatpush1.bf16.msra.mxu0 0
        %567 = vmatprep.subr.bf16.mxu0 0
        %568 = vmatpush1.bf16.msra.mxu0 0
        %569 = vmatprep.subr.bf16.mxu0 0
        %570 = vmatpush1.bf16.msra.mxu0 0
        %571 = vmatprep.subr.bf16.mxu0 0
        %572 = vmatpush1.bf16.msra.mxu0 0
        %573 = vmatprep.subr.bf16.mxu0 0
        %574 = vmatpush1.bf16.msra.mxu0 0
        %575 = vmatprep.subr.bf16.mxu0 0
        %576 = vmatpush1.bf16.msra.mxu0 0
        %577 = vmatprep.subr.bf16.mxu0 0
        %578 = vmatpush1.bf16.msra.mxu0 0
        %579 = vmatprep.mubr.bf16.mxu0 0
        %580 = vmatmul.mubr.bf16.gmra.mrb[0].mxu0 %v542
        %v581 = vpop.f32.mrb[0].mxu0
        %v582 = vadd.f32 0.0, %v581
        %v583 = vpop.f32.mrb[0].mxu0
        %v584 = vpop.f32.mrb[0].mxu0
        %v585 = vpop.f32.mrb[0].mxu0
        %586 = vdwg.mxu0
        %v587 = vmul.f32 %v582, %v534
        %v588 = vpack.c.bf16 %v587, %v587
        %v590 = vunpack.c.l.b16 %v588
        %v591 = vpack.c.b16 %v590, %v590
        %592 = vrot.lane.b32.xlu0 %v591, 8
        %v593 = vpop.permute.xlu0 %592
        %vm595 = vcmask 126016
        %596 = vst.msk [vmem:[%s341] sm:$0xf] %vm595, %v593
        %v597 = vmul.f32 %v530, %v534
        %v598 = vpack.c.bf16 %v597, %v597
        %s599 = scalar_lea.vmem %s307, 4 [#allocation2]
        %600 = vst.msk [vmem:[%s599] sm:$0xf] %vm467, %v598
        %601 = vrot.lane.b32.xlu0 %v474, 112
        %v602 = vpop.permute.xlu0 %601
        %v604 = vsel %vm358, %v602, 0
        %v607 = vsel %vm362, %v355, 0
        %609 = vmatprep.subr.bf16.mxu0 0
        %610 = vmatpush1.bf16.msra.mxu0 %v607
        %611 = vmatprep.subr.bf16.mxu0 0
        %612 = vmatpush1.bf16.msra.mxu0 0
        %613 = vmatprep.subr.bf16.mxu0 0
        %614 = vmatpush1.bf16.msra.mxu0 0
        %615 = vmatprep.subr.bf16.mxu0 0
        %616 = vmatpush1.bf16.msra.mxu0 0
        %617 = vmatprep.subr.bf16.mxu0 0
        %618 = vmatpush1.bf16.msra.mxu0 0
        %619 = vmatprep.subr.bf16.mxu0 0
        %620 = vmatpush1.bf16.msra.mxu0 0
        %621 = vmatprep.subr.bf16.mxu0 0
        %622 = vmatpush1.bf16.msra.mxu0 0
        %623 = vmatprep.subr.bf16.mxu0 0
        %624 = vmatpush1.bf16.msra.mxu0 0
        %625 = vmatprep.subr.bf16.mxu0 0
        %626 = vmatpush1.bf16.msra.mxu0 0
        %627 = vmatprep.subr.bf16.mxu0 0
        %628 = vmatpush1.bf16.msra.mxu0 0
        %629 = vmatprep.subr.bf16.mxu0 0
        %630 = vmatpush1.bf16.msra.mxu0 0
        %631 = vmatprep.subr.bf16.mxu0 0
        %632 = vmatpush1.bf16.msra.mxu0 0
        %633 = vmatprep.subr.bf16.mxu0 0
        %634 = vmatpush1.bf16.msra.mxu0 0
        %635 = vmatprep.subr.bf16.mxu0 0
        %636 = vmatpush1.bf16.msra.mxu0 0
        %637 = vmatprep.subr.bf16.mxu0 0
        %638 = vmatpush1.bf16.msra.mxu0 0
        %639 = vmatprep.subr.bf16.mxu0 0
        %640 = vmatpush1.bf16.msra.mxu0 0
        %641 = vmatprep.mubr.bf16.mxu0 0
        %642 = vmatmul.mubr.bf16.gmra.mrb[0].mxu0 %v604
        %v643 = vpop.f32.mrb[0].mxu0
        %v644 = vadd.f32 0.0, %v643
        %v645 = vpop.f32.mrb[0].mxu0
        %v646 = vpop.f32.mrb[0].mxu0
        %v647 = vpop.f32.mrb[0].mxu0
        %648 = vdwg.mxu0
        %v649 = vmul.f32 %v644, 0.35355338
        %v650 = vsel %vm351, %v649, -1e+10
        %v651 = vsel %vm358, %v650, -inf
        %652 = vmax.xlane.f32.xlu0 %v651
        %v653 = vpop.xlane.xlu0 %652
        %v654 = vsub.f32 %v650, %v653
        %v655 = vmul.f32 %v654, 1.442695
        %v656 = vpow.pop %v655
        %v657 = vsel %vm358, %v656, 0.0
        %658 = vadd.xlane.f32.xlu0 %v657
        %v659 = vpop.xlane.xlu0 %658
        %v660 = vrcp.pop %v659
        %v661 = vpack.c.bf16 %v656, %v656
        %662 = vrot.lane.b32.xlu0 %v538, 112
        %v663 = vpop.permute.xlu0 %662
        %v665 = vsel %vm358, %v661, 0
        %v668 = vsel %vm362, %v663, 0
        %670 = vmatprep.subr.bf16.mxu0 0
        %671 = vmatpush1.bf16.msra.mxu0 %v668
        %672 = vmatprep.subr.bf16.mxu0 0
        %673 = vmatpush1.bf16.msra.mxu0 0
        %674 = vmatprep.subr.bf16.mxu0 0
        %675 = vmatpush1.bf16.msra.mxu0 0
        %676 = vmatprep.subr.bf16.mxu0 0
        %677 = vmatpush1.bf16.msra.mxu0 0
        %678 = vmatprep.subr.bf16.mxu0 0
        %679 = vmatpush1.bf16.msra.mxu0 0
        %680 = vmatprep.subr.bf16.mxu0 0
        %681 = vmatpush1.bf16.msra.mxu0 0
        %682 = vmatprep.subr.bf16.mxu0 0
        %683 = vmatpush1.bf16.msra.mxu0 0
        %684 = vmatprep.subr.bf16.mxu0 0
        %685 = vmatpush1.bf16.msra.mxu0 0
        %686 = vmatprep.subr.bf16.mxu0 0
        %687 = vmatpush1.bf16.msra.mxu0 0
        %688 = vmatprep.subr.bf16.mxu0 0
        %689 = vmatpush1.bf16.msra.mxu0 0
        %690 = vmatprep.subr.bf16.mxu0 0
        %691 = vmatpush1.bf16.msra.mxu0 0
        %692 = vmatprep.subr.bf16.mxu0 0
        %693 = vmatpush1.bf16.msra.mxu0 0
        %694 = vmatprep.subr.bf16.mxu0 0
        %695 = vmatpush1.bf16.msra.mxu0 0
        %696 = vmatprep.subr.bf16.mxu0 0
        %697 = vmatpush1.bf16.msra.mxu0 0
        %698 = vmatprep.subr.bf16.mxu0 0
        %699 = vmatpush1.bf16.msra.mxu0 0
        %700 = vmatprep.subr.bf16.mxu0 0
        %701 = vmatpush1.bf16.msra.mxu0 0
        %702 = vmatprep.mubr.bf16.mxu0 0
        %703 = vmatmul.mubr.bf16.gmra.mrb[0].mxu0 %v665
        %v704 = vpop.f32.mrb[0].mxu0
        %v705 = vadd.f32 0.0, %v704
        %v706 = vpop.f32.mrb[0].mxu0
        %v707 = vpop.f32.mrb[0].mxu0
        %v708 = vpop.f32.mrb[0].mxu0
        %709 = vdwg.mxu0
        %v710 = vmul.f32 %v705, %v660
        %v711 = vpack.c.bf16 %v710, %v710
        %v713 = vunpack.c.l.b16 %v711
        %v714 = vpack.c.b16 %v713, %v713
        %715 = vrot.lane.b32.xlu0 %v714, 16
        %v716 = vpop.permute.xlu0 %715
        %vm718 = vcmask 191616
        %719 = vst.msk [vmem:[%s341] sm:$0xf] %vm718, %v716
        %v720 = vmul.f32 %v656, %v660
        %v721 = vpack.c.bf16 %v720, %v720
        %s722 = scalar_lea.vmem %s307, 8 [#allocation2]
        %723 = vst.msk [vmem:[%s722] sm:$0xf] %vm467, %v721
        %724 = vrot.lane.b32.xlu0 %v474, 104
        %v725 = vpop.permute.xlu0 %724
        %v727 = vsel %vm358, %v725, 0
        %v730 = vsel %vm362, %v356, 0
        %732 = vmatprep.subr.bf16.mxu0 0
        %733 = vmatpush1.bf16.msra.mxu0 %v730
        %734 = vmatprep.subr.bf16.mxu0 0
        %735 = vmatpush1.bf16.msra.mxu0 0
        %736 = vmatprep.subr.bf16.mxu0 0
        %737 = vmatpush1.bf16.msra.mxu0 0
        %738 = vmatprep.subr.bf16.mxu0 0
        %739 = vmatpush1.bf16.msra.mxu0 0
        %740 = vmatprep.subr.bf16.mxu0 0
        %741 = vmatpush1.bf16.msra.mxu0 0
        %742 = vmatprep.subr.bf16.mxu0 0
        %743 = vmatpush1.bf16.msra.mxu0 0
        %744 = vmatprep.subr.bf16.mxu0 0
        %745 = vmatpush1.bf16.msra.mxu0 0
        %746 = vmatprep.subr.bf16.mxu0 0
        %747 = vmatpush1.bf16.msra.mxu0 0
        %748 = vmatprep.subr.bf16.mxu0 0
        %749 = vmatpush1.bf16.msra.mxu0 0
        %750 = vmatprep.subr.bf16.mxu0 0
        %751 = vmatpush1.bf16.msra.mxu0 0
        %752 = vmatprep.subr.bf16.mxu0 0
        %753 = vmatpush1.bf16.msra.mxu0 0
        %754 = vmatprep.subr.bf16.mxu0 0
        %755 = vmatpush1.bf16.msra.mxu0 0
        %756 = vmatprep.subr.bf16.mxu0 0
        %757 = vmatpush1.bf16.msra.mxu0 0
        %758 = vmatprep.subr.bf16.mxu0 0
        %759 = vmatpush1.bf16.msra.mxu0 0
        %760 = vmatprep.subr.bf16.mxu0 0
        %761 = vmatpush1.bf16.msra.mxu0 0
        %762 = vmatprep.subr.bf16.mxu0 0
        %763 = vmatpush1.bf16.msra.mxu0 0
        %764 = vmatprep.mubr.bf16.mxu0 0
        %765 = vmatmul.mubr.bf16.gmra.mrb[0].mxu0 %v727
        %v766 = vpop.f32.mrb[0].mxu0
        %v767 = vadd.f32 0.0, %v766
        %v768 = vpop.f32.mrb[0].mxu0
        %v769 = vpop.f32.mrb[0].mxu0
        %v770 = vpop.f32.mrb[0].mxu0
        %771 = vdwg.mxu0
        %v772 = vmul.f32 %v767, 0.35355338
        %v773 = vsel %vm351, %v772, -1e+10
        %v774 = vsel %vm358, %v773, -inf
        %775 = vmax.xlane.f32.xlu0 %v774
        %v776 = vpop.xlane.xlu0 %775
        %v777 = vsub.f32 %v773, %v776
        %v778 = vmul.f32 %v777, 1.442695
        %v779 = vpow.pop %v778
        %v780 = vsel %vm358, %v779, 0.0
        %781 = vadd.xlane.f32.xlu0 %v780
        %v782 = vpop.xlane.xlu0 %781
        %v783 = vrcp.pop %v782
        %v784 = vpack.c.bf16 %v779, %v779
        %785 = vrot.lane.b32.xlu0 %v538, 104
        %v786 = vpop.permute.xlu0 %785
        %v788 = vsel %vm358, %v784, 0
        %v791 = vsel %vm362, %v786, 0
        %793 = vmatprep.subr.bf16.mxu0 0
        %794 = vmatpush1.bf16.msra.mxu0 %v791
        %795 = vmatprep.subr.bf16.mxu0 0
        %796 = vmatpush1.bf16.msra.mxu0 0
        %797 = vmatprep.subr.bf16.mxu0 0
        %798 = vmatpush1.bf16.msra.mxu0 0
        %799 = vmatprep.subr.bf16.mxu0 0
        %800 = vmatpush1.bf16.msra.mxu0 0
        %801 = vmatprep.subr.bf16.mxu0 0
        %802 = vmatpush1.bf16.msra.mxu0 0
        %803 = vmatprep.subr.bf16.mxu0 0
        %804 = vmatpush1.bf16.msra.mxu0 0
        %805 = vmatprep.subr.bf16.mxu0 0
        %806 = vmatpush1.bf16.msra.mxu0 0
        %807 = vmatprep.subr.bf16.mxu0 0
        %808 = vmatpush1.bf16.msra.mxu0 0
        %809 = vmatprep.subr.bf16.mxu0 0
        %810 = vmatpush1.bf16.msra.mxu0 0
        %811 = vmatprep.subr.bf16.mxu0 0
        %812 = vmatpush1.bf16.msra.mxu0 0
        %813 = vmatprep.subr.bf16.mxu0 0
        %814 = vmatpush1.bf16.msra.mxu0 0
        %815 = vmatprep.subr.bf16.mxu0 0
        %816 = vmatpush1.bf16.msra.mxu0 0
        %817 = vmatprep.subr.bf16.mxu0 0
        %818 = vmatpush1.bf16.msra.mxu0 0
        %819 = vmatprep.subr.bf16.mxu0 0
        %820 = vmatpush1.bf16.msra.mxu0 0
        %821 = vmatprep.subr.bf16.mxu0 0
        %822 = vmatpush1.bf16.msra.mxu0 0
        %823 = vmatprep.subr.bf16.mxu0 0
        %824 = vmatpush1.bf16.msra.mxu0 0
        %825 = vmatprep.mubr.bf16.mxu0 0
        %826 = vmatmul.mubr.bf16.gmra.mrb[0].mxu0 %v788
        %v827 = vpop.f32.mrb[0].mxu0
        %v828 = vadd.f32 0.0, %v827
        %v829 = vpop.f32.mrb[0].mxu0
        %v830 = vpop.f32.mrb[0].mxu0
        %v831 = vpop.f32.mrb[0].mxu0
        %832 = vdwg.mxu0
        %v833 = vmul.f32 %v828, %v783
        %v834 = vpack.c.bf16 %v833, %v833
        %v836 = vunpack.c.l.b16 %v834
        %v837 = vpack.c.b16 %v836, %v836
        %838 = vrot.lane.b32.xlu0 %v837, 24
        %v839 = vpop.permute.xlu0 %838
        %vm841 = vcmask 257216
        %842 = vst.msk [vmem:[%s341] sm:$0xf] %vm841, %v839
        %v843 = vmul.f32 %v779, %v783
        %v844 = vpack.c.bf16 %v843, %v843
        %s845 = scalar_lea.vmem %s307, 12 [#allocation2]
        %846 = vst.msk [vmem:[%s845] sm:$0xf] %vm467, %v844
        %p847 = scmp.lt.s32.totalorder %s24, 1
        %s848 = scalar_select %p847, %s24, 1
        %p849 = scmp.lt.s32.totalorder %s25, 0
        %s850 = scalar_select %p849, %s25, 0
        %s851 = sadd.s32 %s850, %s848
        %s852 = smul.addr %s851, 4
        %s853 = scalar_lea.vmem %s4, %s852
        %s854 = sand.u32 %s180, 1
        %s855 = scalar_lea.sflag [#allocation3], %s854
        %s856 = sand.u32 %s180, 1
        %s857 = smul.addr %s856, 16
        %s858 = scalar_lea.vmem [#allocation2], %s857
        // Predicated region
        $region37: #{seq2seq_forward.53} parent=35 // pred_check
          %p859 = pneg %p162
        $region38: #{seq2seq_forward.53} parent=35 // pred_check_branch
          %861 = sbr.rel (%p859) target = $region40
        $region39: #{seq2seq_forward.53} parent=35 // pred_region
          _
        $region40: #{seq2seq_forward.53} parent=35 // pred_fallthru
          _
        // Predicated region
        $region41: #{seq2seq_forward.53} parent=35 // pred_check
          %p862 = pneg %p190
        $region42: #{seq2seq_forward.53} parent=35 // pred_check_branch
          %864 = sbr.rel (%p862) target = $region44
        $region43: #{seq2seq_forward.53} parent=35 // pred_region
          %s865 = smul.u32 4, %s25
          %s867 = ssub.s32 256, 256
          %868 = vsyncadd %s855, %s867
          %s869 = smul.addr %s24, 4
          %s870 = sadd.s32 %s865, %s869
          %s871 = smul.addr %s870, 64
          %s872 = scalar_lea.hbm %s5, %s871
          %s873 = sshll.u32 %s858, 4
          %s874 = int_to_ptr.vmem [resolvable:$true] %s873
          %879 = dma.vmem_to_hbm [thread:$0]  %s874, 256, %s872, %s855, 64, 64, 4
        $region44: #{seq2seq_forward.53} parent=35 // pred_fallthru
          _
      $region36: #{seq2seq_forward.53} parent=5 // pred_fallthru
        _
      %p880 = scmp.le.s32.totalorder 2, %s15
      // Predicated region
      $region45: #{seq2seq_forward.53} parent=5 // pred_check
        %p881 = pneg %p880
      $region46: #{seq2seq_forward.53} parent=5 // pred_check_branch
        %883 = sbr.rel (%p881) target = $region48
      $region47: #{seq2seq_forward.53} parent=5 // pred_region
        %s884 = ssub.s32 %s15, 2
        // Predicated region
        $region49: #{seq2seq_forward.53} parent=47 // pred_check
          %p885 = pneg %p168
        $region50: #{seq2seq_forward.53} parent=47 // pred_check_branch
          %887 = sbr.rel (%p885) target = $region52
        $region51: #{seq2seq_forward.53} parent=47 // pred_region
          %p888 = scmp.lt.s32.totalorder %s26, 1
          %s889 = scalar_select %p888, %s26, 1
          %p890 = scmp.lt.s32.totalorder %s27, 0
          %s891 = scalar_select %p890, %s27, 0
          %s892 = sadd.s32 %s891, %s889
          %s893 = smul.addr %s892, 4
          %s894 = scalar_lea.vmem %s4, %s893
        $region52: #{seq2seq_forward.53} parent=47 // pred_fallthru
          _
        // Predicated region
        $region53: #{seq2seq_forward.53} parent=47 // pred_check
          %p895 = pneg %p196
        $region54: #{seq2seq_forward.53} parent=47 // pred_check_branch
          %897 = sbr.rel (%p895) target = $region56
        $region55: #{seq2seq_forward.53} parent=47 // pred_region
          %s898 = sand.u32 %s181, 1
          %s899 = scalar_lea.sflag [#allocation3], %s898
          %s900 = sand.u32 %s181, 1
          %s901 = smul.addr %s900, 16
          %s902 = scalar_lea.vmem [#allocation2], %s901
          %903 = dma.done %s899, 256
        $region56: #{seq2seq_forward.53} parent=47 // pred_fallthru
          _
      $region48: #{seq2seq_forward.53} parent=5 // pred_fallthru
        _
    $region6: #{seq2seq_forward.53} parent=1 // loop_footer
      %s19 = sadd.s32 1, %s15
    $region7: #{seq2seq_forward.53} parent=1 // loop_footer_branch
      %14 = sbr.rel target = $region3
    $region8: #{seq2seq_forward.53} parent=1 // loop_exit
      _
    %904 = vsyncpa [#allocation3], 1
    %s905 = scalar_lea.sflag [#allocation3], 1
    %906 = vsyncpa %s905, 1

// kernel: seq2seq_forward.57
$region0: #{seq2seq_forward.57}
  #allocation0 [shape = 'u32[]', space=smem, size = 0x4, offset = 0x4, fixed_abs, tag = 'smem constant byte address 0x4 - core index']
  #allocation1 [shape = 'u32[144,128]{1,0:T(1,128)}', space=vmem, size = 0x12000, scoped, tag = 'internal scratch']
  #allocation2 [shape = 'f32[16,16]{1,0:T(8,128)}', space=vmem, size = 0x2000, scoped, tag = 'scratch operand']
  %s0 = inlined_call_operand.vmem [shape: bf16[16,32], index: 0, kind: input, shape index: {}]
  %s1 = inlined_call_operand.vmem [shape: bf16[32,16], index: 1, kind: input, shape index: {}]
  %s2 = inlined_call_operand.vmem [shape: f32[1,16], index: 2, kind: input, shape index: {}]
  %s3 = inlined_call_operand.hbm [shape: f32[16,16], index: 3, kind: output, shape index: {}]
  %s4 = sld [smem:[#allocation0]]
  $region30: #{seq2seq_forward.57} parent=0
    _
  %s6 = ssub.s32 1, %s4
  %s7 = scalar_select 0, %s6, %s4
  $region1: #{seq2seq_forward.57} parent=0
    #allocation3 [shape = 'u8[8192]{0}', space=vmem, size = 0x2000, scoped, tag = 'output window, operand 0, single buffered']
    #allocation4 [shape = 's32[1]{0}', space=sflag, size = 0x4, scoped, tag = 'scoped memory for seq2seq_forward.57']
    %8 = vsyncpa [#allocation4], 0
    // Predicated region
    $region2: #{seq2seq_forward.57} parent=1 // pred_check
      _
    $region3: #{seq2seq_forward.57} parent=1 // pred_check_branch
      %10 = sbr.rel (0) target = $region5
    $region4: #{seq2seq_forward.57} parent=1 // pred_region
      _
    $region5: #{seq2seq_forward.57} parent=1 // pred_fallthru
      _
    // Predicated region
    $region6: #{seq2seq_forward.57} parent=1 // pred_check
      _
    $region7: #{seq2seq_forward.57} parent=1 // pred_check_branch
      %12 = sbr.rel (0) target = $region9
    $region8: #{seq2seq_forward.57} parent=1 // pred_region
      _
    $region9: #{seq2seq_forward.57} parent=1 // pred_fallthru
      _
    // Predicated region
    $region10: #{seq2seq_forward.57} parent=1 // pred_check
      _
    $region11: #{seq2seq_forward.57} parent=1 // pred_check_branch
      %14 = sbr.rel (0) target = $region13
    $region12: #{seq2seq_forward.57} parent=1 // pred_region
      _
    $region13: #{seq2seq_forward.57} parent=1 // pred_fallthru
      _
    %p16 = scmp.eq.s32.totalorder 0, 0
    // Predicated region
    $region14: #{seq2seq_forward.57} parent=1 // pred_check
      %p17 = pneg %p16
    $region15: #{seq2seq_forward.57} parent=1 // pred_check_branch
      %19 = sbr.rel (%p17) target = $region17
    $region16: #{seq2seq_forward.57} parent=1 // pred_region
      %vm20 = vcmask 130048
      %21 = vst.msk [vmem:[#allocation2] sm:$0xff] %vm20, 0.0
      %22 = vst.msk [vmem:[#allocation2 + $0x8] sm:$0xff] %vm20, 0.0
    $region17: #{seq2seq_forward.57} parent=1 // pred_fallthru
      _
    %v23 = vld [vmem:[#allocation2] sm:$0xff]
    %v24 = vld [vmem:[#allocation2 + $0x8] sm:$0xff]
    %v25 = vld [vmem:[%s0] sm:$0xf]
    %v26 = vld [vmem:[%s0 + $0x4] sm:$0xf]
    %v27 = vld [vmem:[%s1] sm:$0xf]
    %v28 = vld [vmem:[%s1 + $0x4] sm:$0xf]
    %v29 = vld [vmem:[%s1 + $0x8] sm:$0xf]
    %v30 = vld [vmem:[%s1 + $0xc] sm:$0xf]
    %v33 = vunpack.c.l.b16 %v25
    %v34 = vunpack.c.l.b16 %v26
    %v35 = vpack.c.b16 %v34, %v33
    %v40 = vunpack.c.l.b16 %v27
    %v41 = vunpack.c.l.b16 %v28
    %v42 = vunpack.c.l.b16 %v29
    %v43 = vunpack.c.l.b16 %v30
    %v44 = vpack.c.b16 %v41, %v40
    %v45 = vpack.c.b16 %v43, %v42
    %vm48 = vcmask 261120
    %v50 = vsel %vm48, %v35, 0
    %52 = vmatprep.subr.bf16.mxu0 0
    %53 = vmatpush1.bf16.msra.mxu0 %v44
    %54 = vmatprep.subr.bf16.mxu0 0
    %55 = vmatpush1.bf16.msra.mxu0 %v45
    %56 = vmatprep.subr.bf16.mxu0 0
    %57 = vmatpush1.bf16.msra.mxu0 0
    %58 = vmatprep.subr.bf16.mxu0 0
    %59 = vmatpush1.bf16.msra.mxu0 0
    %60 = vmatprep.subr.bf16.mxu0 0
    %61 = vmatpush1.bf16.msra.mxu0 0
    %62 = vmatprep.subr.bf16.mxu0 0
    %63 = vmatpush1.bf16.msra.mxu0 0
    %64 = vmatprep.subr.bf16.mxu0 0
    %65 = vmatpush1.bf16.msra.mxu0 0
    %66 = vmatprep.subr.bf16.mxu0 0
    %67 = vmatpush1.bf16.msra.mxu0 0
    %68 = vmatprep.subr.bf16.mxu0 0
    %69 = vmatpush1.bf16.msra.mxu0 0
    %70 = vmatprep.subr.bf16.mxu0 0
    %71 = vmatpush1.bf16.msra.mxu0 0
    %72 = vmatprep.subr.bf16.mxu0 0
    %73 = vmatpush1.bf16.msra.mxu0 0
    %74 = vmatprep.subr.bf16.mxu0 0
    %75 = vmatpush1.bf16.msra.mxu0 0
    %76 = vmatprep.subr.bf16.mxu0 0
    %77 = vmatpush1.bf16.msra.mxu0 0
    %78 = vmatprep.subr.bf16.mxu0 0
    %79 = vmatpush1.bf16.msra.mxu0 0
    %80 = vmatprep.subr.bf16.mxu0 0
    %81 = vmatpush1.bf16.msra.mxu0 0
    %82 = vmatprep.subr.bf16.mxu0 0
    %83 = vmatpush1.bf16.msra.mxu0 0
    %84 = vmatprep.mubr.bf16.mxu0 0
    %85 = vmatmul.mubr.bf16.gmra.mrb[0].mxu0 %v50
    %v86 = vpop.f32.mrb[0].mxu0
    %v87 = vadd.f32 0.0, %v86
    %v88 = vpop.f32.mrb[0].mxu0
    %v89 = vpop.f32.mrb[0].mxu0
    %v90 = vadd.f32 0.0, %v89
    %v91 = vpop.f32.mrb[0].mxu0
    %92 = vdwg.mxu0
    %v93 = vadd.f32 %v23, %v87
    %v94 = vadd.f32 %v24, %v90
    %vm95 = vcmask 130048
    %96 = vst.msk [vmem:[#allocation2] sm:$0xff] %vm95, %v93
    %97 = vst.msk [vmem:[#allocation2 + $0x8] sm:$0xff] %vm95, %v94
    // Predicated region
    $region18: #{seq2seq_forward.57} parent=1 // pred_check
      %p98 = pneg %p16
    $region19: #{seq2seq_forward.57} parent=1 // pred_check_branch
      %100 = sbr.rel (%p98) target = $region21
    $region20: #{seq2seq_forward.57} parent=1 // pred_region
      %v101 = vld [vmem:[#allocation2] sm:$0xff]
      %v102 = vld [vmem:[#allocation2 + $0x8] sm:$0xff]
      %v103 = vld [vmem:[%s2] sm:$0x1]
      %v105 = vlaneseq
      %v106 = vshrl.u32 %v105, 7
      %v107 = vsub.s32 0, %v106
      %v108 = vrot.slane %v103, %v107
      %v110 = vadd.f32 %v101, %v108
      %v111 = vadd.f32 %v102, %v108
      %112 = vst.msk [vmem:[#allocation3] sm:$0xff] %vm95, %v110
      %113 = vst.msk [vmem:[#allocation3 + $0x8] sm:$0xff] %vm95, %v111
    $region21: #{seq2seq_forward.57} parent=1 // pred_fallthru
      _
    // Predicated region
    $region22: #{seq2seq_forward.57} parent=1 // pred_check
      _
    $region23: #{seq2seq_forward.57} parent=1 // pred_check_branch
      %115 = sbr.rel (0) target = $region25
    $region24: #{seq2seq_forward.57} parent=1 // pred_region
      %s117 = ssub.s32 256, 256
      %118 = vsyncadd [#allocation4], %s117
      %s119 = sshll.u32 [#allocation3], 4
      %s120 = int_to_ptr.vmem [resolvable:$true] %s119
      %125 = dma.vmem_to_hbm [thread:$0]  %s120, 256, %s3, [#allocation4], 128, 128, 8
    $region25: #{seq2seq_forward.57} parent=1 // pred_fallthru
      _
    // Predicated region
    $region26: #{seq2seq_forward.57} parent=1 // pred_check
      _
    $region27: #{seq2seq_forward.57} parent=1 // pred_check_branch
      %127 = sbr.rel (0) target = $region29
    $region28: #{seq2seq_forward.57} parent=1 // pred_region
      %128 = dma.done [#allocation4], 256
    $region29: #{seq2seq_forward.57} parent=1 // pred_fallthru
      _
    %129 = vsyncpa [#allocation4], 1

</llo_original>
